<compile_context>
chip_gen: v7x
topology: tpu7x:2x2x1
jax: 0.10.0
libtpu: 0.0.40
codegen_flags: <defaults>
</compile_context>

<pallas_src>
import functools

import jax
import jax.numpy as jnp
from jax.experimental import pallas as pl
from jax.experimental.pallas import tpu as pltpu

# -----------------------------------------------------------------------------
# Hyper-parameters (the `params` dict the PyTorch module is constructed with).
# -----------------------------------------------------------------------------
PARAMS = {
    "encoder": {"in_size": 16, "hidden_size": 32},
    "mixer_linear_stack": {"hidden_sizes": [32], "out_size": 4},
    "init_vel_linear_stack": {"hidden_sizes": [32], "out_size": 1, "max_vel": 60.0},
    "acc_decoder": {"in_size": 16, "hidden_size": 32, "num_acc_sections": 8,
                    "max_acc": 12.0},
    "use_cuda": False,
}

E_IN = PARAMS["encoder"]["in_size"]
H_ENC = PARAMS["encoder"]["hidden_size"]
MIX_H = PARAMS["mixer_linear_stack"]["hidden_sizes"][0]
MIX_OUT = PARAMS["mixer_linear_stack"]["out_size"]
VEL_H = PARAMS["init_vel_linear_stack"]["hidden_sizes"][0]
VEL_OUT = PARAMS["init_vel_linear_stack"]["out_size"]
MAX_VEL = PARAMS["init_vel_linear_stack"]["max_vel"]
ACC_IN = PARAMS["acc_decoder"]["in_size"]
ACC_H = PARAMS["acc_decoder"]["hidden_size"]
NUM_ACC = PARAMS["acc_decoder"]["num_acc_sections"]
MAX_ACC = PARAMS["acc_decoder"]["max_acc"]

# -----------------------------------------------------------------------------
# Packed-layout constants.
# -----------------------------------------------------------------------------
H3 = 3 * H_ENC                          # 96 : concatenated encoder state width
XCAT_W = 16                             # packed encoder input width (6 data + 3 indicator + pad)
N2 = MIX_OUT + VEL_OUT + NUM_ACC        # 13 : packed output width
K2 = MIX_H + VEL_H + NUM_ACC * ACC_H    # 320: fused second-stage contraction dim
HEAD_W = 128


def _ceil8(x):
    return (x + 7) // 8 * 8


# row offsets inside the packed encoder buffer (lane width 12H = 384)
R_XG = 0
R_BXG = R_XG + XCAT_W
R_WHH = _ceil8(R_BXG + 1)
ENC_ROWS = R_WHH + H3

# row offsets inside the packed head buffer (lane width 128)
R_W1 = 0
R_B1 = R_W1 + H3
R_AXW = _ceil8(R_B1 + 1)
R_AB = R_AXW + ACC_IN
R_AHH = _ceil8(R_AB + 1)
R_W2 = R_AHH + ACC_H
R_B2 = R_W2 + K2
HEAD_ROWS = _ceil8(R_B2 + 1)


# -----------------------------------------------------------------------------
# The fused kernel: 3-stream LSTM encoder + heads + acc-decoder LSTM + outputs.
# -----------------------------------------------------------------------------
def _mixnet_kernel(xcat_ref, wenc_ref, whead_ref, out_ref, *, T, B):
    f32 = jnp.float32

    # ------------- fused 3-stream LSTM encoder, state kept as (B, 3H) -------------
    w_xg = wenc_ref[R_XG:R_XG + XCAT_W, :]            # (16, 12H)
    b_xg = wenc_ref[R_BXG:R_BXG + 1, :]               # (1, 12H)
    w_hh = wenc_ref[R_WHH:R_WHH + H3, :]              # (3H, 12H) block-diagonal

    xcat = xcat_ref[...]                              # (T*B, 16)
    # every input-dependent gate pre-activation in ONE matmul, off the recurrence
    xg = jnp.dot(xcat, w_xg, preferred_element_type=f32) + b_xg       # (T*B, 12H)

    h = jnp.zeros((B, H3), f32)
    c = jnp.zeros((B, H3), f32)
    for t in range(T):                                # static unroll: 1 MXU + 3 EUP per step
        g = xg[t * B:(t + 1) * B, :] + jnp.dot(h, w_hh, preferred_element_type=f32)
        s = jax.nn.sigmoid(g[:, 0:3 * H3])            # i | f | o in one pass
        gc = jnp.tanh(g[:, 3 * H3:4 * H3])            # cell candidate
        c = s[:, H3:2 * H3] * c + s[:, 0:H3] * gc
        h = s[:, 2 * H3:3 * H3] * jnp.tanh(c)

    # relu(cat(leaky_relu(h_hist), leaky_relu(h_left), leaky_relu(h_right))) == relu(h)
    enc = jnp.maximum(h, 0.0)                         # (B, 3H), already in concat order

    # ------------- fused first head layer: [mix_w1 | vel_w1 | dyn_w] -------------
    w_h1 = whead_ref[R_W1:R_W1 + H3, :]               # (3H, 128), cols 80:128 are zero
    b_h1 = whead_ref[R_B1:R_B1 + 1, :]
    h1 = jnp.maximum(jnp.dot(enc, w_h1, preferred_element_type=f32) + b_h1, 0.0)   # (B, 128)

    # ------------- acceleration decoder LSTM (constant input every step) -------------
    acc_wx = whead_ref[R_AXW:R_AXW + ACC_IN, :]       # (16, 4Ha)
    acc_bg = whead_ref[R_AB:R_AB + 1, :]              # (1, 4Ha)
    acc_whh = whead_ref[R_AHH:R_AHH + ACC_H, :]       # (Ha, 4Ha)
    dec_in = h1[:, MIX_H + VEL_H:MIX_H + VEL_H + ACC_IN]              # (B, 16), already relu'd
    xg_acc = jnp.dot(dec_in, acc_wx, preferred_element_type=f32) + acc_bg          # (B, 4Ha)

    ha = jnp.zeros((B, ACC_H), f32)
    ca = jnp.zeros((B, ACC_H), f32)
    hs = []
    for _ in range(NUM_ACC):
        g = xg_acc + jnp.dot(ha, acc_whh, preferred_element_type=f32)
        s = jax.nn.sigmoid(g[:, 0:3 * ACC_H])
        gc = jnp.tanh(g[:, 3 * ACC_H:4 * ACC_H])
        ca = s[:, ACC_H:2 * ACC_H] * ca + s[:, 0:ACC_H] * gc
        ha = s[:, 2 * ACC_H:3 * ACC_H] * jnp.tanh(ca)
        hs.append(ha)

    # ------------- every second-stage projection in ONE block-diagonal matmul -------------
    lhs = jnp.concatenate(
        [h1[:, 0:MIX_H + VEL_H], jnp.maximum(jnp.concatenate(hs, axis=1), 0.0)],
        axis=1)                                       # (B, 64 + num_acc*Ha) = (B, 320)
    w2 = whead_ref[R_W2:R_W2 + K2, :]                 # (320, 128), cols 13:128 are zero
    b2 = whead_ref[R_B2:R_B2 + 1, :]
    z = jnp.dot(lhs, w2, preferred_element_type=f32) + b2             # (B, 128)

    # mix: softmax | vel: sigmoid * max_vel | acc: tanh * max_acc
    m = z[:, 0:MIX_OUT]
    m = m - jnp.max(m, axis=1, keepdims=True)
    em = jnp.exp(m)
    mix = em * pl.reciprocal(jnp.sum(em, axis=1, keepdims=True), approx=True)
    vel = jax.nn.sigmoid(z[:, MIX_OUT:MIX_OUT + VEL_OUT]) * MAX_VEL
    acc = jnp.tanh(z[:, MIX_OUT + VEL_OUT:N2]) * MAX_ACC
    out_ref[...] = jnp.concatenate([mix, vel, acc], axis=1)           # (B, 13)


# -----------------------------------------------------------------------------
# Wrapper: input packing (layout plumbing only) + one pallas_call.
# -----------------------------------------------------------------------------
def _build_xcat(hist, left_bound, right_bound):
    """Packs the three (B, T_s, 2) streams into one time-major (T*B, 16) slab.

    cols 0:6  = [hist_xy | left_xy | right_xy]  (shorter streams left-padded with 0)
    cols 6:9  = per-stream pad-step indicators (kernel weight maps them to -32768 on
                the i / o gates so the padded stream's state stays exactly zero)
    cols 9:16 = zero padding
    """
    B = hist.shape[0]
    streams = (hist, left_bound, right_bound)
    T = max(s.shape[1] for s in streams)
    cols, inds = [], []
    for s in streams:
        pad = T - s.shape[1]
        cols.append(jnp.pad(s, ((0, 0), (pad, 0), (0, 0))))
        ind = (jnp.arange(T) < pad).astype(jnp.float32)
        inds.append(jnp.broadcast_to(ind[None, :, None], (B, T, 1)))
    xcat = jnp.concatenate(
        cols + inds + [jnp.zeros((B, T, XCAT_W - 9), jnp.float32)], axis=2)
    xcat = jnp.transpose(xcat, (1, 0, 2)).reshape(T * B, XCAT_W)      # row index = t*B + b
    return xcat, T


@jax.jit
def new_mixnet_forward(hist, left_bound, right_bound, packed):
    xcat, T = _build_xcat(hist, left_bound, right_bound)
    B = hist.shape[0]
    vmem = pl.BlockSpec(memory_space=pltpu.MemorySpace.VMEM)
    out = pl.pallas_call(
        functools.partial(_mixnet_kernel, T=T, B=B),
        out_shape=jax.ShapeDtypeStruct((B, N2), jnp.float32),
        in_specs=[vmem, vmem, vmem],
        out_specs=vmem,
    )(xcat, packed["w_enc"], packed["w_head"])
    return (out[:, 0:MIX_OUT],
            out[:, MIX_OUT:MIX_OUT + VEL_OUT],
            out[:, MIX_OUT + VEL_OUT:N2])


# -----------------------------------------------------------------------------
# Weight folding / packing (weight-only: done once per checkpoint).
# -----------------------------------------------------------------------------
def _reorder_gates(a, hg):
    """[i|f|g|o] (PyTorch LSTM order) -> [i|f|o|g] along the last axis."""
    return jnp.concatenate(
        [a[:, 0:hg], a[:, hg:2 * hg], a[:, 3 * hg:4 * hg], a[:, 2 * hg:3 * hg]], axis=1)


def _interleave3(parts, hg):
    """3 per-stream (rows, 4Hg) mats (already [i|f|o|g]) -> (rows, 12Hg) laid out
    [i_h i_l i_r | f_h f_l f_r | o_h o_l o_r | g_h g_l g_r]."""
    cols = []
    for gate in range(4):
        for p in parts:
            cols.append(p[:, gate * hg:(gate + 1) * hg])
    return jnp.concatenate(cols, axis=1)


def pack_weights(w):
    f32 = jnp.float32
    H = H_ENC

    # ---- encoder buffer: (ENC_ROWS, 12H) ----
    wx, bx, whh = [], [], []
    for s in ("hist", "left", "right"):
        wx.append(_reorder_gates(w["emb_w"] @ w[f"{s}_wih"], H))                  # (2, 4H)
        bx.append(_reorder_gates(w["emb_b"] @ w[f"{s}_wih"] + w[f"{s}_b"], H))    # (1, 4H)
        whh.append(_reorder_gates(w[f"{s}_whh"], H))                              # (H, 4H)

    z2 = jnp.zeros((2, 4 * H), f32)
    z1 = jnp.zeros((1, 4 * H), f32)
    zh = jnp.zeros((H, 4 * H), f32)
    neg = jnp.full((1, H), -32768.0, f32)
    zr = jnp.zeros((1, H), f32)
    kill_io = jnp.concatenate([neg, zr, neg, zr], axis=1)             # kills i & o gates

    w_xg = jnp.concatenate([
        _interleave3([wx[0], z2, z2], H),
        _interleave3([z2, wx[1], z2], H),
        _interleave3([z2, z2, wx[2]], H),
        _interleave3([kill_io, z1, z1], H),
        _interleave3([z1, kill_io, z1], H),
        _interleave3([z1, z1, kill_io], H),
        jnp.zeros((XCAT_W - 9, 4 * H3), f32),
    ], axis=0)                                                        # (16, 12H)
    b_xg = _interleave3(bx, H)                                        # (1, 12H)
    w_hh = jnp.concatenate([
        _interleave3([whh[0], zh, zh], H),
        _interleave3([zh, whh[1], zh], H),
        _interleave3([zh, zh, whh[2]], H),
    ], axis=0)                                                        # (3H, 12H) block-diag
    w_enc = jnp.concatenate(
        [w_xg, b_xg, jnp.zeros((R_WHH - R_BXG - 1, 4 * H3), f32), w_hh], axis=0)

    # ---- head buffer: (HEAD_ROWS, 128) ----
    def padw(a):
        return jnp.pad(a, ((0, 0), (0, HEAD_W - a.shape[1])))

    w_h1 = padw(jnp.concatenate([w["mix_w1"], w["vel_w1"], w["dyn_w"]], axis=1))   # (3H, 128)
    b_h1 = padw(jnp.concatenate([w["mix_b1"], w["vel_b1"], w["dyn_b"]], axis=1))
    acc_wx = _reorder_gates(w["acc_wih"], ACC_H)                                   # (16, 128)
    acc_bg = _reorder_gates(w["acc_b"], ACC_H)                                     # (1, 128)
    acc_whh = _reorder_gates(w["acc_whh"], ACC_H)                                  # (32, 128)

    w2_mix = jnp.concatenate([w["mix_w2"], jnp.zeros((MIX_H, VEL_OUT + NUM_ACC), f32)], axis=1)
    w2_vel = jnp.concatenate([jnp.zeros((VEL_H, MIX_OUT), f32), w["vel_w2"],
                              jnp.zeros((VEL_H, NUM_ACC), f32)], axis=1)
    w2_acc = [jnp.zeros((ACC_H, N2), f32)
              .at[:, MIX_OUT + VEL_OUT + t:MIX_OUT + VEL_OUT + t + 1].set(w["accout_w"])
              for t in range(NUM_ACC)]
    w2 = padw(jnp.concatenate([w2_mix, w2_vel] + w2_acc, axis=0))                  # (320, 128)
    b2 = padw(jnp.concatenate([w["mix_b2"], w["vel_b2"],
                               jnp.tile(w["accout_b"], (1, NUM_ACC))], axis=1))    # (1, 128)

    w_head = jnp.concatenate([
        w_h1, b_h1, jnp.zeros((R_AXW - R_B1 - 1, HEAD_W), f32),
        acc_wx, acc_bg, jnp.zeros((R_AHH - R_AB - 1, HEAD_W), f32),
        acc_whh, w2, b2, jnp.zeros((HEAD_ROWS - R_B2 - 1, HEAD_W), f32),
    ], axis=0)
    return {"w_enc": w_enc, "w_head": w_head}


# -----------------------------------------------------------------------------
# Deterministic parameter init (synthetic weights; no checkpoint loading).
# -----------------------------------------------------------------------------
def init_weights(key):
    keys = iter(jax.random.split(key, 64))
    f32 = jnp.float32
    n = lambda shape, s=0.1: (s * jax.random.normal(next(keys), shape)).astype(f32)

    w = {}
    # shared input embedding Linear(2, E)  -> stored transposed (2, E)
    w["emb_w"] = n((2, E_IN))
    w["emb_b"] = n((1, E_IN))
    # three encoder LSTMs: W_ih^T (E, 4H), W_hh^T (H, 4H), combined bias (1, 4H), order [i,f,g,o]
    for name in ("hist", "left", "right"):
        w[f"{name}_wih"] = n((E_IN, 4 * H_ENC))
        w[f"{name}_whh"] = n((H_ENC, 4 * H_ENC))
        w[f"{name}_b"] = n((1, 4 * H_ENC))
    # mix linear stack: 3H -> MIX_H -> MIX_OUT
    w["mix_w1"] = n((3 * H_ENC, MIX_H)); w["mix_b1"] = n((1, MIX_H))
    w["mix_w2"] = n((MIX_H, MIX_OUT));   w["mix_b2"] = n((1, MIX_OUT))
    # vel linear stack: 3H -> VEL_H -> 1
    w["vel_w1"] = n((3 * H_ENC, VEL_H)); w["vel_b1"] = n((1, VEL_H))
    w["vel_w2"] = n((VEL_H, VEL_OUT));   w["vel_b2"] = n((1, VEL_OUT))
    # dyn embedder: 3H -> ACC_IN
    w["dyn_w"] = n((3 * H_ENC, ACC_IN)); w["dyn_b"] = n((1, ACC_IN))
    # acc decoder LSTM
    w["acc_wih"] = n((ACC_IN, 4 * ACC_H))
    w["acc_whh"] = n((ACC_H, 4 * ACC_H))
    w["acc_b"] = n((1, 4 * ACC_H))
    # acc out layer: ACC_H -> 1
    w["accout_w"] = n((ACC_H, 1)); w["accout_b"] = n((1, 1))
    return w


# -----------------------------------------------------------------------------
# Pure-JAX reference (mirrors the PyTorch forward) for a sanity check.
# -----------------------------------------------------------------------------
def _lstm_ref(x, wemb, bemb, wih, whh, b):
    B, T, _ = x.shape
    H = whh.shape[0]
    h = jnp.zeros((B, H), jnp.float32)
    c = jnp.zeros((B, H), jnp.float32)
    for t in range(T):
        e = x[:, t, :] @ wemb + bemb
        g = e @ wih + h @ whh + b
        i_g = jax.nn.sigmoid(g[:, :H]); f_g = jax.nn.sigmoid(g[:, H:2 * H])
        c_g = jnp.tanh(g[:, 2 * H:3 * H]); o_g = jax.nn.sigmoid(g[:, 3 * H:])
        c = f_g * c + i_g * c_g
        h = o_g * jnp.tanh(c)
    return h


def forward_ref(hist, lb, rb, w):
    leaky = lambda v: jnp.where(v >= 0.0, v, 0.01 * v)
    hh = leaky(_lstm_ref(hist, w["emb_w"], w["emb_b"], w["hist_wih"], w["hist_whh"], w["hist_b"]))
    lh = leaky(_lstm_ref(lb, w["emb_w"], w["emb_b"], w["left_wih"], w["left_whh"], w["left_b"]))
    rh = leaky(_lstm_ref(rb, w["emb_w"], w["emb_b"], w["right_wih"], w["right_whh"], w["right_b"]))
    enc = jnp.maximum(jnp.concatenate([hh, lh, rh], axis=1), 0.0)
    mix = jax.nn.softmax(jnp.maximum(enc @ w["mix_w1"] + w["mix_b1"], 0.0)
                         @ w["mix_w2"] + w["mix_b2"], axis=1)
    vel = jax.nn.sigmoid(jnp.maximum(enc @ w["vel_w1"] + w["vel_b1"], 0.0)
                         @ w["vel_w2"] + w["vel_b2"]) * MAX_VEL
    dec_in = jnp.maximum(enc @ w["dyn_w"] + w["dyn_b"], 0.0)
    B = enc.shape[0]
    Ha = ACC_H
    h = jnp.zeros((B, Ha)); c = jnp.zeros((B, Ha))
    cols = []
    xg = dec_in @ w["acc_wih"] + w["acc_b"]
    for _ in range(NUM_ACC):
        g = xg + h @ w["acc_whh"]
        i_g = jax.nn.sigmoid(g[:, :Ha]); f_g = jax.nn.sigmoid(g[:, Ha:2 * Ha])
        c_g = jnp.tanh(g[:, 2 * Ha:3 * Ha]); o_g = jax.nn.sigmoid(g[:, 3 * Ha:])
        c = f_g * c + i_g * c_g
        h = o_g * jnp.tanh(c)
        cols.append(jnp.maximum(h, 0.0) @ w["accout_w"] + w["accout_b"])
    acc = jnp.tanh(jnp.concatenate(cols, axis=1)) * MAX_ACC
    return mix, vel, acc


# -----------------------------------------------------------------------------
if __name__ == "__main__":
    key = jax.random.PRNGKey(0)
    k_w, k_h, k_l, k_r = jax.random.split(key, 4)

    batch = 2
    hist_len = 8
    boundary_len = 12

    weights = init_weights(k_w)
    packed = pack_weights(weights)      # weight-only folding: done once per checkpoint

    hist = jax.random.normal(k_h, (batch, hist_len, 2), jnp.float32)
    left_bound = jax.random.normal(k_l, (batch, boundary_len, 2), jnp.float32)
    right_bound = jax.random.normal(k_r, (batch, boundary_len, 2), jnp.float32)

    mix_out, vel_out, acc_out = jax.block_until_ready(
        new_mixnet_forward(hist, left_bound, right_bound, packed))

    # sanity check against the pure-JAX reference of the PyTorch forward
    # (loose tolerance: MXU bf16-decomposed f32 matmuls + approx softmax reciprocal)
    mix_r, vel_r, acc_r = forward_ref(hist, left_bound, right_bound, weights)
    assert mix_out.shape == (batch, MIX_OUT)
    assert vel_out.shape == (batch, VEL_OUT)
    assert acc_out.shape == (batch, NUM_ACC)
    for got, ref in ((mix_out, mix_r), (vel_out, vel_r), (acc_out, acc_r)):
        assert jnp.allclose(got, ref, rtol=2e-2, atol=2e-2), (got, ref)

    print("KERNEL_OK")
</pallas_src>

<mosaic_0001>
module attributes {stable_mosaic.version = 11 : i64} {
  func.func @_mixnet_kernel(%arg0: memref<24x16xf32, #tpu.memory_space<vmem>>, %arg1: memref<120x384xf32, #tpu.memory_space<vmem>>, %arg2: memref<488x128xf32, #tpu.memory_space<vmem>>, %arg3: memref<2x13xf32, #tpu.memory_space<vmem>>) attributes {dimension_semantics = [], scalar_prefetch = 0 : i64, scratch_operands = 0 : i64, tpu.core_type = #tpu.core_type<tc>} {
    %c0 = arith.constant 0 : index
    %c0_0 = arith.constant 0 : index
    %0 = vector.load %arg1[%c0, %c0_0] : memref<120x384xf32, #tpu.memory_space<vmem>>, vector<16x384xf32>
    %c16 = arith.constant 16 : index
    %c0_1 = arith.constant 0 : index
    %1 = vector.load %arg1[%c16, %c0_1] : memref<120x384xf32, #tpu.memory_space<vmem>>, vector<1x384xf32>
    %c24 = arith.constant 24 : index
    %c0_2 = arith.constant 0 : index
    %2 = vector.load %arg1[%c24, %c0_2] : memref<120x384xf32, #tpu.memory_space<vmem>>, vector<96x384xf32>
    %c0_3 = arith.constant 0 : index
    %c0_4 = arith.constant 0 : index
    %3 = vector.load %arg0[%c0_3, %c0_4] : memref<24x16xf32, #tpu.memory_space<vmem>>, vector<24x16xf32>
    %cst = arith.constant dense<0.000000e+00> : vector<24x384xf32>
    %4 = tpu.matmul %3, %0, %cst {dimension_numbers = #tpu.dot_dimension_numbers<[1], [0], [0], [1], [0, 0, 1, 1], [], []>} : vector<24x16xf32>, vector<16x384xf32>, vector<24x384xf32> -> vector<24x384xf32>
    %5 = vector.broadcast %1 : vector<1x384xf32> to vector<24x384xf32>
    %6 = arith.addf %4, %5 : vector<24x384xf32>
    %cst_5 = arith.constant 0.000000e+00 : f32
    %7 = vector.broadcast %cst_5 : f32 to vector<2x96xf32>
    %cst_6 = arith.constant 0.000000e+00 : f32
    %8 = vector.broadcast %cst_6 : f32 to vector<2x96xf32>
    %9 = vector.extract_strided_slice %6 {offsets = [0, 0], sizes = [2, 384], strides = [1, 1]} : vector<24x384xf32> to vector<2x384xf32>
    %cst_7 = arith.constant dense<0.000000e+00> : vector<2x384xf32>
    %10 = tpu.matmul %7, %2, %cst_7 {dimension_numbers = #tpu.dot_dimension_numbers<[1], [0], [0], [1], [0, 0, 1, 1], [], []>} : vector<2x96xf32>, vector<96x384xf32>, vector<2x384xf32> -> vector<2x384xf32>
    %11 = arith.addf %9, %10 : vector<2x384xf32>
    %12 = vector.extract_strided_slice %11 {offsets = [0, 0], sizes = [2, 288], strides = [1, 1]} : vector<2x384xf32> to vector<2x288xf32>
    %13 = arith.negf %12 : vector<2x288xf32>
    %14 = math.exp %13 : vector<2x288xf32>
    %cst_8 = arith.constant 1.000000e+00 : f32
    %15 = vector.broadcast %cst_8 : f32 to vector<2x288xf32>
    %16 = arith.addf %15, %14 : vector<2x288xf32>
    %17 = arith.divf %15, %16 : vector<2x288xf32>
    %18 = vector.extract_strided_slice %11 {offsets = [0, 288], sizes = [2, 96], strides = [1, 1]} : vector<2x384xf32> to vector<2x96xf32>
    %19 = math.tanh %18 : vector<2x96xf32>
    %20 = vector.extract_strided_slice %17 {offsets = [0, 96], sizes = [2, 96], strides = [1, 1]} : vector<2x288xf32> to vector<2x96xf32>
    %21 = arith.mulf %20, %8 : vector<2x96xf32>
    %22 = vector.extract_strided_slice %17 {offsets = [0, 0], sizes = [2, 96], strides = [1, 1]} : vector<2x288xf32> to vector<2x96xf32>
    %23 = arith.mulf %22, %19 : vector<2x96xf32>
    %24 = arith.addf %21, %23 : vector<2x96xf32>
    %25 = vector.extract_strided_slice %17 {offsets = [0, 192], sizes = [2, 96], strides = [1, 1]} : vector<2x288xf32> to vector<2x96xf32>
    %26 = math.tanh %24 : vector<2x96xf32>
    %27 = arith.mulf %25, %26 : vector<2x96xf32>
    %28 = vector.extract_strided_slice %6 {offsets = [2, 0], sizes = [2, 384], strides = [1, 1]} : vector<24x384xf32> to vector<2x384xf32>
    %cst_9 = arith.constant dense<0.000000e+00> : vector<2x384xf32>
    %29 = tpu.matmul %27, %2, %cst_9 {dimension_numbers = #tpu.dot_dimension_numbers<[1], [0], [0], [1], [0, 0, 1, 1], [], []>} : vector<2x96xf32>, vector<96x384xf32>, vector<2x384xf32> -> vector<2x384xf32>
    %30 = arith.addf %28, %29 : vector<2x384xf32>
    %31 = vector.extract_strided_slice %30 {offsets = [0, 0], sizes = [2, 288], strides = [1, 1]} : vector<2x384xf32> to vector<2x288xf32>
    %32 = arith.negf %31 : vector<2x288xf32>
    %33 = math.exp %32 : vector<2x288xf32>
    %cst_10 = arith.constant 1.000000e+00 : f32
    %34 = vector.broadcast %cst_10 : f32 to vector<2x288xf32>
    %35 = arith.addf %34, %33 : vector<2x288xf32>
    %36 = arith.divf %34, %35 : vector<2x288xf32>
    %37 = vector.extract_strided_slice %30 {offsets = [0, 288], sizes = [2, 96], strides = [1, 1]} : vector<2x384xf32> to vector<2x96xf32>
    %38 = math.tanh %37 : vector<2x96xf32>
    %39 = vector.extract_strided_slice %36 {offsets = [0, 96], sizes = [2, 96], strides = [1, 1]} : vector<2x288xf32> to vector<2x96xf32>
    %40 = arith.mulf %39, %24 : vector<2x96xf32>
    %41 = vector.extract_strided_slice %36 {offsets = [0, 0], sizes = [2, 96], strides = [1, 1]} : vector<2x288xf32> to vector<2x96xf32>
    %42 = arith.mulf %41, %38 : vector<2x96xf32>
    %43 = arith.addf %40, %42 : vector<2x96xf32>
    %44 = vector.extract_strided_slice %36 {offsets = [0, 192], sizes = [2, 96], strides = [1, 1]} : vector<2x288xf32> to vector<2x96xf32>
    %45 = math.tanh %43 : vector<2x96xf32>
    %46 = arith.mulf %44, %45 : vector<2x96xf32>
    %47 = vector.extract_strided_slice %6 {offsets = [4, 0], sizes = [2, 384], strides = [1, 1]} : vector<24x384xf32> to vector<2x384xf32>
    %cst_11 = arith.constant dense<0.000000e+00> : vector<2x384xf32>
    %48 = tpu.matmul %46, %2, %cst_11 {dimension_numbers = #tpu.dot_dimension_numbers<[1], [0], [0], [1], [0, 0, 1, 1], [], []>} : vector<2x96xf32>, vector<96x384xf32>, vector<2x384xf32> -> vector<2x384xf32>
    %49 = arith.addf %47, %48 : vector<2x384xf32>
    %50 = vector.extract_strided_slice %49 {offsets = [0, 0], sizes = [2, 288], strides = [1, 1]} : vector<2x384xf32> to vector<2x288xf32>
    %51 = arith.negf %50 : vector<2x288xf32>
    %52 = math.exp %51 : vector<2x288xf32>
    %cst_12 = arith.constant 1.000000e+00 : f32
    %53 = vector.broadcast %cst_12 : f32 to vector<2x288xf32>
    %54 = arith.addf %53, %52 : vector<2x288xf32>
    %55 = arith.divf %53, %54 : vector<2x288xf32>
    %56 = vector.extract_strided_slice %49 {offsets = [0, 288], sizes = [2, 96], strides = [1, 1]} : vector<2x384xf32> to vector<2x96xf32>
    %57 = math.tanh %56 : vector<2x96xf32>
    %58 = vector.extract_strided_slice %55 {offsets = [0, 96], sizes = [2, 96], strides = [1, 1]} : vector<2x288xf32> to vector<2x96xf32>
    %59 = arith.mulf %58, %43 : vector<2x96xf32>
    %60 = vector.extract_strided_slice %55 {offsets = [0, 0], sizes = [2, 96], strides = [1, 1]} : vector<2x288xf32> to vector<2x96xf32>
    %61 = arith.mulf %60, %57 : vector<2x96xf32>
    %62 = arith.addf %59, %61 : vector<2x96xf32>
    %63 = vector.extract_strided_slice %55 {offsets = [0, 192], sizes = [2, 96], strides = [1, 1]} : vector<2x288xf32> to vector<2x96xf32>
    %64 = math.tanh %62 : vector<2x96xf32>
    %65 = arith.mulf %63, %64 : vector<2x96xf32>
    %66 = vector.extract_strided_slice %6 {offsets = [6, 0], sizes = [2, 384], strides = [1, 1]} : vector<24x384xf32> to vector<2x384xf32>
    %cst_13 = arith.constant dense<0.000000e+00> : vector<2x384xf32>
    %67 = tpu.matmul %65, %2, %cst_13 {dimension_numbers = #tpu.dot_dimension_numbers<[1], [0], [0], [1], [0, 0, 1, 1], [], []>} : vector<2x96xf32>, vector<96x384xf32>, vector<2x384xf32> -> vector<2x384xf32>
    %68 = arith.addf %66, %67 : vector<2x384xf32>
    %69 = vector.extract_strided_slice %68 {offsets = [0, 0], sizes = [2, 288], strides = [1, 1]} : vector<2x384xf32> to vector<2x288xf32>
    %70 = arith.negf %69 : vector<2x288xf32>
    %71 = math.exp %70 : vector<2x288xf32>
    %cst_14 = arith.constant 1.000000e+00 : f32
    %72 = vector.broadcast %cst_14 : f32 to vector<2x288xf32>
    %73 = arith.addf %72, %71 : vector<2x288xf32>
    %74 = arith.divf %72, %73 : vector<2x288xf32>
    %75 = vector.extract_strided_slice %68 {offsets = [0, 288], sizes = [2, 96], strides = [1, 1]} : vector<2x384xf32> to vector<2x96xf32>
    %76 = math.tanh %75 : vector<2x96xf32>
    %77 = vector.extract_strided_slice %74 {offsets = [0, 96], sizes = [2, 96], strides = [1, 1]} : vector<2x288xf32> to vector<2x96xf32>
    %78 = arith.mulf %77, %62 : vector<2x96xf32>
    %79 = vector.extract_strided_slice %74 {offsets = [0, 0], sizes = [2, 96], strides = [1, 1]} : vector<2x288xf32> to vector<2x96xf32>
    %80 = arith.mulf %79, %76 : vector<2x96xf32>
    %81 = arith.addf %78, %80 : vector<2x96xf32>
    %82 = vector.extract_strided_slice %74 {offsets = [0, 192], sizes = [2, 96], strides = [1, 1]} : vector<2x288xf32> to vector<2x96xf32>
    %83 = math.tanh %81 : vector<2x96xf32>
    %84 = arith.mulf %82, %83 : vector<2x96xf32>
    %85 = vector.extract_strided_slice %6 {offsets = [8, 0], sizes = [2, 384], strides = [1, 1]} : vector<24x384xf32> to vector<2x384xf32>
    %cst_15 = arith.constant dense<0.000000e+00> : vector<2x384xf32>
    %86 = tpu.matmul %84, %2, %cst_15 {dimension_numbers = #tpu.dot_dimension_numbers<[1], [0], [0], [1], [0, 0, 1, 1], [], []>} : vector<2x96xf32>, vector<96x384xf32>, vector<2x384xf32> -> vector<2x384xf32>
    %87 = arith.addf %85, %86 : vector<2x384xf32>
    %88 = vector.extract_strided_slice %87 {offsets = [0, 0], sizes = [2, 288], strides = [1, 1]} : vector<2x384xf32> to vector<2x288xf32>
    %89 = arith.negf %88 : vector<2x288xf32>
    %90 = math.exp %89 : vector<2x288xf32>
    %cst_16 = arith.constant 1.000000e+00 : f32
    %91 = vector.broadcast %cst_16 : f32 to vector<2x288xf32>
    %92 = arith.addf %91, %90 : vector<2x288xf32>
    %93 = arith.divf %91, %92 : vector<2x288xf32>
    %94 = vector.extract_strided_slice %87 {offsets = [0, 288], sizes = [2, 96], strides = [1, 1]} : vector<2x384xf32> to vector<2x96xf32>
    %95 = math.tanh %94 : vector<2x96xf32>
    %96 = vector.extract_strided_slice %93 {offsets = [0, 96], sizes = [2, 96], strides = [1, 1]} : vector<2x288xf32> to vector<2x96xf32>
    %97 = arith.mulf %96, %81 : vector<2x96xf32>
    %98 = vector.extract_strided_slice %93 {offsets = [0, 0], sizes = [2, 96], strides = [1, 1]} : vector<2x288xf32> to vector<2x96xf32>
    %99 = arith.mulf %98, %95 : vector<2x96xf32>
    %100 = arith.addf %97, %99 : vector<2x96xf32>
    %101 = vector.extract_strided_slice %93 {offsets = [0, 192], sizes = [2, 96], strides = [1, 1]} : vector<2x288xf32> to vector<2x96xf32>
    %102 = math.tanh %100 : vector<2x96xf32>
    %103 = arith.mulf %101, %102 : vector<2x96xf32>
    %104 = vector.extract_strided_slice %6 {offsets = [10, 0], sizes = [2, 384], strides = [1, 1]} : vector<24x384xf32> to vector<2x384xf32>
    %cst_17 = arith.constant dense<0.000000e+00> : vector<2x384xf32>
    %105 = tpu.matmul %103, %2, %cst_17 {dimension_numbers = #tpu.dot_dimension_numbers<[1], [0], [0], [1], [0, 0, 1, 1], [], []>} : vector<2x96xf32>, vector<96x384xf32>, vector<2x384xf32> -> vector<2x384xf32>
    %106 = arith.addf %104, %105 : vector<2x384xf32>
    %107 = vector.extract_strided_slice %106 {offsets = [0, 0], sizes = [2, 288], strides = [1, 1]} : vector<2x384xf32> to vector<2x288xf32>
    %108 = arith.negf %107 : vector<2x288xf32>
    %109 = math.exp %108 : vector<2x288xf32>
    %cst_18 = arith.constant 1.000000e+00 : f32
    %110 = vector.broadcast %cst_18 : f32 to vector<2x288xf32>
    %111 = arith.addf %110, %109 : vector<2x288xf32>
    %112 = arith.divf %110, %111 : vector<2x288xf32>
    %113 = vector.extract_strided_slice %106 {offsets = [0, 288], sizes = [2, 96], strides = [1, 1]} : vector<2x384xf32> to vector<2x96xf32>
    %114 = math.tanh %113 : vector<2x96xf32>
    %115 = vector.extract_strided_slice %112 {offsets = [0, 96], sizes = [2, 96], strides = [1, 1]} : vector<2x288xf32> to vector<2x96xf32>
    %116 = arith.mulf %115, %100 : vector<2x96xf32>
    %117 = vector.extract_strided_slice %112 {offsets = [0, 0], sizes = [2, 96], strides = [1, 1]} : vector<2x288xf32> to vector<2x96xf32>
    %118 = arith.mulf %117, %114 : vector<2x96xf32>
    %119 = arith.addf %116, %118 : vector<2x96xf32>
    %120 = vector.extract_strided_slice %112 {offsets = [0, 192], sizes = [2, 96], strides = [1, 1]} : vector<2x288xf32> to vector<2x96xf32>
    %121 = math.tanh %119 : vector<2x96xf32>
    %122 = arith.mulf %120, %121 : vector<2x96xf32>
    %123 = vector.extract_strided_slice %6 {offsets = [12, 0], sizes = [2, 384], strides = [1, 1]} : vector<24x384xf32> to vector<2x384xf32>
    %cst_19 = arith.constant dense<0.000000e+00> : vector<2x384xf32>
    %124 = tpu.matmul %122, %2, %cst_19 {dimension_numbers = #tpu.dot_dimension_numbers<[1], [0], [0], [1], [0, 0, 1, 1], [], []>} : vector<2x96xf32>, vector<96x384xf32>, vector<2x384xf32> -> vector<2x384xf32>
    %125 = arith.addf %123, %124 : vector<2x384xf32>
    %126 = vector.extract_strided_slice %125 {offsets = [0, 0], sizes = [2, 288], strides = [1, 1]} : vector<2x384xf32> to vector<2x288xf32>
    %127 = arith.negf %126 : vector<2x288xf32>
    %128 = math.exp %127 : vector<2x288xf32>
    %cst_20 = arith.constant 1.000000e+00 : f32
    %129 = vector.broadcast %cst_20 : f32 to vector<2x288xf32>
    %130 = arith.addf %129, %128 : vector<2x288xf32>
    %131 = arith.divf %129, %130 : vector<2x288xf32>
    %132 = vector.extract_strided_slice %125 {offsets = [0, 288], sizes = [2, 96], strides = [1, 1]} : vector<2x384xf32> to vector<2x96xf32>
    %133 = math.tanh %132 : vector<2x96xf32>
    %134 = vector.extract_strided_slice %131 {offsets = [0, 96], sizes = [2, 96], strides = [1, 1]} : vector<2x288xf32> to vector<2x96xf32>
    %135 = arith.mulf %134, %119 : vector<2x96xf32>
    %136 = vector.extract_strided_slice %131 {offsets = [0, 0], sizes = [2, 96], strides = [1, 1]} : vector<2x288xf32> to vector<2x96xf32>
    %137 = arith.mulf %136, %133 : vector<2x96xf32>
    %138 = arith.addf %135, %137 : vector<2x96xf32>
    %139 = vector.extract_strided_slice %131 {offsets = [0, 192], sizes = [2, 96], strides = [1, 1]} : vector<2x288xf32> to vector<2x96xf32>
    %140 = math.tanh %138 : vector<2x96xf32>
    %141 = arith.mulf %139, %140 : vector<2x96xf32>
    %142 = vector.extract_strided_slice %6 {offsets = [14, 0], sizes = [2, 384], strides = [1, 1]} : vector<24x384xf32> to vector<2x384xf32>
    %cst_21 = arith.constant dense<0.000000e+00> : vector<2x384xf32>
    %143 = tpu.matmul %141, %2, %cst_21 {dimension_numbers = #tpu.dot_dimension_numbers<[1], [0], [0], [1], [0, 0, 1, 1], [], []>} : vector<2x96xf32>, vector<96x384xf32>, vector<2x384xf32> -> vector<2x384xf32>
    %144 = arith.addf %142, %143 : vector<2x384xf32>
    %145 = vector.extract_strided_slice %144 {offsets = [0, 0], sizes = [2, 288], strides = [1, 1]} : vector<2x384xf32> to vector<2x288xf32>
    %146 = arith.negf %145 : vector<2x288xf32>
    %147 = math.exp %146 : vector<2x288xf32>
    %cst_22 = arith.constant 1.000000e+00 : f32
    %148 = vector.broadcast %cst_22 : f32 to vector<2x288xf32>
    %149 = arith.addf %148, %147 : vector<2x288xf32>
    %150 = arith.divf %148, %149 : vector<2x288xf32>
    %151 = vector.extract_strided_slice %144 {offsets = [0, 288], sizes = [2, 96], strides = [1, 1]} : vector<2x384xf32> to vector<2x96xf32>
    %152 = math.tanh %151 : vector<2x96xf32>
    %153 = vector.extract_strided_slice %150 {offsets = [0, 96], sizes = [2, 96], strides = [1, 1]} : vector<2x288xf32> to vector<2x96xf32>
    %154 = arith.mulf %153, %138 : vector<2x96xf32>
    %155 = vector.extract_strided_slice %150 {offsets = [0, 0], sizes = [2, 96], strides = [1, 1]} : vector<2x288xf32> to vector<2x96xf32>
    %156 = arith.mulf %155, %152 : vector<2x96xf32>
    %157 = arith.addf %154, %156 : vector<2x96xf32>
    %158 = vector.extract_strided_slice %150 {offsets = [0, 192], sizes = [2, 96], strides = [1, 1]} : vector<2x288xf32> to vector<2x96xf32>
    %159 = math.tanh %157 : vector<2x96xf32>
    %160 = arith.mulf %158, %159 : vector<2x96xf32>
    %161 = vector.extract_strided_slice %6 {offsets = [16, 0], sizes = [2, 384], strides = [1, 1]} : vector<24x384xf32> to vector<2x384xf32>
    %cst_23 = arith.constant dense<0.000000e+00> : vector<2x384xf32>
    %162 = tpu.matmul %160, %2, %cst_23 {dimension_numbers = #tpu.dot_dimension_numbers<[1], [0], [0], [1], [0, 0, 1, 1], [], []>} : vector<2x96xf32>, vector<96x384xf32>, vector<2x384xf32> -> vector<2x384xf32>
    %163 = arith.addf %161, %162 : vector<2x384xf32>
    %164 = vector.extract_strided_slice %163 {offsets = [0, 0], sizes = [2, 288], strides = [1, 1]} : vector<2x384xf32> to vector<2x288xf32>
    %165 = arith.negf %164 : vector<2x288xf32>
    %166 = math.exp %165 : vector<2x288xf32>
    %cst_24 = arith.constant 1.000000e+00 : f32
    %167 = vector.broadcast %cst_24 : f32 to vector<2x288xf32>
    %168 = arith.addf %167, %166 : vector<2x288xf32>
    %169 = arith.divf %167, %168 : vector<2x288xf32>
    %170 = vector.extract_strided_slice %163 {offsets = [0, 288], sizes = [2, 96], strides = [1, 1]} : vector<2x384xf32> to vector<2x96xf32>
    %171 = math.tanh %170 : vector<2x96xf32>
    %172 = vector.extract_strided_slice %169 {offsets = [0, 96], sizes = [2, 96], strides = [1, 1]} : vector<2x288xf32> to vector<2x96xf32>
    %173 = arith.mulf %172, %157 : vector<2x96xf32>
    %174 = vector.extract_strided_slice %169 {offsets = [0, 0], sizes = [2, 96], strides = [1, 1]} : vector<2x288xf32> to vector<2x96xf32>
    %175 = arith.mulf %174, %171 : vector<2x96xf32>
    %176 = arith.addf %173, %175 : vector<2x96xf32>
    %177 = vector.extract_strided_slice %169 {offsets = [0, 192], sizes = [2, 96], strides = [1, 1]} : vector<2x288xf32> to vector<2x96xf32>
    %178 = math.tanh %176 : vector<2x96xf32>
    %179 = arith.mulf %177, %178 : vector<2x96xf32>
    %180 = vector.extract_strided_slice %6 {offsets = [18, 0], sizes = [2, 384], strides = [1, 1]} : vector<24x384xf32> to vector<2x384xf32>
    %cst_25 = arith.constant dense<0.000000e+00> : vector<2x384xf32>
    %181 = tpu.matmul %179, %2, %cst_25 {dimension_numbers = #tpu.dot_dimension_numbers<[1], [0], [0], [1], [0, 0, 1, 1], [], []>} : vector<2x96xf32>, vector<96x384xf32>, vector<2x384xf32> -> vector<2x384xf32>
    %182 = arith.addf %180, %181 : vector<2x384xf32>
    %183 = vector.extract_strided_slice %182 {offsets = [0, 0], sizes = [2, 288], strides = [1, 1]} : vector<2x384xf32> to vector<2x288xf32>
    %184 = arith.negf %183 : vector<2x288xf32>
    %185 = math.exp %184 : vector<2x288xf32>
    %cst_26 = arith.constant 1.000000e+00 : f32
    %186 = vector.broadcast %cst_26 : f32 to vector<2x288xf32>
    %187 = arith.addf %186, %185 : vector<2x288xf32>
    %188 = arith.divf %186, %187 : vector<2x288xf32>
    %189 = vector.extract_strided_slice %182 {offsets = [0, 288], sizes = [2, 96], strides = [1, 1]} : vector<2x384xf32> to vector<2x96xf32>
    %190 = math.tanh %189 : vector<2x96xf32>
    %191 = vector.extract_strided_slice %188 {offsets = [0, 96], sizes = [2, 96], strides = [1, 1]} : vector<2x288xf32> to vector<2x96xf32>
    %192 = arith.mulf %191, %176 : vector<2x96xf32>
    %193 = vector.extract_strided_slice %188 {offsets = [0, 0], sizes = [2, 96], strides = [1, 1]} : vector<2x288xf32> to vector<2x96xf32>
    %194 = arith.mulf %193, %190 : vector<2x96xf32>
    %195 = arith.addf %192, %194 : vector<2x96xf32>
    %196 = vector.extract_strided_slice %188 {offsets = [0, 192], sizes = [2, 96], strides = [1, 1]} : vector<2x288xf32> to vector<2x96xf32>
    %197 = math.tanh %195 : vector<2x96xf32>
    %198 = arith.mulf %196, %197 : vector<2x96xf32>
    %199 = vector.extract_strided_slice %6 {offsets = [20, 0], sizes = [2, 384], strides = [1, 1]} : vector<24x384xf32> to vector<2x384xf32>
    %cst_27 = arith.constant dense<0.000000e+00> : vector<2x384xf32>
    %200 = tpu.matmul %198, %2, %cst_27 {dimension_numbers = #tpu.dot_dimension_numbers<[1], [0], [0], [1], [0, 0, 1, 1], [], []>} : vector<2x96xf32>, vector<96x384xf32>, vector<2x384xf32> -> vector<2x384xf32>
    %201 = arith.addf %199, %200 : vector<2x384xf32>
    %202 = vector.extract_strided_slice %201 {offsets = [0, 0], sizes = [2, 288], strides = [1, 1]} : vector<2x384xf32> to vector<2x288xf32>
    %203 = arith.negf %202 : vector<2x288xf32>
    %204 = math.exp %203 : vector<2x288xf32>
    %cst_28 = arith.constant 1.000000e+00 : f32
    %205 = vector.broadcast %cst_28 : f32 to vector<2x288xf32>
    %206 = arith.addf %205, %204 : vector<2x288xf32>
    %207 = arith.divf %205, %206 : vector<2x288xf32>
    %208 = vector.extract_strided_slice %201 {offsets = [0, 288], sizes = [2, 96], strides = [1, 1]} : vector<2x384xf32> to vector<2x96xf32>
    %209 = math.tanh %208 : vector<2x96xf32>
    %210 = vector.extract_strided_slice %207 {offsets = [0, 96], sizes = [2, 96], strides = [1, 1]} : vector<2x288xf32> to vector<2x96xf32>
    %211 = arith.mulf %210, %195 : vector<2x96xf32>
    %212 = vector.extract_strided_slice %207 {offsets = [0, 0], sizes = [2, 96], strides = [1, 1]} : vector<2x288xf32> to vector<2x96xf32>
    %213 = arith.mulf %212, %209 : vector<2x96xf32>
    %214 = arith.addf %211, %213 : vector<2x96xf32>
    %215 = vector.extract_strided_slice %207 {offsets = [0, 192], sizes = [2, 96], strides = [1, 1]} : vector<2x288xf32> to vector<2x96xf32>
    %216 = math.tanh %214 : vector<2x96xf32>
    %217 = arith.mulf %215, %216 : vector<2x96xf32>
    %218 = vector.extract_strided_slice %6 {offsets = [22, 0], sizes = [2, 384], strides = [1, 1]} : vector<24x384xf32> to vector<2x384xf32>
    %cst_29 = arith.constant dense<0.000000e+00> : vector<2x384xf32>
    %219 = tpu.matmul %217, %2, %cst_29 {dimension_numbers = #tpu.dot_dimension_numbers<[1], [0], [0], [1], [0, 0, 1, 1], [], []>} : vector<2x96xf32>, vector<96x384xf32>, vector<2x384xf32> -> vector<2x384xf32>
    %220 = arith.addf %218, %219 : vector<2x384xf32>
    %221 = vector.extract_strided_slice %220 {offsets = [0, 0], sizes = [2, 288], strides = [1, 1]} : vector<2x384xf32> to vector<2x288xf32>
    %222 = arith.negf %221 : vector<2x288xf32>
    %223 = math.exp %222 : vector<2x288xf32>
    %cst_30 = arith.constant 1.000000e+00 : f32
    %224 = vector.broadcast %cst_30 : f32 to vector<2x288xf32>
    %225 = arith.addf %224, %223 : vector<2x288xf32>
    %226 = arith.divf %224, %225 : vector<2x288xf32>
    %227 = vector.extract_strided_slice %220 {offsets = [0, 288], sizes = [2, 96], strides = [1, 1]} : vector<2x384xf32> to vector<2x96xf32>
    %228 = math.tanh %227 : vector<2x96xf32>
    %229 = vector.extract_strided_slice %226 {offsets = [0, 96], sizes = [2, 96], strides = [1, 1]} : vector<2x288xf32> to vector<2x96xf32>
    %230 = arith.mulf %229, %214 : vector<2x96xf32>
    %231 = vector.extract_strided_slice %226 {offsets = [0, 0], sizes = [2, 96], strides = [1, 1]} : vector<2x288xf32> to vector<2x96xf32>
    %232 = arith.mulf %231, %228 : vector<2x96xf32>
    %233 = arith.addf %230, %232 : vector<2x96xf32>
    %234 = vector.extract_strided_slice %226 {offsets = [0, 192], sizes = [2, 96], strides = [1, 1]} : vector<2x288xf32> to vector<2x96xf32>
    %235 = math.tanh %233 : vector<2x96xf32>
    %236 = arith.mulf %234, %235 : vector<2x96xf32>
    %cst_31 = arith.constant 0.000000e+00 : f32
    %237 = vector.broadcast %cst_31 : f32 to vector<2x96xf32>
    %238 = arith.maximumf %236, %237 : vector<2x96xf32>
    %c0_32 = arith.constant 0 : index
    %c0_33 = arith.constant 0 : index
    %239 = vector.load %arg2[%c0_32, %c0_33] : memref<488x128xf32, #tpu.memory_space<vmem>>, vector<96x128xf32>
    %c96 = arith.constant 96 : index
    %c0_34 = arith.constant 0 : index
    %240 = vector.load %arg2[%c96, %c0_34] : memref<488x128xf32, #tpu.memory_space<vmem>>, vector<1x128xf32>
    %cst_35 = arith.constant dense<0.000000e+00> : vector<2x128xf32>
    %241 = tpu.matmul %238, %239, %cst_35 {dimension_numbers = #tpu.dot_dimension_numbers<[1], [0], [0], [1], [0, 0, 1, 1], [], []>} : vector<2x96xf32>, vector<96x128xf32>, vector<2x128xf32> -> vector<2x128xf32>
    %242 = vector.broadcast %240 : vector<1x128xf32> to vector<2x128xf32>
    %243 = arith.addf %241, %242 : vector<2x128xf32>
    %cst_36 = arith.constant 0.000000e+00 : f32
    %244 = vector.broadcast %cst_36 : f32 to vector<2x128xf32>
    %245 = arith.maximumf %243, %244 : vector<2x128xf32>
    %c104 = arith.constant 104 : index
    %c0_37 = arith.constant 0 : index
    %246 = vector.load %arg2[%c104, %c0_37] : memref<488x128xf32, #tpu.memory_space<vmem>>, vector<16x128xf32>
    %c120 = arith.constant 120 : index
    %c0_38 = arith.constant 0 : index
    %247 = vector.load %arg2[%c120, %c0_38] : memref<488x128xf32, #tpu.memory_space<vmem>>, vector<1x128xf32>
    %c128 = arith.constant 128 : index
    %c0_39 = arith.constant 0 : index
    %248 = vector.load %arg2[%c128, %c0_39] : memref<488x128xf32, #tpu.memory_space<vmem>>, vector<32x128xf32>
    %249 = vector.extract_strided_slice %245 {offsets = [0, 64], sizes = [2, 16], strides = [1, 1]} : vector<2x128xf32> to vector<2x16xf32>
    %cst_40 = arith.constant dense<0.000000e+00> : vector<2x128xf32>
    %250 = tpu.matmul %249, %246, %cst_40 {dimension_numbers = #tpu.dot_dimension_numbers<[1], [0], [0], [1], [0, 0, 1, 1], [], []>} : vector<2x16xf32>, vector<16x128xf32>, vector<2x128xf32> -> vector<2x128xf32>
    %251 = vector.broadcast %247 : vector<1x128xf32> to vector<2x128xf32>
    %252 = arith.addf %250, %251 : vector<2x128xf32>
    %cst_41 = arith.constant 0.000000e+00 : f32
    %253 = vector.broadcast %cst_41 : f32 to vector<2x32xf32>
    %cst_42 = arith.constant 0.000000e+00 : f32
    %254 = vector.broadcast %cst_42 : f32 to vector<2x32xf32>
    %cst_43 = arith.constant dense<0.000000e+00> : vector<2x128xf32>
    %255 = tpu.matmul %253, %248, %cst_43 {dimension_numbers = #tpu.dot_dimension_numbers<[1], [0], [0], [1], [0, 0, 1, 1], [], []>} : vector<2x32xf32>, vector<32x128xf32>, vector<2x128xf32> -> vector<2x128xf32>
    %256 = arith.addf %252, %255 : vector<2x128xf32>
    %257 = vector.extract_strided_slice %256 {offsets = [0, 0], sizes = [2, 96], strides = [1, 1]} : vector<2x128xf32> to vector<2x96xf32>
    %258 = arith.negf %257 : vector<2x96xf32>
    %259 = math.exp %258 : vector<2x96xf32>
    %cst_44 = arith.constant 1.000000e+00 : f32
    %260 = vector.broadcast %cst_44 : f32 to vector<2x96xf32>
    %261 = arith.addf %260, %259 : vector<2x96xf32>
    %262 = arith.divf %260, %261 : vector<2x96xf32>
    %263 = vector.extract_strided_slice %256 {offsets = [0, 96], sizes = [2, 32], strides = [1, 1]} : vector<2x128xf32> to vector<2x32xf32>
    %264 = math.tanh %263 : vector<2x32xf32>
    %265 = vector.extract_strided_slice %262 {offsets = [0, 32], sizes = [2, 32], strides = [1, 1]} : vector<2x96xf32> to vector<2x32xf32>
    %266 = arith.mulf %265, %254 : vector<2x32xf32>
    %267 = vector.extract_strided_slice %262 {offsets = [0, 0], sizes = [2, 32], strides = [1, 1]} : vector<2x96xf32> to vector<2x32xf32>
    %268 = arith.mulf %267, %264 : vector<2x32xf32>
    %269 = arith.addf %266, %268 : vector<2x32xf32>
    %270 = vector.extract_strided_slice %262 {offsets = [0, 64], sizes = [2, 32], strides = [1, 1]} : vector<2x96xf32> to vector<2x32xf32>
    %271 = math.tanh %269 : vector<2x32xf32>
    %272 = arith.mulf %270, %271 : vector<2x32xf32>
    %cst_45 = arith.constant dense<0.000000e+00> : vector<2x128xf32>
    %273 = tpu.matmul %272, %248, %cst_45 {dimension_numbers = #tpu.dot_dimension_numbers<[1], [0], [0], [1], [0, 0, 1, 1], [], []>} : vector<2x32xf32>, vector<32x128xf32>, vector<2x128xf32> -> vector<2x128xf32>
    %274 = arith.addf %252, %273 : vector<2x128xf32>
    %275 = vector.extract_strided_slice %274 {offsets = [0, 0], sizes = [2, 96], strides = [1, 1]} : vector<2x128xf32> to vector<2x96xf32>
    %276 = arith.negf %275 : vector<2x96xf32>
    %277 = math.exp %276 : vector<2x96xf32>
    %cst_46 = arith.constant 1.000000e+00 : f32
    %278 = vector.broadcast %cst_46 : f32 to vector<2x96xf32>
    %279 = arith.addf %278, %277 : vector<2x96xf32>
    %280 = arith.divf %278, %279 : vector<2x96xf32>
    %281 = vector.extract_strided_slice %274 {offsets = [0, 96], sizes = [2, 32], strides = [1, 1]} : vector<2x128xf32> to vector<2x32xf32>
    %282 = math.tanh %281 : vector<2x32xf32>
    %283 = vector.extract_strided_slice %280 {offsets = [0, 32], sizes = [2, 32], strides = [1, 1]} : vector<2x96xf32> to vector<2x32xf32>
    %284 = arith.mulf %283, %269 : vector<2x32xf32>
    %285 = vector.extract_strided_slice %280 {offsets = [0, 0], sizes = [2, 32], strides = [1, 1]} : vector<2x96xf32> to vector<2x32xf32>
    %286 = arith.mulf %285, %282 : vector<2x32xf32>
    %287 = arith.addf %284, %286 : vector<2x32xf32>
    %288 = vector.extract_strided_slice %280 {offsets = [0, 64], sizes = [2, 32], strides = [1, 1]} : vector<2x96xf32> to vector<2x32xf32>
    %289 = math.tanh %287 : vector<2x32xf32>
    %290 = arith.mulf %288, %289 : vector<2x32xf32>
    %cst_47 = arith.constant dense<0.000000e+00> : vector<2x128xf32>
    %291 = tpu.matmul %290, %248, %cst_47 {dimension_numbers = #tpu.dot_dimension_numbers<[1], [0], [0], [1], [0, 0, 1, 1], [], []>} : vector<2x32xf32>, vector<32x128xf32>, vector<2x128xf32> -> vector<2x128xf32>
    %292 = arith.addf %252, %291 : vector<2x128xf32>
    %293 = vector.extract_strided_slice %292 {offsets = [0, 0], sizes = [2, 96], strides = [1, 1]} : vector<2x128xf32> to vector<2x96xf32>
    %294 = arith.negf %293 : vector<2x96xf32>
    %295 = math.exp %294 : vector<2x96xf32>
    %cst_48 = arith.constant 1.000000e+00 : f32
    %296 = vector.broadcast %cst_48 : f32 to vector<2x96xf32>
    %297 = arith.addf %296, %295 : vector<2x96xf32>
    %298 = arith.divf %296, %297 : vector<2x96xf32>
    %299 = vector.extract_strided_slice %292 {offsets = [0, 96], sizes = [2, 32], strides = [1, 1]} : vector<2x128xf32> to vector<2x32xf32>
    %300 = math.tanh %299 : vector<2x32xf32>
    %301 = vector.extract_strided_slice %298 {offsets = [0, 32], sizes = [2, 32], strides = [1, 1]} : vector<2x96xf32> to vector<2x32xf32>
    %302 = arith.mulf %301, %287 : vector<2x32xf32>
    %303 = vector.extract_strided_slice %298 {offsets = [0, 0], sizes = [2, 32], strides = [1, 1]} : vector<2x96xf32> to vector<2x32xf32>
    %304 = arith.mulf %303, %300 : vector<2x32xf32>
    %305 = arith.addf %302, %304 : vector<2x32xf32>
    %306 = vector.extract_strided_slice %298 {offsets = [0, 64], sizes = [2, 32], strides = [1, 1]} : vector<2x96xf32> to vector<2x32xf32>
    %307 = math.tanh %305 : vector<2x32xf32>
    %308 = arith.mulf %306, %307 : vector<2x32xf32>
    %cst_49 = arith.constant dense<0.000000e+00> : vector<2x128xf32>
    %309 = tpu.matmul %308, %248, %cst_49 {dimension_numbers = #tpu.dot_dimension_numbers<[1], [0], [0], [1], [0, 0, 1, 1], [], []>} : vector<2x32xf32>, vector<32x128xf32>, vector<2x128xf32> -> vector<2x128xf32>
    %310 = arith.addf %252, %309 : vector<2x128xf32>
    %311 = vector.extract_strided_slice %310 {offsets = [0, 0], sizes = [2, 96], strides = [1, 1]} : vector<2x128xf32> to vector<2x96xf32>
    %312 = arith.negf %311 : vector<2x96xf32>
    %313 = math.exp %312 : vector<2x96xf32>
    %cst_50 = arith.constant 1.000000e+00 : f32
    %314 = vector.broadcast %cst_50 : f32 to vector<2x96xf32>
    %315 = arith.addf %314, %313 : vector<2x96xf32>
    %316 = arith.divf %314, %315 : vector<2x96xf32>
    %317 = vector.extract_strided_slice %310 {offsets = [0, 96], sizes = [2, 32], strides = [1, 1]} : vector<2x128xf32> to vector<2x32xf32>
    %318 = math.tanh %317 : vector<2x32xf32>
    %319 = vector.extract_strided_slice %316 {offsets = [0, 32], sizes = [2, 32], strides = [1, 1]} : vector<2x96xf32> to vector<2x32xf32>
    %320 = arith.mulf %319, %305 : vector<2x32xf32>
    %321 = vector.extract_strided_slice %316 {offsets = [0, 0], sizes = [2, 32], strides = [1, 1]} : vector<2x96xf32> to vector<2x32xf32>
    %322 = arith.mulf %321, %318 : vector<2x32xf32>
    %323 = arith.addf %320, %322 : vector<2x32xf32>
    %324 = vector.extract_strided_slice %316 {offsets = [0, 64], sizes = [2, 32], strides = [1, 1]} : vector<2x96xf32> to vector<2x32xf32>
    %325 = math.tanh %323 : vector<2x32xf32>
    %326 = arith.mulf %324, %325 : vector<2x32xf32>
    %cst_51 = arith.constant dense<0.000000e+00> : vector<2x128xf32>
    %327 = tpu.matmul %326, %248, %cst_51 {dimension_numbers = #tpu.dot_dimension_numbers<[1], [0], [0], [1], [0, 0, 1, 1], [], []>} : vector<2x32xf32>, vector<32x128xf32>, vector<2x128xf32> -> vector<2x128xf32>
    %328 = arith.addf %252, %327 : vector<2x128xf32>
    %329 = vector.extract_strided_slice %328 {offsets = [0, 0], sizes = [2, 96], strides = [1, 1]} : vector<2x128xf32> to vector<2x96xf32>
    %330 = arith.negf %329 : vector<2x96xf32>
    %331 = math.exp %330 : vector<2x96xf32>
    %cst_52 = arith.constant 1.000000e+00 : f32
    %332 = vector.broadcast %cst_52 : f32 to vector<2x96xf32>
    %333 = arith.addf %332, %331 : vector<2x96xf32>
    %334 = arith.divf %332, %333 : vector<2x96xf32>
    %335 = vector.extract_strided_slice %328 {offsets = [0, 96], sizes = [2, 32], strides = [1, 1]} : vector<2x128xf32> to vector<2x32xf32>
    %336 = math.tanh %335 : vector<2x32xf32>
    %337 = vector.extract_strided_slice %334 {offsets = [0, 32], sizes = [2, 32], strides = [1, 1]} : vector<2x96xf32> to vector<2x32xf32>
    %338 = arith.mulf %337, %323 : vector<2x32xf32>
    %339 = vector.extract_strided_slice %334 {offsets = [0, 0], sizes = [2, 32], strides = [1, 1]} : vector<2x96xf32> to vector<2x32xf32>
    %340 = arith.mulf %339, %336 : vector<2x32xf32>
    %341 = arith.addf %338, %340 : vector<2x32xf32>
    %342 = vector.extract_strided_slice %334 {offsets = [0, 64], sizes = [2, 32], strides = [1, 1]} : vector<2x96xf32> to vector<2x32xf32>
    %343 = math.tanh %341 : vector<2x32xf32>
    %344 = arith.mulf %342, %343 : vector<2x32xf32>
    %cst_53 = arith.constant dense<0.000000e+00> : vector<2x128xf32>
    %345 = tpu.matmul %344, %248, %cst_53 {dimension_numbers = #tpu.dot_dimension_numbers<[1], [0], [0], [1], [0, 0, 1, 1], [], []>} : vector<2x32xf32>, vector<32x128xf32>, vector<2x128xf32> -> vector<2x128xf32>
    %346 = arith.addf %252, %345 : vector<2x128xf32>
    %347 = vector.extract_strided_slice %346 {offsets = [0, 0], sizes = [2, 96], strides = [1, 1]} : vector<2x128xf32> to vector<2x96xf32>
    %348 = arith.negf %347 : vector<2x96xf32>
    %349 = math.exp %348 : vector<2x96xf32>
    %cst_54 = arith.constant 1.000000e+00 : f32
    %350 = vector.broadcast %cst_54 : f32 to vector<2x96xf32>
    %351 = arith.addf %350, %349 : vector<2x96xf32>
    %352 = arith.divf %350, %351 : vector<2x96xf32>
    %353 = vector.extract_strided_slice %346 {offsets = [0, 96], sizes = [2, 32], strides = [1, 1]} : vector<2x128xf32> to vector<2x32xf32>
    %354 = math.tanh %353 : vector<2x32xf32>
    %355 = vector.extract_strided_slice %352 {offsets = [0, 32], sizes = [2, 32], strides = [1, 1]} : vector<2x96xf32> to vector<2x32xf32>
    %356 = arith.mulf %355, %341 : vector<2x32xf32>
    %357 = vector.extract_strided_slice %352 {offsets = [0, 0], sizes = [2, 32], strides = [1, 1]} : vector<2x96xf32> to vector<2x32xf32>
    %358 = arith.mulf %357, %354 : vector<2x32xf32>
    %359 = arith.addf %356, %358 : vector<2x32xf32>
    %360 = vector.extract_strided_slice %352 {offsets = [0, 64], sizes = [2, 32], strides = [1, 1]} : vector<2x96xf32> to vector<2x32xf32>
    %361 = math.tanh %359 : vector<2x32xf32>
    %362 = arith.mulf %360, %361 : vector<2x32xf32>
    %cst_55 = arith.constant dense<0.000000e+00> : vector<2x128xf32>
    %363 = tpu.matmul %362, %248, %cst_55 {dimension_numbers = #tpu.dot_dimension_numbers<[1], [0], [0], [1], [0, 0, 1, 1], [], []>} : vector<2x32xf32>, vector<32x128xf32>, vector<2x128xf32> -> vector<2x128xf32>
    %364 = arith.addf %252, %363 : vector<2x128xf32>
    %365 = vector.extract_strided_slice %364 {offsets = [0, 0], sizes = [2, 96], strides = [1, 1]} : vector<2x128xf32> to vector<2x96xf32>
    %366 = arith.negf %365 : vector<2x96xf32>
    %367 = math.exp %366 : vector<2x96xf32>
    %cst_56 = arith.constant 1.000000e+00 : f32
    %368 = vector.broadcast %cst_56 : f32 to vector<2x96xf32>
    %369 = arith.addf %368, %367 : vector<2x96xf32>
    %370 = arith.divf %368, %369 : vector<2x96xf32>
    %371 = vector.extract_strided_slice %364 {offsets = [0, 96], sizes = [2, 32], strides = [1, 1]} : vector<2x128xf32> to vector<2x32xf32>
    %372 = math.tanh %371 : vector<2x32xf32>
    %373 = vector.extract_strided_slice %370 {offsets = [0, 32], sizes = [2, 32], strides = [1, 1]} : vector<2x96xf32> to vector<2x32xf32>
    %374 = arith.mulf %373, %359 : vector<2x32xf32>
    %375 = vector.extract_strided_slice %370 {offsets = [0, 0], sizes = [2, 32], strides = [1, 1]} : vector<2x96xf32> to vector<2x32xf32>
    %376 = arith.mulf %375, %372 : vector<2x32xf32>
    %377 = arith.addf %374, %376 : vector<2x32xf32>
    %378 = vector.extract_strided_slice %370 {offsets = [0, 64], sizes = [2, 32], strides = [1, 1]} : vector<2x96xf32> to vector<2x32xf32>
    %379 = math.tanh %377 : vector<2x32xf32>
    %380 = arith.mulf %378, %379 : vector<2x32xf32>
    %cst_57 = arith.constant dense<0.000000e+00> : vector<2x128xf32>
    %381 = tpu.matmul %380, %248, %cst_57 {dimension_numbers = #tpu.dot_dimension_numbers<[1], [0], [0], [1], [0, 0, 1, 1], [], []>} : vector<2x32xf32>, vector<32x128xf32>, vector<2x128xf32> -> vector<2x128xf32>
    %382 = arith.addf %252, %381 : vector<2x128xf32>
    %383 = vector.extract_strided_slice %382 {offsets = [0, 0], sizes = [2, 96], strides = [1, 1]} : vector<2x128xf32> to vector<2x96xf32>
    %384 = arith.negf %383 : vector<2x96xf32>
    %385 = math.exp %384 : vector<2x96xf32>
    %cst_58 = arith.constant 1.000000e+00 : f32
    %386 = vector.broadcast %cst_58 : f32 to vector<2x96xf32>
    %387 = arith.addf %386, %385 : vector<2x96xf32>
    %388 = arith.divf %386, %387 : vector<2x96xf32>
    %389 = vector.extract_strided_slice %382 {offsets = [0, 96], sizes = [2, 32], strides = [1, 1]} : vector<2x128xf32> to vector<2x32xf32>
    %390 = math.tanh %389 : vector<2x32xf32>
    %391 = vector.extract_strided_slice %388 {offsets = [0, 32], sizes = [2, 32], strides = [1, 1]} : vector<2x96xf32> to vector<2x32xf32>
    %392 = arith.mulf %391, %377 : vector<2x32xf32>
    %393 = vector.extract_strided_slice %388 {offsets = [0, 0], sizes = [2, 32], strides = [1, 1]} : vector<2x96xf32> to vector<2x32xf32>
    %394 = arith.mulf %393, %390 : vector<2x32xf32>
    %395 = arith.addf %392, %394 : vector<2x32xf32>
    %396 = vector.extract_strided_slice %388 {offsets = [0, 64], sizes = [2, 32], strides = [1, 1]} : vector<2x96xf32> to vector<2x32xf32>
    %397 = math.tanh %395 : vector<2x32xf32>
    %398 = arith.mulf %396, %397 : vector<2x32xf32>
    %399 = vector.extract_strided_slice %245 {offsets = [0, 0], sizes = [2, 64], strides = [1, 1]} : vector<2x128xf32> to vector<2x64xf32>
    %400 = tpu.concatenate %272, %290, %308, %326, %344, %362, %380, %398 in 1 : vector<2x32xf32>, vector<2x32xf32>, vector<2x32xf32>, vector<2x32xf32>, vector<2x32xf32>, vector<2x32xf32>, vector<2x32xf32>, vector<2x32xf32> -> vector<2x256xf32>
    %cst_59 = arith.constant 0.000000e+00 : f32
    %401 = vector.broadcast %cst_59 : f32 to vector<2x256xf32>
    %402 = arith.maximumf %400, %401 : vector<2x256xf32>
    %403 = tpu.concatenate %399, %402 in 1 : vector<2x64xf32>, vector<2x256xf32> -> vector<2x320xf32>
    %c160 = arith.constant 160 : index
    %c0_60 = arith.constant 0 : index
    %404 = vector.load %arg2[%c160, %c0_60] : memref<488x128xf32, #tpu.memory_space<vmem>>, vector<320x128xf32>
    %c480 = arith.constant 480 : index
    %c0_61 = arith.constant 0 : index
    %405 = vector.load %arg2[%c480, %c0_61] : memref<488x128xf32, #tpu.memory_space<vmem>>, vector<1x128xf32>
    %cst_62 = arith.constant dense<0.000000e+00> : vector<2x128xf32>
    %406 = tpu.matmul %403, %404, %cst_62 {dimension_numbers = #tpu.dot_dimension_numbers<[1], [0], [0], [1], [0, 0, 1, 1], [], []>} : vector<2x320xf32>, vector<320x128xf32>, vector<2x128xf32> -> vector<2x128xf32>
    %407 = vector.broadcast %405 : vector<1x128xf32> to vector<2x128xf32>
    %408 = arith.addf %406, %407 : vector<2x128xf32>
    %409 = vector.extract_strided_slice %408 {offsets = [0, 0], sizes = [2, 4], strides = [1, 1]} : vector<2x128xf32> to vector<2x4xf32>
    %cst_63 = arith.constant dense<0xFF800000> : vector<2xf32>
    %410 = vector.multi_reduction <maximumf>, %409, %cst_63 [1] : vector<2x4xf32> to vector<2xf32>
    %411 = vector.shape_cast %410 : vector<2xf32> to vector<2x1xf32>
    %412 = vector.broadcast %411 : vector<2x1xf32> to vector<2x4xf32>
    %413 = arith.subf %409, %412 : vector<2x4xf32>
    %414 = math.exp %413 : vector<2x4xf32>
    %cst_64 = arith.constant dense<0.000000e+00> : vector<2xf32>
    %415 = vector.multi_reduction <add>, %414, %cst_64 [1] : vector<2x4xf32> to vector<2xf32>
    %416 = vector.shape_cast %415 : vector<2xf32> to vector<2x1xf32>
    %417 = tpu.reciprocal %416 {approx = true} : vector<2x1xf32> -> vector<2x1xf32>
    %418 = vector.broadcast %417 : vector<2x1xf32> to vector<2x4xf32>
    %419 = arith.mulf %414, %418 : vector<2x4xf32>
    %420 = vector.extract_strided_slice %408 {offsets = [0, 4], sizes = [2, 1], strides = [1, 1]} : vector<2x128xf32> to vector<2x1xf32>
    %421 = arith.negf %420 : vector<2x1xf32>
    %422 = math.exp %421 : vector<2x1xf32>
    %cst_65 = arith.constant 1.000000e+00 : f32
    %423 = vector.broadcast %cst_65 : f32 to vector<2x1xf32>
    %424 = arith.addf %423, %422 : vector<2x1xf32>
    %425 = arith.divf %423, %424 : vector<2x1xf32>
    %cst_66 = arith.constant 6.000000e+01 : f32
    %426 = vector.broadcast %cst_66 : f32 to vector<2x1xf32>
    %427 = arith.mulf %425, %426 : vector<2x1xf32>
    %428 = vector.extract_strided_slice %408 {offsets = [0, 5], sizes = [2, 8], strides = [1, 1]} : vector<2x128xf32> to vector<2x8xf32>
    %429 = math.tanh %428 : vector<2x8xf32>
    %cst_67 = arith.constant 1.200000e+01 : f32
    %430 = vector.broadcast %cst_67 : f32 to vector<2x8xf32>
    %431 = arith.mulf %429, %430 : vector<2x8xf32>
    %432 = tpu.concatenate %419, %427, %431 in 1 : vector<2x4xf32>, vector<2x1xf32>, vector<2x8xf32> -> vector<2x13xf32>
    %c0_68 = arith.constant 0 : index
    %c0_69 = arith.constant 0 : index
    %433 = vector.load %arg3[%c0_68, %c0_69] : memref<2x13xf32, #tpu.memory_space<vmem>>, vector<2x13xf32>
    tpu.vector_store %arg3[%c0_68, %c0_69], %432 {strides = array<i32>} : memref<2x13xf32, #tpu.memory_space<vmem>>, vector<2x13xf32>,
    return
  }
}

</mosaic_0001>

<llo_original>
// kernel: new_mixnet_forward.1
$region0: #{new_mixnet_forward.1}
  #allocation0 [shape = 'u32[]', space=smem, size = 0x4, offset = 0x4, fixed_abs, tag = 'smem constant byte address 0x4 - core index']
  #allocation1 [shape = 'u32[144,128]{1,0:T(1,128)}', space=vmem, size = 0x12000, scoped, tag = 'internal scratch']
  %s0 = inlined_call_operand.vmem [shape: f32[24,16], index: 0, kind: input, shape index: {}]
  %s1 = inlined_call_operand.vmem [shape: f32[120,384], index: 1, kind: input, shape index: {}]
  %s2 = inlined_call_operand.hbm [shape: f32[488,128], index: 2, kind: input, shape index: {}]
  %s3 = inlined_call_operand.vmem [shape: f32[2,13], index: 3, kind: output, shape index: {}]
  %s4 = sld [smem:[#allocation0]]
  $region26: #{new_mixnet_forward.1} parent=0
    _
  %s6 = ssub.s32 1, %s4
  %s7 = scalar_select 0, %s6, %s4
  $region1: #{new_mixnet_forward.1} parent=0
    #allocation2 [shape = 'u8[249856]{0}', space=vmem, size = 0x3d000, scoped, tag = 'input window, operand 2, single buffered']
    #allocation3 [shape = 's32[1]{0}', space=sflag, size = 0x4, scoped, tag = 'scoped memory for new_mixnet_forward.1']
    %8 = vsyncpa [#allocation3], 0
    // Predicated region
    $region2: #{new_mixnet_forward.1} parent=1 // pred_check
      _
    $region3: #{new_mixnet_forward.1} parent=1 // pred_check_branch
      %10 = sbr.rel (0) target = $region5
    $region4: #{new_mixnet_forward.1} parent=1 // pred_region
      _
    $region5: #{new_mixnet_forward.1} parent=1 // pred_fallthru
      _
    // Predicated region
    $region6: #{new_mixnet_forward.1} parent=1 // pred_check
      _
    $region7: #{new_mixnet_forward.1} parent=1 // pred_check_branch
      %12 = sbr.rel (0) target = $region9
    $region8: #{new_mixnet_forward.1} parent=1 // pred_region
      _
    $region9: #{new_mixnet_forward.1} parent=1 // pred_fallthru
      _
    // Predicated region
    $region10: #{new_mixnet_forward.1} parent=1 // pred_check
      _
    $region11: #{new_mixnet_forward.1} parent=1 // pred_check_branch
      %14 = sbr.rel (0) target = $region13
    $region12: #{new_mixnet_forward.1} parent=1 // pred_region
      %s16 = ssub.s32 7808, 7808
      %17 = vsyncadd [#allocation3], %s16
      %s18 = sshll.u32 [#allocation2], 4
      %s19 = int_to_ptr.vmem [resolvable:$true] %s18
      %24 = dma.hbm_to_vmem [thread:$0]  %s2, 7808, %s19, [#allocation3], 128, 128, 8
    $region13: #{new_mixnet_forward.1} parent=1 // pred_fallthru
      _
    // Predicated region
    $region14: #{new_mixnet_forward.1} parent=1 // pred_check
      _
    $region15: #{new_mixnet_forward.1} parent=1 // pred_check_branch
      %26 = sbr.rel (0) target = $region17
    $region16: #{new_mixnet_forward.1} parent=1 // pred_region
      %27 = dma.done [#allocation3], 7808
    $region17: #{new_mixnet_forward.1} parent=1 // pred_fallthru
      _
    %v28 = vld [vmem:[%s1] sm:$0xff]
    %v29 = vld [vmem:[%s1 + $0x8] sm:$0xff]
    %v30 = vld [vmem:[%s1 + $0x10] sm:$0xff]
    %v31 = vld [vmem:[%s1 + $0x18] sm:$0xff]
    %v32 = vld [vmem:[%s1 + $0x20] sm:$0xff]
    %v33 = vld [vmem:[%s1 + $0x28] sm:$0xff]
    %s34 = scalar_lea.vmem %s1, 48
    %v35 = vld [vmem:[%s34] ss:$8 sm:$0x7]
    %v36 = vld [vmem:[%s1 + $0x48] sm:$0xff]
    %v37 = vld [vmem:[%s1 + $0x50] sm:$0xff]
    %v38 = vld [vmem:[%s1 + $0x58] sm:$0xff]
    %v39 = vld [vmem:[%s1 + $0x60] sm:$0xff]
    %v40 = vld [vmem:[%s1 + $0x68] sm:$0xff]
    %v41 = vld [vmem:[%s1 + $0x70] sm:$0xff]
    %v42 = vld [vmem:[%s1 + $0x78] sm:$0xff]
    %v43 = vld [vmem:[%s1 + $0x80] sm:$0xff]
    %v44 = vld [vmem:[%s1 + $0x88] sm:$0xff]
    %v45 = vld [vmem:[%s1 + $0x90] sm:$0xff]
    %v46 = vld [vmem:[%s1 + $0x98] sm:$0xff]
    %v47 = vld [vmem:[%s1 + $0xa0] sm:$0xff]
    %v48 = vld [vmem:[%s1 + $0xa8] sm:$0xff]
    %v49 = vld [vmem:[%s1 + $0xb0] sm:$0xff]
    %v50 = vld [vmem:[%s1 + $0xb8] sm:$0xff]
    %v51 = vld [vmem:[%s1 + $0xc0] sm:$0xff]
    %v52 = vld [vmem:[%s1 + $0xc8] sm:$0xff]
    %v53 = vld [vmem:[%s1 + $0xd0] sm:$0xff]
    %v54 = vld [vmem:[%s1 + $0xd8] sm:$0xff]
    %v55 = vld [vmem:[%s1 + $0xe0] sm:$0xff]
    %v56 = vld [vmem:[%s1 + $0xe8] sm:$0xff]
    %v57 = vld [vmem:[%s1 + $0xf0] sm:$0xff]
    %v58 = vld [vmem:[%s1 + $0xf8] sm:$0xff]
    %v59 = vld [vmem:[%s1 + $0x100] sm:$0xff]
    %v60 = vld [vmem:[%s1 + $0x108] sm:$0xff]
    %v61 = vld [vmem:[%s1 + $0x110] sm:$0xff]
    %v62 = vld [vmem:[%s1 + $0x118] sm:$0xff]
    %v63 = vld [vmem:[%s1 + $0x120] sm:$0xff]
    %v64 = vld [vmem:[%s1 + $0x128] sm:$0xff]
    %v65 = vld [vmem:[%s1 + $0x130] sm:$0xff]
    %v66 = vld [vmem:[%s1 + $0x138] sm:$0xff]
    %v67 = vld [vmem:[%s1 + $0x140] sm:$0xff]
    %v68 = vld [vmem:[%s1 + $0x148] sm:$0xff]
    %v69 = vld [vmem:[%s1 + $0x150] sm:$0xff]
    %v70 = vld [vmem:[%s1 + $0x158] sm:$0xff]
    %v71 = vld [vmem:[%s1 + $0x160] sm:$0xff]
    %v72 = vld [vmem:[%s0] sm:$0xff]
    %v73 = vld [vmem:[%s0 + $0x8] sm:$0xff]
    %v74 = vld [vmem:[%s0 + $0x10] sm:$0xff]
    %v76 = vlaneseq
    %v77 = vshrl.u32 %v76, 7
    %v78 = vsub.s32 0, %v77
    %v79 = vrot.slane %v35, %v78
    %v80 = vlaneseq
    %v81 = vshrl.u32 %v80, 7
    %v82 = vsub.s32 1, %v81
    %v83 = vrot.slane %v35, %v82
    %v84 = vlaneseq
    %v85 = vshrl.u32 %v84, 7
    %v86 = vsub.s32 2, %v85
    %v87 = vrot.slane %v35, %v86
    %vm91 = vcmask 130048
    %v93 = vsel %vm91, %v72, 0
    %v96 = vsel %vm91, %v73, 0
    %v99 = vsel %vm91, %v74, 0
    %101 = vmatprep.subr.mxu0 %v29
    %102 = vmatpush1.msra.mxu0 %v28
    %103 = vmatprep.subr.mxu0 %v32
    %104 = vmatpush1.msra.mxu0 %v31
    %105 = vmatprep.subr.mxu0 0.0
    %106 = vmatpush1.msra.mxu0 0.0
    %107 = vmatprep.subr.mxu0 0.0
    %108 = vmatpush1.msra.mxu0 0.0
    %109 = vmatprep.subr.mxu0 0.0
    %110 = vmatpush1.msra.mxu0 0.0
    %111 = vmatprep.subr.mxu0 0.0
    %112 = vmatpush1.msra.mxu0 0.0
    %113 = vmatprep.subr.mxu0 0.0
    %114 = vmatpush1.msra.mxu0 0.0
    %115 = vmatprep.subr.mxu0 0.0
    %116 = vmatpush1.msra.mxu0 0.0
    %117 = vmatprep.subr.mxu0 0.0
    %118 = vmatpush1.msra.mxu0 0.0
    %119 = vmatprep.subr.mxu0 0.0
    %120 = vmatpush1.msra.mxu0 0.0
    %121 = vmatprep.subr.mxu0 0.0
    %122 = vmatpush1.msra.mxu0 0.0
    %123 = vmatprep.subr.mxu0 0.0
    %124 = vmatpush1.msra.mxu0 0.0
    %125 = vmatprep.subr.mxu0 0.0
    %126 = vmatpush1.msra.mxu0 0.0
    %127 = vmatprep.subr.mxu0 0.0
    %128 = vmatpush1.msra.mxu0 0.0
    %129 = vmatprep.subr.mxu0 0.0
    %130 = vmatpush1.msra.mxu0 0.0
    %131 = vmatprep.subr.mxu0 0.0
    %132 = vmatpush1.msra.mxu0 0.0
    %133 = vmatprep.subr.mxu0 0.0
    %134 = vmatpush1.msra.mxu0 0.0
    %135 = vmatprep.subr.mxu0 0.0
    %136 = vmatpush1.msra.mxu0 0.0
    %137 = vmatprep.subr.mxu0 0.0
    %138 = vmatpush1.msra.mxu0 0.0
    %139 = vmatprep.subr.mxu0 0.0
    %140 = vmatpush1.msra.mxu0 0.0
    %141 = vmatprep.subr.mxu0 0.0
    %142 = vmatpush1.msra.mxu0 0.0
    %143 = vmatprep.subr.mxu0 0.0
    %144 = vmatpush1.msra.mxu0 0.0
    %145 = vmatprep.subr.mxu0 0.0
    %146 = vmatpush1.msra.mxu0 0.0
    %147 = vmatprep.subr.mxu0 0.0
    %148 = vmatpush1.msra.mxu0 0.0
    %149 = vmatprep.subr.mxu0 0.0
    %150 = vmatpush1.msra.mxu0 0.0
    %151 = vmatprep.subr.mxu0 0.0
    %152 = vmatpush1.msra.mxu0 0.0
    %153 = vmatprep.subr.mxu0 0.0
    %154 = vmatpush1.msra.mxu0 0.0
    %155 = vmatprep.subr.mxu0 0.0
    %156 = vmatpush1.msra.mxu0 0.0
    %157 = vmatprep.subr.mxu0 0.0
    %158 = vmatpush1.msra.mxu0 0.0
    %159 = vmatprep.subr.mxu0 0.0
    %160 = vmatpush1.msra.mxu0 0.0
    %161 = vmatprep.subr.mxu0 0.0
    %162 = vmatpush1.msra.mxu0 0.0
    %163 = vmatprep.subr.mxu0 0.0
    %164 = vmatpush1.msra.mxu0 0.0
    %165 = vmatprep.mubr.f32.mxu0 0.0
    %166 = vmatmul.mubr.f32.gmra.mrb[0].mxu0 %v93
    %v167 = vpop.f32.mrb[0].mxu0
    %v168 = vadd.f32 %v79, %v167
    %v169 = vpop.f32.mrb[0].mxu0
    %v170 = vadd.f32 %v83, %v169
    %171 = vmatprep.mubr.f32.mxu0 0.0
    %172 = vmatmul.mubr.f32.gmra.mrb[0].mxu0 %v96
    %v173 = vpop.f32.mrb[0].mxu0
    %v174 = vadd.f32 %v79, %v173
    %v175 = vpop.f32.mrb[0].mxu0
    %v176 = vadd.f32 %v83, %v175
    %177 = vmatprep.mubr.f32.mxu0 0.0
    %178 = vmatmul.mubr.f32.gmra.mrb[0].mxu0 %v99
    %v179 = vpop.f32.mrb[0].mxu0
    %v180 = vadd.f32 %v79, %v179
    %v181 = vpop.f32.mrb[0].mxu0
    %v182 = vadd.f32 %v83, %v181
    %183 = vdwg.mxu0
    %184 = vmatprep.subr.mxu0 0.0
    %185 = vmatpush1.msra.mxu0 %v30
    %186 = vmatprep.subr.mxu0 0.0
    %187 = vmatpush1.msra.mxu0 %v33
    %188 = vmatprep.subr.mxu0 0.0
    %189 = vmatpush1.msra.mxu0 0.0
    %190 = vmatprep.subr.mxu0 0.0
    %191 = vmatpush1.msra.mxu0 0.0
    %192 = vmatprep.subr.mxu0 0.0
    %193 = vmatpush1.msra.mxu0 0.0
    %194 = vmatprep.subr.mxu0 0.0
    %195 = vmatpush1.msra.mxu0 0.0
    %196 = vmatprep.subr.mxu0 0.0
    %197 = vmatpush1.msra.mxu0 0.0
    %198 = vmatprep.subr.mxu0 0.0
    %199 = vmatpush1.msra.mxu0 0.0
    %200 = vmatprep.subr.mxu0 0.0
    %201 = vmatpush1.msra.mxu0 0.0
    %202 = vmatprep.subr.mxu0 0.0
    %203 = vmatpush1.msra.mxu0 0.0
    %204 = vmatprep.subr.mxu0 0.0
    %205 = vmatpush1.msra.mxu0 0.0
    %206 = vmatprep.subr.mxu0 0.0
    %207 = vmatpush1.msra.mxu0 0.0
    %208 = vmatprep.subr.mxu0 0.0
    %209 = vmatpush1.msra.mxu0 0.0
    %210 = vmatprep.subr.mxu0 0.0
    %211 = vmatpush1.msra.mxu0 0.0
    %212 = vmatprep.subr.mxu0 0.0
    %213 = vmatpush1.msra.mxu0 0.0
    %214 = vmatprep.subr.mxu0 0.0
    %215 = vmatpush1.msra.mxu0 0.0
    %216 = vmatprep.subr.mxu0 0.0
    %217 = vmatpush1.msra.mxu0 0.0
    %218 = vmatprep.subr.mxu0 0.0
    %219 = vmatpush1.msra.mxu0 0.0
    %220 = vmatprep.subr.mxu0 0.0
    %221 = vmatpush1.msra.mxu0 0.0
    %222 = vmatprep.subr.mxu0 0.0
    %223 = vmatpush1.msra.mxu0 0.0
    %224 = vmatprep.subr.mxu0 0.0
    %225 = vmatpush1.msra.mxu0 0.0
    %226 = vmatprep.subr.mxu0 0.0
    %227 = vmatpush1.msra.mxu0 0.0
    %228 = vmatprep.subr.mxu0 0.0
    %229 = vmatpush1.msra.mxu0 0.0
    %230 = vmatprep.subr.mxu0 0.0
    %231 = vmatpush1.msra.mxu0 0.0
    %232 = vmatprep.subr.mxu0 0.0
    %233 = vmatpush1.msra.mxu0 0.0
    %234 = vmatprep.subr.mxu0 0.0
    %235 = vmatpush1.msra.mxu0 0.0
    %236 = vmatprep.subr.mxu0 0.0
    %237 = vmatpush1.msra.mxu0 0.0
    %238 = vmatprep.subr.mxu0 0.0
    %239 = vmatpush1.msra.mxu0 0.0
    %240 = vmatprep.subr.mxu0 0.0
    %241 = vmatpush1.msra.mxu0 0.0
    %242 = vmatprep.subr.mxu0 0.0
    %243 = vmatpush1.msra.mxu0 0.0
    %244 = vmatprep.subr.mxu0 0.0
    %245 = vmatpush1.msra.mxu0 0.0
    %246 = vmatprep.subr.mxu0 0.0
    %247 = vmatpush1.msra.mxu0 0.0
    %248 = vmatprep.mubr.f32.mxu0 0.0
    %249 = vmatmul.mubr.f32.gmra.mrb[0].mxu0 %v93
    %v250 = vpop.f32.mrb[0].mxu0
    %v251 = vadd.f32 %v87, %v250
    %v252 = vpop.f32.mrb[0].mxu0
    %253 = vmatprep.mubr.f32.mxu0 0.0
    %254 = vmatmul.mubr.f32.gmra.mrb[0].mxu0 %v96
    %v255 = vpop.f32.mrb[0].mxu0
    %v256 = vadd.f32 %v87, %v255
    %v257 = vpop.f32.mrb[0].mxu0
    %258 = vmatprep.mubr.f32.mxu0 0.0
    %259 = vmatmul.mubr.f32.gmra.mrb[0].mxu0 %v99
    %v260 = vpop.f32.mrb[0].mxu0
    %v261 = vadd.f32 %v87, %v260
    %v262 = vpop.f32.mrb[0].mxu0
    %263 = vdwg.mxu0
    %vm264 = vcmask 785408
    %v266 = vsel %vm264, 0.0, 0
    %268 = vmatprep.subr.mxu0 %v37
    %269 = vmatpush1.msra.mxu0 %v36
    %270 = vmatprep.subr.mxu0 %v40
    %271 = vmatpush1.msra.mxu0 %v39
    %272 = vmatprep.subr.mxu0 %v43
    %273 = vmatpush1.msra.mxu0 %v42
    %274 = vmatprep.subr.mxu0 %v46
    %275 = vmatpush1.msra.mxu0 %v45
    %276 = vmatprep.subr.mxu0 %v49
    %277 = vmatpush1.msra.mxu0 %v48
    %278 = vmatprep.subr.mxu0 %v52
    %279 = vmatpush1.msra.mxu0 %v51
    %280 = vmatprep.subr.mxu0 %v55
    %281 = vmatpush1.msra.mxu0 %v54
    %282 = vmatprep.subr.mxu0 %v58
    %283 = vmatpush1.msra.mxu0 %v57
    %284 = vmatprep.subr.mxu0 %v61
    %285 = vmatpush1.msra.mxu0 %v60
    %286 = vmatprep.subr.mxu0 %v64
    %287 = vmatpush1.msra.mxu0 %v63
    %288 = vmatprep.subr.mxu0 %v67
    %289 = vmatpush1.msra.mxu0 %v66
    %290 = vmatprep.subr.mxu0 %v70
    %291 = vmatpush1.msra.mxu0 %v69
    %292 = vmatprep.subr.mxu0 0.0
    %293 = vmatpush1.msra.mxu0 0.0
    %294 = vmatprep.subr.mxu0 0.0
    %295 = vmatpush1.msra.mxu0 0.0
    %296 = vmatprep.subr.mxu0 0.0
    %297 = vmatpush1.msra.mxu0 0.0
    %298 = vmatprep.subr.mxu0 0.0
    %299 = vmatpush1.msra.mxu0 0.0
    %300 = vmatprep.subr.mxu0 0.0
    %301 = vmatpush1.msra.mxu0 0.0
    %302 = vmatprep.subr.mxu0 0.0
    %303 = vmatpush1.msra.mxu0 0.0
    %304 = vmatprep.subr.mxu0 0.0
    %305 = vmatpush1.msra.mxu0 0.0
    %306 = vmatprep.subr.mxu0 0.0
    %307 = vmatpush1.msra.mxu0 0.0
    %308 = vmatprep.subr.mxu0 0.0
    %309 = vmatpush1.msra.mxu0 0.0
    %310 = vmatprep.subr.mxu0 0.0
    %311 = vmatpush1.msra.mxu0 0.0
    %312 = vmatprep.subr.mxu0 0.0
    %313 = vmatpush1.msra.mxu0 0.0
    %314 = vmatprep.subr.mxu0 0.0
    %315 = vmatpush1.msra.mxu0 0.0
    %316 = vmatprep.subr.mxu0 0.0
    %317 = vmatpush1.msra.mxu0 0.0
    %318 = vmatprep.subr.mxu0 0.0
    %319 = vmatpush1.msra.mxu0 0.0
    %320 = vmatprep.subr.mxu0 0.0
    %321 = vmatpush1.msra.mxu0 0.0
    %322 = vmatprep.subr.mxu0 0.0
    %323 = vmatpush1.msra.mxu0 0.0
    %324 = vmatprep.subr.mxu0 0.0
    %325 = vmatpush1.msra.mxu0 0.0
    %326 = vmatprep.subr.mxu0 0.0
    %327 = vmatpush1.msra.mxu0 0.0
    %328 = vmatprep.subr.mxu0 0.0
    %329 = vmatpush1.msra.mxu0 0.0
    %330 = vmatprep.subr.mxu0 0.0
    %331 = vmatpush1.msra.mxu0 0.0
    %332 = vmatprep.mubr.f32.mxu0 0.0
    %333 = vmatmul.mubr.f32.gmra.mrb[0].mxu0 %v266
    %v334 = vpop.f32.mrb[0].mxu0
    %v335 = vadd.f32 0.0, %v334
    %v336 = vpop.f32.mrb[0].mxu0
    %v337 = vadd.f32 0.0, %v336
    %338 = vdwg.mxu0
    %339 = vmatprep.subr.mxu0 0.0
    %340 = vmatpush1.msra.mxu0 %v38
    %341 = vmatprep.subr.mxu0 0.0
    %342 = vmatpush1.msra.mxu0 %v41
    %343 = vmatprep.subr.mxu0 0.0
    %344 = vmatpush1.msra.mxu0 %v44
    %345 = vmatprep.subr.mxu0 0.0
    %346 = vmatpush1.msra.mxu0 %v47
    %347 = vmatprep.subr.mxu0 0.0
    %348 = vmatpush1.msra.mxu0 %v50
    %349 = vmatprep.subr.mxu0 0.0
    %350 = vmatpush1.msra.mxu0 %v53
    %351 = vmatprep.subr.mxu0 0.0
    %352 = vmatpush1.msra.mxu0 %v56
    %353 = vmatprep.subr.mxu0 0.0
    %354 = vmatpush1.msra.mxu0 %v59
    %355 = vmatprep.subr.mxu0 0.0
    %356 = vmatpush1.msra.mxu0 %v62
    %357 = vmatprep.subr.mxu0 0.0
    %358 = vmatpush1.msra.mxu0 %v65
    %359 = vmatprep.subr.mxu0 0.0
    %360 = vmatpush1.msra.mxu0 %v68
    %361 = vmatprep.subr.mxu0 0.0
    %362 = vmatpush1.msra.mxu0 %v71
    %363 = vmatprep.subr.mxu0 0.0
    %364 = vmatpush1.msra.mxu0 0.0
    %365 = vmatprep.subr.mxu0 0.0
    %366 = vmatpush1.msra.mxu0 0.0
    %367 = vmatprep.subr.mxu0 0.0
    %368 = vmatpush1.msra.mxu0 0.0
    %369 = vmatprep.subr.mxu0 0.0
    %370 = vmatpush1.msra.mxu0 0.0
    %371 = vmatprep.subr.mxu0 0.0
    %372 = vmatpush1.msra.mxu0 0.0
    %373 = vmatprep.subr.mxu0 0.0
    %374 = vmatpush1.msra.mxu0 0.0
    %375 = vmatprep.subr.mxu0 0.0
    %376 = vmatpush1.msra.mxu0 0.0
    %377 = vmatprep.subr.mxu0 0.0
    %378 = vmatpush1.msra.mxu0 0.0
    %379 = vmatprep.subr.mxu0 0.0
    %380 = vmatpush1.msra.mxu0 0.0
    %381 = vmatprep.subr.mxu0 0.0
    %382 = vmatpush1.msra.mxu0 0.0
    %383 = vmatprep.subr.mxu0 0.0
    %384 = vmatpush1.msra.mxu0 0.0
    %385 = vmatprep.subr.mxu0 0.0
    %386 = vmatpush1.msra.mxu0 0.0
    %387 = vmatprep.subr.mxu0 0.0
    %388 = vmatpush1.msra.mxu0 0.0
    %389 = vmatprep.subr.mxu0 0.0
    %390 = vmatpush1.msra.mxu0 0.0
    %391 = vmatprep.subr.mxu0 0.0
    %392 = vmatpush1.msra.mxu0 0.0
    %393 = vmatprep.subr.mxu0 0.0
    %394 = vmatpush1.msra.mxu0 0.0
    %395 = vmatprep.subr.mxu0 0.0
    %396 = vmatpush1.msra.mxu0 0.0
    %397 = vmatprep.subr.mxu0 0.0
    %398 = vmatpush1.msra.mxu0 0.0
    %399 = vmatprep.subr.mxu0 0.0
    %400 = vmatpush1.msra.mxu0 0.0
    %401 = vmatprep.subr.mxu0 0.0
    %402 = vmatpush1.msra.mxu0 0.0
    %403 = vmatprep.mubr.f32.mxu0 0.0
    %404 = vmatmul.mubr.f32.gmra.mrb[0].mxu0 %v266
    %v405 = vpop.f32.mrb[0].mxu0
    %v406 = vadd.f32 0.0, %v405
    %v407 = vpop.f32.mrb[0].mxu0
    %408 = vdwg.mxu0
    %v409 = vadd.f32 %v168, %v335
    %v410 = vadd.f32 %v170, %v337
    %v411 = vadd.f32 %v251, %v406
    %v412 = vxor.u32 %v409, 2147483648
    %v413 = vxor.u32 %v410, 2147483648
    %v414 = vxor.u32 %v411, 2147483648
    %v415 = vmul.f32 %v412, 1.442695
    %v416 = vpow.pop %v415
    %v417 = vmul.f32 %v413, 1.442695
    %v418 = vpow.pop %v417
    %v419 = vmul.f32 %v414, 1.442695
    %v420 = vpow.pop %v419
    %v421 = vadd.f32 %v416, 1.0
    %v422 = vadd.f32 %v418, 1.0
    %v423 = vadd.f32 %v420, 1.0
    %v424 = vrcp.pop %v421
    %v425 = vmul.f32 1.0, %v424
    %v426 = vrcp.pop %v422
    %v427 = vmul.f32 1.0, %v426
    %v428 = vrcp.pop %v423
    %v429 = vmul.f32 1.0, %v428
    %v430 = vtanh.pop %v411
    %v431 = vmul.f32 %v425, 0.0
    %v432 = vmul.f32 %v427, 0.0
    %434 = vrot.lane.b32.xlu0 %v430, 96
    %v435 = vpop.permute.xlu0 %434
    %v437 = vmul.f32 %v425, %v435
    %439 = vrot.lane.b32.xlu0 %v437, 96
    %v440 = vpop.permute.xlu0 %439
    %v442 = vadd.f32 %v431, %v440
    %v443 = vadd.f32 %v432, %v440
    %v444 = vtanh.pop %v442
    %v445 = vtanh.pop %v443
    %448 = vrot.lane.b32.xlu0 %v444, 96
    %v449 = vpop.permute.xlu0 %448
    %450 = vrot.lane.b32.xlu0 %v445, 96
    %v451 = vpop.permute.xlu0 %450
    %v452 = vsel %vm264, %v449, %v451
    %v455 = vmul.f32 %v427, %v452
    %v456 = vmul.f32 %v429, %v451
    %459 = vrot.lane.b32.xlu0 %v455, 64
    %v460 = vpop.permute.xlu0 %459
    %461 = vrot.lane.b32.xlu0 %v456, 64
    %v462 = vpop.permute.xlu0 %461
    %vm463 = vcmask 523264
    %v464 = vsel %vm463, %v460, %v462
    %v465 = vsel %vm264, %v464, 0
    %467 = vmatprep.subr.mxu0 %v37
    %468 = vmatpush1.msra.mxu0 %v36
    %469 = vmatprep.subr.mxu0 %v40
    %470 = vmatpush1.msra.mxu0 %v39
    %471 = vmatprep.subr.mxu0 %v43
    %472 = vmatpush1.msra.mxu0 %v42
    %473 = vmatprep.subr.mxu0 %v46
    %474 = vmatpush1.msra.mxu0 %v45
    %475 = vmatprep.subr.mxu0 %v49
    %476 = vmatpush1.msra.mxu0 %v48
    %477 = vmatprep.subr.mxu0 %v52
    %478 = vmatpush1.msra.mxu0 %v51
    %479 = vmatprep.subr.mxu0 %v55
    %480 = vmatpush1.msra.mxu0 %v54
    %481 = vmatprep.subr.mxu0 %v58
    %482 = vmatpush1.msra.mxu0 %v57
    %483 = vmatprep.subr.mxu0 %v61
    %484 = vmatpush1.msra.mxu0 %v60
    %485 = vmatprep.subr.mxu0 %v64
    %486 = vmatpush1.msra.mxu0 %v63
    %487 = vmatprep.subr.mxu0 %v67
    %488 = vmatpush1.msra.mxu0 %v66
    %489 = vmatprep.subr.mxu0 %v70
    %490 = vmatpush1.msra.mxu0 %v69
    %491 = vmatprep.subr.mxu0 0.0
    %492 = vmatpush1.msra.mxu0 0.0
    %493 = vmatprep.subr.mxu0 0.0
    %494 = vmatpush1.msra.mxu0 0.0
    %495 = vmatprep.subr.mxu0 0.0
    %496 = vmatpush1.msra.mxu0 0.0
    %497 = vmatprep.subr.mxu0 0.0
    %498 = vmatpush1.msra.mxu0 0.0
    %499 = vmatprep.subr.mxu0 0.0
    %500 = vmatpush1.msra.mxu0 0.0
    %501 = vmatprep.subr.mxu0 0.0
    %502 = vmatpush1.msra.mxu0 0.0
    %503 = vmatprep.subr.mxu0 0.0
    %504 = vmatpush1.msra.mxu0 0.0
    %505 = vmatprep.subr.mxu0 0.0
    %506 = vmatpush1.msra.mxu0 0.0
    %507 = vmatprep.subr.mxu0 0.0
    %508 = vmatpush1.msra.mxu0 0.0
    %509 = vmatprep.subr.mxu0 0.0
    %510 = vmatpush1.msra.mxu0 0.0
    %511 = vmatprep.subr.mxu0 0.0
    %512 = vmatpush1.msra.mxu0 0.0
    %513 = vmatprep.subr.mxu0 0.0
    %514 = vmatpush1.msra.mxu0 0.0
    %515 = vmatprep.subr.mxu0 0.0
    %516 = vmatpush1.msra.mxu0 0.0
    %517 = vmatprep.subr.mxu0 0.0
    %518 = vmatpush1.msra.mxu0 0.0
    %519 = vmatprep.subr.mxu0 0.0
    %520 = vmatpush1.msra.mxu0 0.0
    %521 = vmatprep.subr.mxu0 0.0
    %522 = vmatpush1.msra.mxu0 0.0
    %523 = vmatprep.subr.mxu0 0.0
    %524 = vmatpush1.msra.mxu0 0.0
    %525 = vmatprep.subr.mxu0 0.0
    %526 = vmatpush1.msra.mxu0 0.0
    %527 = vmatprep.subr.mxu0 0.0
    %528 = vmatpush1.msra.mxu0 0.0
    %529 = vmatprep.subr.mxu0 0.0
    %530 = vmatpush1.msra.mxu0 0.0
    %531 = vmatprep.mubr.f32.mxu0 0.0
    %532 = vmatmul.mubr.f32.gmra.mrb[0].mxu0 %v465
    %v533 = vpop.f32.mrb[0].mxu0
    %v534 = vadd.f32 0.0, %v533
    %v535 = vpop.f32.mrb[0].mxu0
    %v536 = vadd.f32 0.0, %v535
    %537 = vdwg.mxu0
    %538 = vmatprep.subr.mxu0 0.0
    %539 = vmatpush1.msra.mxu0 %v38
    %540 = vmatprep.subr.mxu0 0.0
    %541 = vmatpush1.msra.mxu0 %v41
    %542 = vmatprep.subr.mxu0 0.0
    %543 = vmatpush1.msra.mxu0 %v44
    %544 = vmatprep.subr.mxu0 0.0
    %545 = vmatpush1.msra.mxu0 %v47
    %546 = vmatprep.subr.mxu0 0.0
    %547 = vmatpush1.msra.mxu0 %v50
    %548 = vmatprep.subr.mxu0 0.0
    %549 = vmatpush1.msra.mxu0 %v53
    %550 = vmatprep.subr.mxu0 0.0
    %551 = vmatpush1.msra.mxu0 %v56
    %552 = vmatprep.subr.mxu0 0.0
    %553 = vmatpush1.msra.mxu0 %v59
    %554 = vmatprep.subr.mxu0 0.0
    %555 = vmatpush1.msra.mxu0 %v62
    %556 = vmatprep.subr.mxu0 0.0
    %557 = vmatpush1.msra.mxu0 %v65
    %558 = vmatprep.subr.mxu0 0.0
    %559 = vmatpush1.msra.mxu0 %v68
    %560 = vmatprep.subr.mxu0 0.0
    %561 = vmatpush1.msra.mxu0 %v71
    %562 = vmatprep.subr.mxu0 0.0
    %563 = vmatpush1.msra.mxu0 0.0
    %564 = vmatprep.subr.mxu0 0.0
    %565 = vmatpush1.msra.mxu0 0.0
    %566 = vmatprep.subr.mxu0 0.0
    %567 = vmatpush1.msra.mxu0 0.0
    %568 = vmatprep.subr.mxu0 0.0
    %569 = vmatpush1.msra.mxu0 0.0
    %570 = vmatprep.subr.mxu0 0.0
    %571 = vmatpush1.msra.mxu0 0.0
    %572 = vmatprep.subr.mxu0 0.0
    %573 = vmatpush1.msra.mxu0 0.0
    %574 = vmatprep.subr.mxu0 0.0
    %575 = vmatpush1.msra.mxu0 0.0
    %576 = vmatprep.subr.mxu0 0.0
    %577 = vmatpush1.msra.mxu0 0.0
    %578 = vmatprep.subr.mxu0 0.0
    %579 = vmatpush1.msra.mxu0 0.0
    %580 = vmatprep.subr.mxu0 0.0
    %581 = vmatpush1.msra.mxu0 0.0
    %582 = vmatprep.subr.mxu0 0.0
    %583 = vmatpush1.msra.mxu0 0.0
    %584 = vmatprep.subr.mxu0 0.0
    %585 = vmatpush1.msra.mxu0 0.0
    %586 = vmatprep.subr.mxu0 0.0
    %587 = vmatpush1.msra.mxu0 0.0
    %588 = vmatprep.subr.mxu0 0.0
    %589 = vmatpush1.msra.mxu0 0.0
    %590 = vmatprep.subr.mxu0 0.0
    %591 = vmatpush1.msra.mxu0 0.0
    %592 = vmatprep.subr.mxu0 0.0
    %593 = vmatpush1.msra.mxu0 0.0
    %594 = vmatprep.subr.mxu0 0.0
    %595 = vmatpush1.msra.mxu0 0.0
    %596 = vmatprep.subr.mxu0 0.0
    %597 = vmatpush1.msra.mxu0 0.0
    %598 = vmatprep.subr.mxu0 0.0
    %599 = vmatpush1.msra.mxu0 0.0
    %600 = vmatprep.subr.mxu0 0.0
    %601 = vmatpush1.msra.mxu0 0.0
    %602 = vmatprep.mubr.f32.mxu0 0.0
    %603 = vmatmul.mubr.f32.gmra.mrb[0].mxu0 %v465
    %v604 = vpop.f32.mrb[0].mxu0
    %v605 = vadd.f32 0.0, %v604
    %v606 = vpop.f32.mrb[0].mxu0
    %607 = vdwg.mxu0
    %v611 = vrot.slane %v534, 6
    %v612 = vrot.slane %v536, 6
    %v613 = vrot.slane %v605, 6
    %v617 = vadd.f32 %v168, %v611
    %v618 = vadd.f32 %v170, %v612
    %v619 = vadd.f32 %v251, %v613
    %v620 = vxor.u32 %v617, 2147483648
    %v621 = vxor.u32 %v618, 2147483648
    %v622 = vxor.u32 %v619, 2147483648
    %v623 = vmul.f32 %v620, 1.442695
    %v624 = vpow.pop %v623
    %v625 = vmul.f32 %v621, 1.442695
    %v626 = vpow.pop %v625
    %v627 = vmul.f32 %v622, 1.442695
    %v628 = vpow.pop %v627
    %v629 = vadd.f32 %v624, 1.0
    %v630 = vadd.f32 %v626, 1.0
    %v631 = vadd.f32 %v628, 1.0
    %v632 = vrcp.pop %v629
    %v633 = vmul.f32 1.0, %v632
    %v634 = vrcp.pop %v630
    %v635 = vmul.f32 1.0, %v634
    %v636 = vrcp.pop %v631
    %v637 = vmul.f32 1.0, %v636
    %v638 = vtanh.pop %v619
    %v641 = vrot.slane %v442, 6
    %v642 = vrot.slane %v443, 6
    %v645 = vmul.f32 %v633, %v641
    %v646 = vmul.f32 %v635, %v642
    %648 = vrot.lane.b32.xlu0 %v638, 96
    %v649 = vpop.permute.xlu0 %648
    %v651 = vmul.f32 %v633, %v649
    %653 = vrot.lane.b32.xlu0 %v651, 96
    %v654 = vpop.permute.xlu0 %653
    %v656 = vadd.f32 %v645, %v654
    %v657 = vadd.f32 %v646, %v654
    %v658 = vtanh.pop %v656
    %v659 = vtanh.pop %v657
    %662 = vrot.lane.b32.xlu0 %v658, 96
    %v663 = vpop.permute.xlu0 %662
    %664 = vrot.lane.b32.xlu0 %v659, 96
    %v665 = vpop.permute.xlu0 %664
    %v666 = vsel %vm264, %v663, %v665
    %v669 = vmul.f32 %v635, %v666
    %v670 = vmul.f32 %v637, %v665
    %v673 = vrot.slane %v669, 2
    %v674 = vrot.slane %v670, 2
    %675 = vrot.lane.b32.xlu0 %v673, 64
    %v676 = vpop.permute.xlu0 %675
    %677 = vrot.lane.b32.xlu0 %v674, 64
    %v678 = vpop.permute.xlu0 %677
    %v679 = vsel %vm463, %v676, %v678
    %v680 = vsel %vm264, %v679, 0
    %682 = vmatprep.subr.mxu0 %v37
    %683 = vmatpush1.msra.mxu0 %v36
    %684 = vmatprep.subr.mxu0 %v40
    %685 = vmatpush1.msra.mxu0 %v39
    %686 = vmatprep.subr.mxu0 %v43
    %687 = vmatpush1.msra.mxu0 %v42
    %688 = vmatprep.subr.mxu0 %v46
    %689 = vmatpush1.msra.mxu0 %v45
    %690 = vmatprep.subr.mxu0 %v49
    %691 = vmatpush1.msra.mxu0 %v48
    %692 = vmatprep.subr.mxu0 %v52
    %693 = vmatpush1.msra.mxu0 %v51
    %694 = vmatprep.subr.mxu0 %v55
    %695 = vmatpush1.msra.mxu0 %v54
    %696 = vmatprep.subr.mxu0 %v58
    %697 = vmatpush1.msra.mxu0 %v57
    %698 = vmatprep.subr.mxu0 %v61
    %699 = vmatpush1.msra.mxu0 %v60
    %700 = vmatprep.subr.mxu0 %v64
    %701 = vmatpush1.msra.mxu0 %v63
    %702 = vmatprep.subr.mxu0 %v67
    %703 = vmatpush1.msra.mxu0 %v66
    %704 = vmatprep.subr.mxu0 %v70
    %705 = vmatpush1.msra.mxu0 %v69
    %706 = vmatprep.subr.mxu0 0.0
    %707 = vmatpush1.msra.mxu0 0.0
    %708 = vmatprep.subr.mxu0 0.0
    %709 = vmatpush1.msra.mxu0 0.0
    %710 = vmatprep.subr.mxu0 0.0
    %711 = vmatpush1.msra.mxu0 0.0
    %712 = vmatprep.subr.mxu0 0.0
    %713 = vmatpush1.msra.mxu0 0.0
    %714 = vmatprep.subr.mxu0 0.0
    %715 = vmatpush1.msra.mxu0 0.0
    %716 = vmatprep.subr.mxu0 0.0
    %717 = vmatpush1.msra.mxu0 0.0
    %718 = vmatprep.subr.mxu0 0.0
    %719 = vmatpush1.msra.mxu0 0.0
    %720 = vmatprep.subr.mxu0 0.0
    %721 = vmatpush1.msra.mxu0 0.0
    %722 = vmatprep.subr.mxu0 0.0
    %723 = vmatpush1.msra.mxu0 0.0
    %724 = vmatprep.subr.mxu0 0.0
    %725 = vmatpush1.msra.mxu0 0.0
    %726 = vmatprep.subr.mxu0 0.0
    %727 = vmatpush1.msra.mxu0 0.0
    %728 = vmatprep.subr.mxu0 0.0
    %729 = vmatpush1.msra.mxu0 0.0
    %730 = vmatprep.subr.mxu0 0.0
    %731 = vmatpush1.msra.mxu0 0.0
    %732 = vmatprep.subr.mxu0 0.0
    %733 = vmatpush1.msra.mxu0 0.0
    %734 = vmatprep.subr.mxu0 0.0
    %735 = vmatpush1.msra.mxu0 0.0
    %736 = vmatprep.subr.mxu0 0.0
    %737 = vmatpush1.msra.mxu0 0.0
    %738 = vmatprep.subr.mxu0 0.0
    %739 = vmatpush1.msra.mxu0 0.0
    %740 = vmatprep.subr.mxu0 0.0
    %741 = vmatpush1.msra.mxu0 0.0
    %742 = vmatprep.subr.mxu0 0.0
    %743 = vmatpush1.msra.mxu0 0.0
    %744 = vmatprep.subr.mxu0 0.0
    %745 = vmatpush1.msra.mxu0 0.0
    %746 = vmatprep.mubr.f32.mxu0 0.0
    %747 = vmatmul.mubr.f32.gmra.mrb[0].mxu0 %v680
    %v748 = vpop.f32.mrb[0].mxu0
    %v749 = vadd.f32 0.0, %v748
    %v750 = vpop.f32.mrb[0].mxu0
    %v751 = vadd.f32 0.0, %v750
    %752 = vdwg.mxu0
    %753 = vmatprep.subr.mxu0 0.0
    %754 = vmatpush1.msra.mxu0 %v38
    %755 = vmatprep.subr.mxu0 0.0
    %756 = vmatpush1.msra.mxu0 %v41
    %757 = vmatprep.subr.mxu0 0.0
    %758 = vmatpush1.msra.mxu0 %v44
    %759 = vmatprep.subr.mxu0 0.0
    %760 = vmatpush1.msra.mxu0 %v47
    %761 = vmatprep.subr.mxu0 0.0
    %762 = vmatpush1.msra.mxu0 %v50
    %763 = vmatprep.subr.mxu0 0.0
    %764 = vmatpush1.msra.mxu0 %v53
    %765 = vmatprep.subr.mxu0 0.0
    %766 = vmatpush1.msra.mxu0 %v56
    %767 = vmatprep.subr.mxu0 0.0
    %768 = vmatpush1.msra.mxu0 %v59
    %769 = vmatprep.subr.mxu0 0.0
    %770 = vmatpush1.msra.mxu0 %v62
    %771 = vmatprep.subr.mxu0 0.0
    %772 = vmatpush1.msra.mxu0 %v65
    %773 = vmatprep.subr.mxu0 0.0
    %774 = vmatpush1.msra.mxu0 %v68
    %775 = vmatprep.subr.mxu0 0.0
    %776 = vmatpush1.msra.mxu0 %v71
    %777 = vmatprep.subr.mxu0 0.0
    %778 = vmatpush1.msra.mxu0 0.0
    %779 = vmatprep.subr.mxu0 0.0
    %780 = vmatpush1.msra.mxu0 0.0
    %781 = vmatprep.subr.mxu0 0.0
    %782 = vmatpush1.msra.mxu0 0.0
    %783 = vmatprep.subr.mxu0 0.0
    %784 = vmatpush1.msra.mxu0 0.0
    %785 = vmatprep.subr.mxu0 0.0
    %786 = vmatpush1.msra.mxu0 0.0
    %787 = vmatprep.subr.mxu0 0.0
    %788 = vmatpush1.msra.mxu0 0.0
    %789 = vmatprep.subr.mxu0 0.0
    %790 = vmatpush1.msra.mxu0 0.0
    %791 = vmatprep.subr.mxu0 0.0
    %792 = vmatpush1.msra.mxu0 0.0
    %793 = vmatprep.subr.mxu0 0.0
    %794 = vmatpush1.msra.mxu0 0.0
    %795 = vmatprep.subr.mxu0 0.0
    %796 = vmatpush1.msra.mxu0 0.0
    %797 = vmatprep.subr.mxu0 0.0
    %798 = vmatpush1.msra.mxu0 0.0
    %799 = vmatprep.subr.mxu0 0.0
    %800 = vmatpush1.msra.mxu0 0.0
    %801 = vmatprep.subr.mxu0 0.0
    %802 = vmatpush1.msra.mxu0 0.0
    %803 = vmatprep.subr.mxu0 0.0
    %804 = vmatpush1.msra.mxu0 0.0
    %805 = vmatprep.subr.mxu0 0.0
    %806 = vmatpush1.msra.mxu0 0.0
    %807 = vmatprep.subr.mxu0 0.0
    %808 = vmatpush1.msra.mxu0 0.0
    %809 = vmatprep.subr.mxu0 0.0
    %810 = vmatpush1.msra.mxu0 0.0
    %811 = vmatprep.subr.mxu0 0.0
    %812 = vmatpush1.msra.mxu0 0.0
    %813 = vmatprep.subr.mxu0 0.0
    %814 = vmatpush1.msra.mxu0 0.0
    %815 = vmatprep.subr.mxu0 0.0
    %816 = vmatpush1.msra.mxu0 0.0
    %817 = vmatprep.mubr.f32.mxu0 0.0
    %818 = vmatmul.mubr.f32.gmra.mrb[0].mxu0 %v680
    %v819 = vpop.f32.mrb[0].mxu0
    %v820 = vadd.f32 0.0, %v819
    %v821 = vpop.f32.mrb[0].mxu0
    %822 = vdwg.mxu0
    %v826 = vrot.slane %v749, 4
    %v827 = vrot.slane %v751, 4
    %v828 = vrot.slane %v820, 4
    %v832 = vadd.f32 %v168, %v826
    %v833 = vadd.f32 %v170, %v827
    %v834 = vadd.f32 %v251, %v828
    %v835 = vxor.u32 %v832, 2147483648
    %v836 = vxor.u32 %v833, 2147483648
    %v837 = vxor.u32 %v834, 2147483648
    %v838 = vmul.f32 %v835, 1.442695
    %v839 = vpow.pop %v838
    %v840 = vmul.f32 %v836, 1.442695
    %v841 = vpow.pop %v840
    %v842 = vmul.f32 %v837, 1.442695
    %v843 = vpow.pop %v842
    %v844 = vadd.f32 %v839, 1.0
    %v845 = vadd.f32 %v841, 1.0
    %v846 = vadd.f32 %v843, 1.0
    %v847 = vrcp.pop %v844
    %v848 = vmul.f32 1.0, %v847
    %v849 = vrcp.pop %v845
    %v850 = vmul.f32 1.0, %v849
    %v851 = vrcp.pop %v846
    %v852 = vmul.f32 1.0, %v851
    %v853 = vtanh.pop %v834
    %v856 = vrot.slane %v656, 6
    %v857 = vrot.slane %v657, 6
    %v860 = vmul.f32 %v848, %v856
    %v861 = vmul.f32 %v850, %v857
    %863 = vrot.lane.b32.xlu0 %v853, 96
    %v864 = vpop.permute.xlu0 %863
    %v866 = vmul.f32 %v848, %v864
    %868 = vrot.lane.b32.xlu0 %v866, 96
    %v869 = vpop.permute.xlu0 %868
    %v871 = vadd.f32 %v860, %v869
    %v872 = vadd.f32 %v861, %v869
    %v873 = vtanh.pop %v871
    %v874 = vtanh.pop %v872
    %877 = vrot.lane.b32.xlu0 %v873, 96
    %v878 = vpop.permute.xlu0 %877
    %879 = vrot.lane.b32.xlu0 %v874, 96
    %v880 = vpop.permute.xlu0 %879
    %v881 = vsel %vm264, %v878, %v880
    %v884 = vmul.f32 %v850, %v881
    %v885 = vmul.f32 %v852, %v880
    %v888 = vrot.slane %v884, 4
    %v889 = vrot.slane %v885, 4
    %890 = vrot.lane.b32.xlu0 %v888, 64
    %v891 = vpop.permute.xlu0 %890
    %892 = vrot.lane.b32.xlu0 %v889, 64
    %v893 = vpop.permute.xlu0 %892
    %v894 = vsel %vm463, %v891, %v893
    %v895 = vsel %vm264, %v894, 0
    %897 = vmatprep.subr.mxu0 %v37
    %898 = vmatpush1.msra.mxu0 %v36
    %899 = vmatprep.subr.mxu0 %v40
    %900 = vmatpush1.msra.mxu0 %v39
    %901 = vmatprep.subr.mxu0 %v43
    %902 = vmatpush1.msra.mxu0 %v42
    %903 = vmatprep.subr.mxu0 %v46
    %904 = vmatpush1.msra.mxu0 %v45
    %905 = vmatprep.subr.mxu0 %v49
    %906 = vmatpush1.msra.mxu0 %v48
    %907 = vmatprep.subr.mxu0 %v52
    %908 = vmatpush1.msra.mxu0 %v51
    %909 = vmatprep.subr.mxu0 %v55
    %910 = vmatpush1.msra.mxu0 %v54
    %911 = vmatprep.subr.mxu0 %v58
    %912 = vmatpush1.msra.mxu0 %v57
    %913 = vmatprep.subr.mxu0 %v61
    %914 = vmatpush1.msra.mxu0 %v60
    %915 = vmatprep.subr.mxu0 %v64
    %916 = vmatpush1.msra.mxu0 %v63
    %917 = vmatprep.subr.mxu0 %v67
    %918 = vmatpush1.msra.mxu0 %v66
    %919 = vmatprep.subr.mxu0 %v70
    %920 = vmatpush1.msra.mxu0 %v69
    %921 = vmatprep.subr.mxu0 0.0
    %922 = vmatpush1.msra.mxu0 0.0
    %923 = vmatprep.subr.mxu0 0.0
    %924 = vmatpush1.msra.mxu0 0.0
    %925 = vmatprep.subr.mxu0 0.0
    %926 = vmatpush1.msra.mxu0 0.0
    %927 = vmatprep.subr.mxu0 0.0
    %928 = vmatpush1.msra.mxu0 0.0
    %929 = vmatprep.subr.mxu0 0.0
    %930 = vmatpush1.msra.mxu0 0.0
    %931 = vmatprep.subr.mxu0 0.0
    %932 = vmatpush1.msra.mxu0 0.0
    %933 = vmatprep.subr.mxu0 0.0
    %934 = vmatpush1.msra.mxu0 0.0
    %935 = vmatprep.subr.mxu0 0.0
    %936 = vmatpush1.msra.mxu0 0.0
    %937 = vmatprep.subr.mxu0 0.0
    %938 = vmatpush1.msra.mxu0 0.0
    %939 = vmatprep.subr.mxu0 0.0
    %940 = vmatpush1.msra.mxu0 0.0
    %941 = vmatprep.subr.mxu0 0.0
    %942 = vmatpush1.msra.mxu0 0.0
    %943 = vmatprep.subr.mxu0 0.0
    %944 = vmatpush1.msra.mxu0 0.0
    %945 = vmatprep.subr.mxu0 0.0
    %946 = vmatpush1.msra.mxu0 0.0
    %947 = vmatprep.subr.mxu0 0.0
    %948 = vmatpush1.msra.mxu0 0.0
    %949 = vmatprep.subr.mxu0 0.0
    %950 = vmatpush1.msra.mxu0 0.0
    %951 = vmatprep.subr.mxu0 0.0
    %952 = vmatpush1.msra.mxu0 0.0
    %953 = vmatprep.subr.mxu0 0.0
    %954 = vmatpush1.msra.mxu0 0.0
    %955 = vmatprep.subr.mxu0 0.0
    %956 = vmatpush1.msra.mxu0 0.0
    %957 = vmatprep.subr.mxu0 0.0
    %958 = vmatpush1.msra.mxu0 0.0
    %959 = vmatprep.subr.mxu0 0.0
    %960 = vmatpush1.msra.mxu0 0.0
    %961 = vmatprep.mubr.f32.mxu0 0.0
    %962 = vmatmul.mubr.f32.gmra.mrb[0].mxu0 %v895
    %v963 = vpop.f32.mrb[0].mxu0
    %v964 = vadd.f32 0.0, %v963
    %v965 = vpop.f32.mrb[0].mxu0
    %v966 = vadd.f32 0.0, %v965
    %967 = vdwg.mxu0
    %968 = vmatprep.subr.mxu0 0.0
    %969 = vmatpush1.msra.mxu0 %v38
    %970 = vmatprep.subr.mxu0 0.0
    %971 = vmatpush1.msra.mxu0 %v41
    %972 = vmatprep.subr.mxu0 0.0
    %973 = vmatpush1.msra.mxu0 %v44
    %974 = vmatprep.subr.mxu0 0.0
    %975 = vmatpush1.msra.mxu0 %v47
    %976 = vmatprep.subr.mxu0 0.0
    %977 = vmatpush1.msra.mxu0 %v50
    %978 = vmatprep.subr.mxu0 0.0
    %979 = vmatpush1.msra.mxu0 %v53
    %980 = vmatprep.subr.mxu0 0.0
    %981 = vmatpush1.msra.mxu0 %v56
    %982 = vmatprep.subr.mxu0 0.0
    %983 = vmatpush1.msra.mxu0 %v59
    %984 = vmatprep.subr.mxu0 0.0
    %985 = vmatpush1.msra.mxu0 %v62
    %986 = vmatprep.subr.mxu0 0.0
    %987 = vmatpush1.msra.mxu0 %v65
    %988 = vmatprep.subr.mxu0 0.0
    %989 = vmatpush1.msra.mxu0 %v68
    %990 = vmatprep.subr.mxu0 0.0
    %991 = vmatpush1.msra.mxu0 %v71
    %992 = vmatprep.subr.mxu0 0.0
    %993 = vmatpush1.msra.mxu0 0.0
    %994 = vmatprep.subr.mxu0 0.0
    %995 = vmatpush1.msra.mxu0 0.0
    %996 = vmatprep.subr.mxu0 0.0
    %997 = vmatpush1.msra.mxu0 0.0
    %998 = vmatprep.subr.mxu0 0.0
    %999 = vmatpush1.msra.mxu0 0.0
    %1000 = vmatprep.subr.mxu0 0.0
    %1001 = vmatpush1.msra.mxu0 0.0
    %1002 = vmatprep.subr.mxu0 0.0
    %1003 = vmatpush1.msra.mxu0 0.0
    %1004 = vmatprep.subr.mxu0 0.0
    %1005 = vmatpush1.msra.mxu0 0.0
    %1006 = vmatprep.subr.mxu0 0.0
    %1007 = vmatpush1.msra.mxu0 0.0
    %1008 = vmatprep.subr.mxu0 0.0
    %1009 = vmatpush1.msra.mxu0 0.0
    %1010 = vmatprep.subr.mxu0 0.0
    %1011 = vmatpush1.msra.mxu0 0.0
    %1012 = vmatprep.subr.mxu0 0.0
    %1013 = vmatpush1.msra.mxu0 0.0
    %1014 = vmatprep.subr.mxu0 0.0
    %1015 = vmatpush1.msra.mxu0 0.0
    %1016 = vmatprep.subr.mxu0 0.0
    %1017 = vmatpush1.msra.mxu0 0.0
    %1018 = vmatprep.subr.mxu0 0.0
    %1019 = vmatpush1.msra.mxu0 0.0
    %1020 = vmatprep.subr.mxu0 0.0
    %1021 = vmatpush1.msra.mxu0 0.0
    %1022 = vmatprep.subr.mxu0 0.0
    %1023 = vmatpush1.msra.mxu0 0.0
    %1024 = vmatprep.subr.mxu0 0.0
    %1025 = vmatpush1.msra.mxu0 0.0
    %1026 = vmatprep.subr.mxu0 0.0
    %1027 = vmatpush1.msra.mxu0 0.0
    %1028 = vmatprep.subr.mxu0 0.0
    %1029 = vmatpush1.msra.mxu0 0.0
    %1030 = vmatprep.subr.mxu0 0.0
    %1031 = vmatpush1.msra.mxu0 0.0
    %1032 = vmatprep.mubr.f32.mxu0 0.0
    %1033 = vmatmul.mubr.f32.gmra.mrb[0].mxu0 %v895
    %v1034 = vpop.f32.mrb[0].mxu0
    %v1035 = vadd.f32 0.0, %v1034
    %v1036 = vpop.f32.mrb[0].mxu0
    %1037 = vdwg.mxu0
    %v1041 = vrot.slane %v964, 2
    %v1042 = vrot.slane %v966, 2
    %v1043 = vrot.slane %v1035, 2
    %v1047 = vadd.f32 %v168, %v1041
    %v1048 = vadd.f32 %v170, %v1042
    %v1049 = vadd.f32 %v251, %v1043
    %v1050 = vxor.u32 %v1047, 2147483648
    %v1051 = vxor.u32 %v1048, 2147483648
    %v1052 = vxor.u32 %v1049, 2147483648
    %v1053 = vmul.f32 %v1050, 1.442695
    %v1054 = vpow.pop %v1053
    %v1055 = vmul.f32 %v1051, 1.442695
    %v1056 = vpow.pop %v1055
    %v1057 = vmul.f32 %v1052, 1.442695
    %v1058 = vpow.pop %v1057
    %v1059 = vadd.f32 %v1054, 1.0
    %v1060 = vadd.f32 %v1056, 1.0
    %v1061 = vadd.f32 %v1058, 1.0
    %v1062 = vrcp.pop %v1059
    %v1063 = vmul.f32 1.0, %v1062
    %v1064 = vrcp.pop %v1060
    %v1065 = vmul.f32 1.0, %v1064
    %v1066 = vrcp.pop %v1061
    %v1067 = vmul.f32 1.0, %v1066
    %v1068 = vtanh.pop %v1049
    %v1071 = vrot.slane %v871, 6
    %v1072 = vrot.slane %v872, 6
    %v1075 = vmul.f32 %v1063, %v1071
    %v1076 = vmul.f32 %v1065, %v1072
    %1078 = vrot.lane.b32.xlu0 %v1068, 96
    %v1079 = vpop.permute.xlu0 %1078
    %v1081 = vmul.f32 %v1063, %v1079
    %1083 = vrot.lane.b32.xlu0 %v1081, 96
    %v1084 = vpop.permute.xlu0 %1083
    %v1086 = vadd.f32 %v1075, %v1084
    %v1087 = vadd.f32 %v1076, %v1084
    %v1088 = vtanh.pop %v1086
    %v1089 = vtanh.pop %v1087
    %1092 = vrot.lane.b32.xlu0 %v1088, 96
    %v1093 = vpop.permute.xlu0 %1092
    %1094 = vrot.lane.b32.xlu0 %v1089, 96
    %v1095 = vpop.permute.xlu0 %1094
    %v1096 = vsel %vm264, %v1093, %v1095
    %v1099 = vmul.f32 %v1065, %v1096
    %v1100 = vmul.f32 %v1067, %v1095
    %v1103 = vrot.slane %v1099, 6
    %v1104 = vrot.slane %v1100, 6
    %1105 = vrot.lane.b32.xlu0 %v1103, 64
    %v1106 = vpop.permute.xlu0 %1105
    %1107 = vrot.lane.b32.xlu0 %v1104, 64
    %v1108 = vpop.permute.xlu0 %1107
    %v1109 = vsel %vm463, %v1106, %v1108
    %v1110 = vsel %vm264, %v1109, 0
    %1112 = vmatprep.subr.mxu0 %v37
    %1113 = vmatpush1.msra.mxu0 %v36
    %1114 = vmatprep.subr.mxu0 %v40
    %1115 = vmatpush1.msra.mxu0 %v39
    %1116 = vmatprep.subr.mxu0 %v43
    %1117 = vmatpush1.msra.mxu0 %v42
    %1118 = vmatprep.subr.mxu0 %v46
    %1119 = vmatpush1.msra.mxu0 %v45
    %1120 = vmatprep.subr.mxu0 %v49
    %1121 = vmatpush1.msra.mxu0 %v48
    %1122 = vmatprep.subr.mxu0 %v52
    %1123 = vmatpush1.msra.mxu0 %v51
    %1124 = vmatprep.subr.mxu0 %v55
    %1125 = vmatpush1.msra.mxu0 %v54
    %1126 = vmatprep.subr.mxu0 %v58
    %1127 = vmatpush1.msra.mxu0 %v57
    %1128 = vmatprep.subr.mxu0 %v61
    %1129 = vmatpush1.msra.mxu0 %v60
    %1130 = vmatprep.subr.mxu0 %v64
    %1131 = vmatpush1.msra.mxu0 %v63
    %1132 = vmatprep.subr.mxu0 %v67
    %1133 = vmatpush1.msra.mxu0 %v66
    %1134 = vmatprep.subr.mxu0 %v70
    %1135 = vmatpush1.msra.mxu0 %v69
    %1136 = vmatprep.subr.mxu0 0.0
    %1137 = vmatpush1.msra.mxu0 0.0
    %1138 = vmatprep.subr.mxu0 0.0
    %1139 = vmatpush1.msra.mxu0 0.0
    %1140 = vmatprep.subr.mxu0 0.0
    %1141 = vmatpush1.msra.mxu0 0.0
    %1142 = vmatprep.subr.mxu0 0.0
    %1143 = vmatpush1.msra.mxu0 0.0
    %1144 = vmatprep.subr.mxu0 0.0
    %1145 = vmatpush1.msra.mxu0 0.0
    %1146 = vmatprep.subr.mxu0 0.0
    %1147 = vmatpush1.msra.mxu0 0.0
    %1148 = vmatprep.subr.mxu0 0.0
    %1149 = vmatpush1.msra.mxu0 0.0
    %1150 = vmatprep.subr.mxu0 0.0
    %1151 = vmatpush1.msra.mxu0 0.0
    %1152 = vmatprep.subr.mxu0 0.0
    %1153 = vmatpush1.msra.mxu0 0.0
    %1154 = vmatprep.subr.mxu0 0.0
    %1155 = vmatpush1.msra.mxu0 0.0
    %1156 = vmatprep.subr.mxu0 0.0
    %1157 = vmatpush1.msra.mxu0 0.0
    %1158 = vmatprep.subr.mxu0 0.0
    %1159 = vmatpush1.msra.mxu0 0.0
    %1160 = vmatprep.subr.mxu0 0.0
    %1161 = vmatpush1.msra.mxu0 0.0
    %1162 = vmatprep.subr.mxu0 0.0
    %1163 = vmatpush1.msra.mxu0 0.0
    %1164 = vmatprep.subr.mxu0 0.0
    %1165 = vmatpush1.msra.mxu0 0.0
    %1166 = vmatprep.subr.mxu0 0.0
    %1167 = vmatpush1.msra.mxu0 0.0
    %1168 = vmatprep.subr.mxu0 0.0
    %1169 = vmatpush1.msra.mxu0 0.0
    %1170 = vmatprep.subr.mxu0 0.0
    %1171 = vmatpush1.msra.mxu0 0.0
    %1172 = vmatprep.subr.mxu0 0.0
    %1173 = vmatpush1.msra.mxu0 0.0
    %1174 = vmatprep.subr.mxu0 0.0
    %1175 = vmatpush1.msra.mxu0 0.0
    %1176 = vmatprep.mubr.f32.mxu0 0.0
    %1177 = vmatmul.mubr.f32.gmra.mrb[0].mxu0 %v1110
    %v1178 = vpop.f32.mrb[0].mxu0
    %v1179 = vadd.f32 0.0, %v1178
    %v1180 = vpop.f32.mrb[0].mxu0
    %v1181 = vadd.f32 0.0, %v1180
    %1182 = vdwg.mxu0
    %1183 = vmatprep.subr.mxu0 0.0
    %1184 = vmatpush1.msra.mxu0 %v38
    %1185 = vmatprep.subr.mxu0 0.0
    %1186 = vmatpush1.msra.mxu0 %v41
    %1187 = vmatprep.subr.mxu0 0.0
    %1188 = vmatpush1.msra.mxu0 %v44
    %1189 = vmatprep.subr.mxu0 0.0
    %1190 = vmatpush1.msra.mxu0 %v47
    %1191 = vmatprep.subr.mxu0 0.0
    %1192 = vmatpush1.msra.mxu0 %v50
    %1193 = vmatprep.subr.mxu0 0.0
    %1194 = vmatpush1.msra.mxu0 %v53
    %1195 = vmatprep.subr.mxu0 0.0
    %1196 = vmatpush1.msra.mxu0 %v56
    %1197 = vmatprep.subr.mxu0 0.0
    %1198 = vmatpush1.msra.mxu0 %v59
    %1199 = vmatprep.subr.mxu0 0.0
    %1200 = vmatpush1.msra.mxu0 %v62
    %1201 = vmatprep.subr.mxu0 0.0
    %1202 = vmatpush1.msra.mxu0 %v65
    %1203 = vmatprep.subr.mxu0 0.0
    %1204 = vmatpush1.msra.mxu0 %v68
    %1205 = vmatprep.subr.mxu0 0.0
    %1206 = vmatpush1.msra.mxu0 %v71
    %1207 = vmatprep.subr.mxu0 0.0
    %1208 = vmatpush1.msra.mxu0 0.0
    %1209 = vmatprep.subr.mxu0 0.0
    %1210 = vmatpush1.msra.mxu0 0.0
    %1211 = vmatprep.subr.mxu0 0.0
    %1212 = vmatpush1.msra.mxu0 0.0
    %1213 = vmatprep.subr.mxu0 0.0
    %1214 = vmatpush1.msra.mxu0 0.0
    %1215 = vmatprep.subr.mxu0 0.0
    %1216 = vmatpush1.msra.mxu0 0.0
    %1217 = vmatprep.subr.mxu0 0.0
    %1218 = vmatpush1.msra.mxu0 0.0
    %1219 = vmatprep.subr.mxu0 0.0
    %1220 = vmatpush1.msra.mxu0 0.0
    %1221 = vmatprep.subr.mxu0 0.0
    %1222 = vmatpush1.msra.mxu0 0.0
    %1223 = vmatprep.subr.mxu0 0.0
    %1224 = vmatpush1.msra.mxu0 0.0
    %1225 = vmatprep.subr.mxu0 0.0
    %1226 = vmatpush1.msra.mxu0 0.0
    %1227 = vmatprep.subr.mxu0 0.0
    %1228 = vmatpush1.msra.mxu0 0.0
    %1229 = vmatprep.subr.mxu0 0.0
    %1230 = vmatpush1.msra.mxu0 0.0
    %1231 = vmatprep.subr.mxu0 0.0
    %1232 = vmatpush1.msra.mxu0 0.0
    %1233 = vmatprep.subr.mxu0 0.0
    %1234 = vmatpush1.msra.mxu0 0.0
    %1235 = vmatprep.subr.mxu0 0.0
    %1236 = vmatpush1.msra.mxu0 0.0
    %1237 = vmatprep.subr.mxu0 0.0
    %1238 = vmatpush1.msra.mxu0 0.0
    %1239 = vmatprep.subr.mxu0 0.0
    %1240 = vmatpush1.msra.mxu0 0.0
    %1241 = vmatprep.subr.mxu0 0.0
    %1242 = vmatpush1.msra.mxu0 0.0
    %1243 = vmatprep.subr.mxu0 0.0
    %1244 = vmatpush1.msra.mxu0 0.0
    %1245 = vmatprep.subr.mxu0 0.0
    %1246 = vmatpush1.msra.mxu0 0.0
    %1247 = vmatprep.mubr.f32.mxu0 0.0
    %1248 = vmatmul.mubr.f32.gmra.mrb[0].mxu0 %v1110
    %v1249 = vpop.f32.mrb[0].mxu0
    %v1250 = vadd.f32 0.0, %v1249
    %v1251 = vpop.f32.mrb[0].mxu0
    %1252 = vdwg.mxu0
    %v1253 = vadd.f32 %v174, %v1179
    %v1254 = vadd.f32 %v176, %v1181
    %v1255 = vadd.f32 %v256, %v1250
    %v1256 = vxor.u32 %v1253, 2147483648
    %v1257 = vxor.u32 %v1254, 2147483648
    %v1258 = vxor.u32 %v1255, 2147483648
    %v1259 = vmul.f32 %v1256, 1.442695
    %v1260 = vpow.pop %v1259
    %v1261 = vmul.f32 %v1257, 1.442695
    %v1262 = vpow.pop %v1261
    %v1263 = vmul.f32 %v1258, 1.442695
    %v1264 = vpow.pop %v1263
    %v1265 = vadd.f32 %v1260, 1.0
    %v1266 = vadd.f32 %v1262, 1.0
    %v1267 = vadd.f32 %v1264, 1.0
    %v1268 = vrcp.pop %v1265
    %v1269 = vmul.f32 1.0, %v1268
    %v1270 = vrcp.pop %v1266
    %v1271 = vmul.f32 1.0, %v1270
    %v1272 = vrcp.pop %v1267
    %v1273 = vmul.f32 1.0, %v1272
    %v1274 = vtanh.pop %v1255
    %v1277 = vrot.slane %v1086, 6
    %v1278 = vrot.slane %v1087, 6
    %v1281 = vmul.f32 %v1269, %v1277
    %v1282 = vmul.f32 %v1271, %v1278
    %1284 = vrot.lane.b32.xlu0 %v1274, 96
    %v1285 = vpop.permute.xlu0 %1284
    %v1287 = vmul.f32 %v1269, %v1285
    %1289 = vrot.lane.b32.xlu0 %v1287, 96
    %v1290 = vpop.permute.xlu0 %1289
    %v1292 = vadd.f32 %v1281, %v1290
    %v1293 = vadd.f32 %v1282, %v1290
    %v1294 = vtanh.pop %v1292
    %v1295 = vtanh.pop %v1293
    %1298 = vrot.lane.b32.xlu0 %v1294, 96
    %v1299 = vpop.permute.xlu0 %1298
    %1300 = vrot.lane.b32.xlu0 %v1295, 96
    %v1301 = vpop.permute.xlu0 %1300
    %v1302 = vsel %vm264, %v1299, %v1301
    %v1305 = vmul.f32 %v1271, %v1302
    %v1306 = vmul.f32 %v1273, %v1301
    %1309 = vrot.lane.b32.xlu0 %v1305, 64
    %v1310 = vpop.permute.xlu0 %1309
    %1311 = vrot.lane.b32.xlu0 %v1306, 64
    %v1312 = vpop.permute.xlu0 %1311
    %v1313 = vsel %vm463, %v1310, %v1312
    %v1314 = vsel %vm264, %v1313, 0
    %1316 = vmatprep.subr.mxu0 %v37
    %1317 = vmatpush1.msra.mxu0 %v36
    %1318 = vmatprep.subr.mxu0 %v40
    %1319 = vmatpush1.msra.mxu0 %v39
    %1320 = vmatprep.subr.mxu0 %v43
    %1321 = vmatpush1.msra.mxu0 %v42
    %1322 = vmatprep.subr.mxu0 %v46
    %1323 = vmatpush1.msra.mxu0 %v45
    %1324 = vmatprep.subr.mxu0 %v49
    %1325 = vmatpush1.msra.mxu0 %v48
    %1326 = vmatprep.subr.mxu0 %v52
    %1327 = vmatpush1.msra.mxu0 %v51
    %1328 = vmatprep.subr.mxu0 %v55
    %1329 = vmatpush1.msra.mxu0 %v54
    %1330 = vmatprep.subr.mxu0 %v58
    %1331 = vmatpush1.msra.mxu0 %v57
    %1332 = vmatprep.subr.mxu0 %v61
    %1333 = vmatpush1.msra.mxu0 %v60
    %1334 = vmatprep.subr.mxu0 %v64
    %1335 = vmatpush1.msra.mxu0 %v63
    %1336 = vmatprep.subr.mxu0 %v67
    %1337 = vmatpush1.msra.mxu0 %v66
    %1338 = vmatprep.subr.mxu0 %v70
    %1339 = vmatpush1.msra.mxu0 %v69
    %1340 = vmatprep.subr.mxu0 0.0
    %1341 = vmatpush1.msra.mxu0 0.0
    %1342 = vmatprep.subr.mxu0 0.0
    %1343 = vmatpush1.msra.mxu0 0.0
    %1344 = vmatprep.subr.mxu0 0.0
    %1345 = vmatpush1.msra.mxu0 0.0
    %1346 = vmatprep.subr.mxu0 0.0
    %1347 = vmatpush1.msra.mxu0 0.0
    %1348 = vmatprep.subr.mxu0 0.0
    %1349 = vmatpush1.msra.mxu0 0.0
    %1350 = vmatprep.subr.mxu0 0.0
    %1351 = vmatpush1.msra.mxu0 0.0
    %1352 = vmatprep.subr.mxu0 0.0
    %1353 = vmatpush1.msra.mxu0 0.0
    %1354 = vmatprep.subr.mxu0 0.0
    %1355 = vmatpush1.msra.mxu0 0.0
    %1356 = vmatprep.subr.mxu0 0.0
    %1357 = vmatpush1.msra.mxu0 0.0
    %1358 = vmatprep.subr.mxu0 0.0
    %1359 = vmatpush1.msra.mxu0 0.0
    %1360 = vmatprep.subr.mxu0 0.0
    %1361 = vmatpush1.msra.mxu0 0.0
    %1362 = vmatprep.subr.mxu0 0.0
    %1363 = vmatpush1.msra.mxu0 0.0
    %1364 = vmatprep.subr.mxu0 0.0
    %1365 = vmatpush1.msra.mxu0 0.0
    %1366 = vmatprep.subr.mxu0 0.0
    %1367 = vmatpush1.msra.mxu0 0.0
    %1368 = vmatprep.subr.mxu0 0.0
    %1369 = vmatpush1.msra.mxu0 0.0
    %1370 = vmatprep.subr.mxu0 0.0
    %1371 = vmatpush1.msra.mxu0 0.0
    %1372 = vmatprep.subr.mxu0 0.0
    %1373 = vmatpush1.msra.mxu0 0.0
    %1374 = vmatprep.subr.mxu0 0.0
    %1375 = vmatpush1.msra.mxu0 0.0
    %1376 = vmatprep.subr.mxu0 0.0
    %1377 = vmatpush1.msra.mxu0 0.0
    %1378 = vmatprep.subr.mxu0 0.0
    %1379 = vmatpush1.msra.mxu0 0.0
    %1380 = vmatprep.mubr.f32.mxu0 0.0
    %1381 = vmatmul.mubr.f32.gmra.mrb[0].mxu0 %v1314
    %v1382 = vpop.f32.mrb[0].mxu0
    %v1383 = vadd.f32 0.0, %v1382
    %v1384 = vpop.f32.mrb[0].mxu0
    %v1385 = vadd.f32 0.0, %v1384
    %1386 = vdwg.mxu0
    %1387 = vmatprep.subr.mxu0 0.0
    %1388 = vmatpush1.msra.mxu0 %v38
    %1389 = vmatprep.subr.mxu0 0.0
    %1390 = vmatpush1.msra.mxu0 %v41
    %1391 = vmatprep.subr.mxu0 0.0
    %1392 = vmatpush1.msra.mxu0 %v44
    %1393 = vmatprep.subr.mxu0 0.0
    %1394 = vmatpush1.msra.mxu0 %v47
    %1395 = vmatprep.subr.mxu0 0.0
    %1396 = vmatpush1.msra.mxu0 %v50
    %1397 = vmatprep.subr.mxu0 0.0
    %1398 = vmatpush1.msra.mxu0 %v53
    %1399 = vmatprep.subr.mxu0 0.0
    %1400 = vmatpush1.msra.mxu0 %v56
    %1401 = vmatprep.subr.mxu0 0.0
    %1402 = vmatpush1.msra.mxu0 %v59
    %1403 = vmatprep.subr.mxu0 0.0
    %1404 = vmatpush1.msra.mxu0 %v62
    %1405 = vmatprep.subr.mxu0 0.0
    %1406 = vmatpush1.msra.mxu0 %v65
    %1407 = vmatprep.subr.mxu0 0.0
    %1408 = vmatpush1.msra.mxu0 %v68
    %1409 = vmatprep.subr.mxu0 0.0
    %1410 = vmatpush1.msra.mxu0 %v71
    %1411 = vmatprep.subr.mxu0 0.0
    %1412 = vmatpush1.msra.mxu0 0.0
    %1413 = vmatprep.subr.mxu0 0.0
    %1414 = vmatpush1.msra.mxu0 0.0
    %1415 = vmatprep.subr.mxu0 0.0
    %1416 = vmatpush1.msra.mxu0 0.0
    %1417 = vmatprep.subr.mxu0 0.0
    %1418 = vmatpush1.msra.mxu0 0.0
    %1419 = vmatprep.subr.mxu0 0.0
    %1420 = vmatpush1.msra.mxu0 0.0
    %1421 = vmatprep.subr.mxu0 0.0
    %1422 = vmatpush1.msra.mxu0 0.0
    %1423 = vmatprep.subr.mxu0 0.0
    %1424 = vmatpush1.msra.mxu0 0.0
    %1425 = vmatprep.subr.mxu0 0.0
    %1426 = vmatpush1.msra.mxu0 0.0
    %1427 = vmatprep.subr.mxu0 0.0
    %1428 = vmatpush1.msra.mxu0 0.0
    %1429 = vmatprep.subr.mxu0 0.0
    %1430 = vmatpush1.msra.mxu0 0.0
    %1431 = vmatprep.subr.mxu0 0.0
    %1432 = vmatpush1.msra.mxu0 0.0
    %1433 = vmatprep.subr.mxu0 0.0
    %1434 = vmatpush1.msra.mxu0 0.0
    %1435 = vmatprep.subr.mxu0 0.0
    %1436 = vmatpush1.msra.mxu0 0.0
    %1437 = vmatprep.subr.mxu0 0.0
    %1438 = vmatpush1.msra.mxu0 0.0
    %1439 = vmatprep.subr.mxu0 0.0
    %1440 = vmatpush1.msra.mxu0 0.0
    %1441 = vmatprep.subr.mxu0 0.0
    %1442 = vmatpush1.msra.mxu0 0.0
    %1443 = vmatprep.subr.mxu0 0.0
    %1444 = vmatpush1.msra.mxu0 0.0
    %1445 = vmatprep.subr.mxu0 0.0
    %1446 = vmatpush1.msra.mxu0 0.0
    %1447 = vmatprep.subr.mxu0 0.0
    %1448 = vmatpush1.msra.mxu0 0.0
    %1449 = vmatprep.subr.mxu0 0.0
    %1450 = vmatpush1.msra.mxu0 0.0
    %1451 = vmatprep.mubr.f32.mxu0 0.0
    %1452 = vmatmul.mubr.f32.gmra.mrb[0].mxu0 %v1314
    %v1453 = vpop.f32.mrb[0].mxu0
    %v1454 = vadd.f32 0.0, %v1453
    %v1455 = vpop.f32.mrb[0].mxu0
    %1456 = vdwg.mxu0
    %v1460 = vrot.slane %v1383, 6
    %v1461 = vrot.slane %v1385, 6
    %v1462 = vrot.slane %v1454, 6
    %v1466 = vadd.f32 %v174, %v1460
    %v1467 = vadd.f32 %v176, %v1461
    %v1468 = vadd.f32 %v256, %v1462
    %v1469 = vxor.u32 %v1466, 2147483648
    %v1470 = vxor.u32 %v1467, 2147483648
    %v1471 = vxor.u32 %v1468, 2147483648
    %v1472 = vmul.f32 %v1469, 1.442695
    %v1473 = vpow.pop %v1472
    %v1474 = vmul.f32 %v1470, 1.442695
    %v1475 = vpow.pop %v1474
    %v1476 = vmul.f32 %v1471, 1.442695
    %v1477 = vpow.pop %v1476
    %v1478 = vadd.f32 %v1473, 1.0
    %v1479 = vadd.f32 %v1475, 1.0
    %v1480 = vadd.f32 %v1477, 1.0
    %v1481 = vrcp.pop %v1478
    %v1482 = vmul.f32 1.0, %v1481
    %v1483 = vrcp.pop %v1479
    %v1484 = vmul.f32 1.0, %v1483
    %v1485 = vrcp.pop %v1480
    %v1486 = vmul.f32 1.0, %v1485
    %v1487 = vtanh.pop %v1468
    %v1490 = vrot.slane %v1292, 6
    %v1491 = vrot.slane %v1293, 6
    %v1494 = vmul.f32 %v1482, %v1490
    %v1495 = vmul.f32 %v1484, %v1491
    %1497 = vrot.lane.b32.xlu0 %v1487, 96
    %v1498 = vpop.permute.xlu0 %1497
    %v1500 = vmul.f32 %v1482, %v1498
    %1502 = vrot.lane.b32.xlu0 %v1500, 96
    %v1503 = vpop.permute.xlu0 %1502
    %v1505 = vadd.f32 %v1494, %v1503
    %v1506 = vadd.f32 %v1495, %v1503
    %v1507 = vtanh.pop %v1505
    %v1508 = vtanh.pop %v1506
    %1511 = vrot.lane.b32.xlu0 %v1507, 96
    %v1512 = vpop.permute.xlu0 %1511
    %1513 = vrot.lane.b32.xlu0 %v1508, 96
    %v1514 = vpop.permute.xlu0 %1513
    %v1515 = vsel %vm264, %v1512, %v1514
    %v1518 = vmul.f32 %v1484, %v1515
    %v1519 = vmul.f32 %v1486, %v1514
    %v1522 = vrot.slane %v1518, 2
    %v1523 = vrot.slane %v1519, 2
    %1524 = vrot.lane.b32.xlu0 %v1522, 64
    %v1525 = vpop.permute.xlu0 %1524
    %1526 = vrot.lane.b32.xlu0 %v1523, 64
    %v1527 = vpop.permute.xlu0 %1526
    %v1528 = vsel %vm463, %v1525, %v1527
    %v1529 = vsel %vm264, %v1528, 0
    %1531 = vmatprep.subr.mxu0 %v37
    %1532 = vmatpush1.msra.mxu0 %v36
    %1533 = vmatprep.subr.mxu0 %v40
    %1534 = vmatpush1.msra.mxu0 %v39
    %1535 = vmatprep.subr.mxu0 %v43
    %1536 = vmatpush1.msra.mxu0 %v42
    %1537 = vmatprep.subr.mxu0 %v46
    %1538 = vmatpush1.msra.mxu0 %v45
    %1539 = vmatprep.subr.mxu0 %v49
    %1540 = vmatpush1.msra.mxu0 %v48
    %1541 = vmatprep.subr.mxu0 %v52
    %1542 = vmatpush1.msra.mxu0 %v51
    %1543 = vmatprep.subr.mxu0 %v55
    %1544 = vmatpush1.msra.mxu0 %v54
    %1545 = vmatprep.subr.mxu0 %v58
    %1546 = vmatpush1.msra.mxu0 %v57
    %1547 = vmatprep.subr.mxu0 %v61
    %1548 = vmatpush1.msra.mxu0 %v60
    %1549 = vmatprep.subr.mxu0 %v64
    %1550 = vmatpush1.msra.mxu0 %v63
    %1551 = vmatprep.subr.mxu0 %v67
    %1552 = vmatpush1.msra.mxu0 %v66
    %1553 = vmatprep.subr.mxu0 %v70
    %1554 = vmatpush1.msra.mxu0 %v69
    %1555 = vmatprep.subr.mxu0 0.0
    %1556 = vmatpush1.msra.mxu0 0.0
    %1557 = vmatprep.subr.mxu0 0.0
    %1558 = vmatpush1.msra.mxu0 0.0
    %1559 = vmatprep.subr.mxu0 0.0
    %1560 = vmatpush1.msra.mxu0 0.0
    %1561 = vmatprep.subr.mxu0 0.0
    %1562 = vmatpush1.msra.mxu0 0.0
    %1563 = vmatprep.subr.mxu0 0.0
    %1564 = vmatpush1.msra.mxu0 0.0
    %1565 = vmatprep.subr.mxu0 0.0
    %1566 = vmatpush1.msra.mxu0 0.0
    %1567 = vmatprep.subr.mxu0 0.0
    %1568 = vmatpush1.msra.mxu0 0.0
    %1569 = vmatprep.subr.mxu0 0.0
    %1570 = vmatpush1.msra.mxu0 0.0
    %1571 = vmatprep.subr.mxu0 0.0
    %1572 = vmatpush1.msra.mxu0 0.0
    %1573 = vmatprep.subr.mxu0 0.0
    %1574 = vmatpush1.msra.mxu0 0.0
    %1575 = vmatprep.subr.mxu0 0.0
    %1576 = vmatpush1.msra.mxu0 0.0
    %1577 = vmatprep.subr.mxu0 0.0
    %1578 = vmatpush1.msra.mxu0 0.0
    %1579 = vmatprep.subr.mxu0 0.0
    %1580 = vmatpush1.msra.mxu0 0.0
    %1581 = vmatprep.subr.mxu0 0.0
    %1582 = vmatpush1.msra.mxu0 0.0
    %1583 = vmatprep.subr.mxu0 0.0
    %1584 = vmatpush1.msra.mxu0 0.0
    %1585 = vmatprep.subr.mxu0 0.0
    %1586 = vmatpush1.msra.mxu0 0.0
    %1587 = vmatprep.subr.mxu0 0.0
    %1588 = vmatpush1.msra.mxu0 0.0
    %1589 = vmatprep.subr.mxu0 0.0
    %1590 = vmatpush1.msra.mxu0 0.0
    %1591 = vmatprep.subr.mxu0 0.0
    %1592 = vmatpush1.msra.mxu0 0.0
    %1593 = vmatprep.subr.mxu0 0.0
    %1594 = vmatpush1.msra.mxu0 0.0
    %1595 = vmatprep.mubr.f32.mxu0 0.0
    %1596 = vmatmul.mubr.f32.gmra.mrb[0].mxu0 %v1529
    %v1597 = vpop.f32.mrb[0].mxu0
    %v1598 = vadd.f32 0.0, %v1597
    %v1599 = vpop.f32.mrb[0].mxu0
    %v1600 = vadd.f32 0.0, %v1599
    %1601 = vdwg.mxu0
    %1602 = vmatprep.subr.mxu0 0.0
    %1603 = vmatpush1.msra.mxu0 %v38
    %1604 = vmatprep.subr.mxu0 0.0
    %1605 = vmatpush1.msra.mxu0 %v41
    %1606 = vmatprep.subr.mxu0 0.0
    %1607 = vmatpush1.msra.mxu0 %v44
    %1608 = vmatprep.subr.mxu0 0.0
    %1609 = vmatpush1.msra.mxu0 %v47
    %1610 = vmatprep.subr.mxu0 0.0
    %1611 = vmatpush1.msra.mxu0 %v50
    %1612 = vmatprep.subr.mxu0 0.0
    %1613 = vmatpush1.msra.mxu0 %v53
    %1614 = vmatprep.subr.mxu0 0.0
    %1615 = vmatpush1.msra.mxu0 %v56
    %1616 = vmatprep.subr.mxu0 0.0
    %1617 = vmatpush1.msra.mxu0 %v59
    %1618 = vmatprep.subr.mxu0 0.0
    %1619 = vmatpush1.msra.mxu0 %v62
    %1620 = vmatprep.subr.mxu0 0.0
    %1621 = vmatpush1.msra.mxu0 %v65
    %1622 = vmatprep.subr.mxu0 0.0
    %1623 = vmatpush1.msra.mxu0 %v68
    %1624 = vmatprep.subr.mxu0 0.0
    %1625 = vmatpush1.msra.mxu0 %v71
    %1626 = vmatprep.subr.mxu0 0.0
    %1627 = vmatpush1.msra.mxu0 0.0
    %1628 = vmatprep.subr.mxu0 0.0
    %1629 = vmatpush1.msra.mxu0 0.0
    %1630 = vmatprep.subr.mxu0 0.0
    %1631 = vmatpush1.msra.mxu0 0.0
    %1632 = vmatprep.subr.mxu0 0.0
    %1633 = vmatpush1.msra.mxu0 0.0
    %1634 = vmatprep.subr.mxu0 0.0
    %1635 = vmatpush1.msra.mxu0 0.0
    %1636 = vmatprep.subr.mxu0 0.0
    %1637 = vmatpush1.msra.mxu0 0.0
    %1638 = vmatprep.subr.mxu0 0.0
    %1639 = vmatpush1.msra.mxu0 0.0
    %1640 = vmatprep.subr.mxu0 0.0
    %1641 = vmatpush1.msra.mxu0 0.0
    %1642 = vmatprep.subr.mxu0 0.0
    %1643 = vmatpush1.msra.mxu0 0.0
    %1644 = vmatprep.subr.mxu0 0.0
    %1645 = vmatpush1.msra.mxu0 0.0
    %1646 = vmatprep.subr.mxu0 0.0
    %1647 = vmatpush1.msra.mxu0 0.0
    %1648 = vmatprep.subr.mxu0 0.0
    %1649 = vmatpush1.msra.mxu0 0.0
    %1650 = vmatprep.subr.mxu0 0.0
    %1651 = vmatpush1.msra.mxu0 0.0
    %1652 = vmatprep.subr.mxu0 0.0
    %1653 = vmatpush1.msra.mxu0 0.0
    %1654 = vmatprep.subr.mxu0 0.0
    %1655 = vmatpush1.msra.mxu0 0.0
    %1656 = vmatprep.subr.mxu0 0.0
    %1657 = vmatpush1.msra.mxu0 0.0
    %1658 = vmatprep.subr.mxu0 0.0
    %1659 = vmatpush1.msra.mxu0 0.0
    %1660 = vmatprep.subr.mxu0 0.0
    %1661 = vmatpush1.msra.mxu0 0.0
    %1662 = vmatprep.subr.mxu0 0.0
    %1663 = vmatpush1.msra.mxu0 0.0
    %1664 = vmatprep.subr.mxu0 0.0
    %1665 = vmatpush1.msra.mxu0 0.0
    %1666 = vmatprep.mubr.f32.mxu0 0.0
    %1667 = vmatmul.mubr.f32.gmra.mrb[0].mxu0 %v1529
    %v1668 = vpop.f32.mrb[0].mxu0
    %v1669 = vadd.f32 0.0, %v1668
    %v1670 = vpop.f32.mrb[0].mxu0
    %1671 = vdwg.mxu0
    %v1675 = vrot.slane %v1598, 4
    %v1676 = vrot.slane %v1600, 4
    %v1677 = vrot.slane %v1669, 4
    %v1681 = vadd.f32 %v174, %v1675
    %v1682 = vadd.f32 %v176, %v1676
    %v1683 = vadd.f32 %v256, %v1677
    %v1684 = vxor.u32 %v1681, 2147483648
    %v1685 = vxor.u32 %v1682, 2147483648
    %v1686 = vxor.u32 %v1683, 2147483648
    %v1687 = vmul.f32 %v1684, 1.442695
    %v1688 = vpow.pop %v1687
    %v1689 = vmul.f32 %v1685, 1.442695
    %v1690 = vpow.pop %v1689
    %v1691 = vmul.f32 %v1686, 1.442695
    %v1692 = vpow.pop %v1691
    %v1693 = vadd.f32 %v1688, 1.0
    %v1694 = vadd.f32 %v1690, 1.0
    %v1695 = vadd.f32 %v1692, 1.0
    %v1696 = vrcp.pop %v1693
    %v1697 = vmul.f32 1.0, %v1696
    %v1698 = vrcp.pop %v1694
    %v1699 = vmul.f32 1.0, %v1698
    %v1700 = vrcp.pop %v1695
    %v1701 = vmul.f32 1.0, %v1700
    %v1702 = vtanh.pop %v1683
    %v1705 = vrot.slane %v1505, 6
    %v1706 = vrot.slane %v1506, 6
    %v1709 = vmul.f32 %v1697, %v1705
    %v1710 = vmul.f32 %v1699, %v1706
    %1712 = vrot.lane.b32.xlu0 %v1702, 96
    %v1713 = vpop.permute.xlu0 %1712
    %v1715 = vmul.f32 %v1697, %v1713
    %1717 = vrot.lane.b32.xlu0 %v1715, 96
    %v1718 = vpop.permute.xlu0 %1717
    %v1720 = vadd.f32 %v1709, %v1718
    %v1721 = vadd.f32 %v1710, %v1718
    %v1722 = vtanh.pop %v1720
    %v1723 = vtanh.pop %v1721
    %1726 = vrot.lane.b32.xlu0 %v1722, 96
    %v1727 = vpop.permute.xlu0 %1726
    %1728 = vrot.lane.b32.xlu0 %v1723, 96
    %v1729 = vpop.permute.xlu0 %1728
    %v1730 = vsel %vm264, %v1727, %v1729
    %v1733 = vmul.f32 %v1699, %v1730
    %v1734 = vmul.f32 %v1701, %v1729
    %v1737 = vrot.slane %v1733, 4
    %v1738 = vrot.slane %v1734, 4
    %1739 = vrot.lane.b32.xlu0 %v1737, 64
    %v1740 = vpop.permute.xlu0 %1739
    %1741 = vrot.lane.b32.xlu0 %v1738, 64
    %v1742 = vpop.permute.xlu0 %1741
    %v1743 = vsel %vm463, %v1740, %v1742
    %v1744 = vsel %vm264, %v1743, 0
    %1746 = vmatprep.subr.mxu0 %v37
    %1747 = vmatpush1.msra.mxu0 %v36
    %1748 = vmatprep.subr.mxu0 %v40
    %1749 = vmatpush1.msra.mxu0 %v39
    %1750 = vmatprep.subr.mxu0 %v43
    %1751 = vmatpush1.msra.mxu0 %v42
    %1752 = vmatprep.subr.mxu0 %v46
    %1753 = vmatpush1.msra.mxu0 %v45
    %1754 = vmatprep.subr.mxu0 %v49
    %1755 = vmatpush1.msra.mxu0 %v48
    %1756 = vmatprep.subr.mxu0 %v52
    %1757 = vmatpush1.msra.mxu0 %v51
    %1758 = vmatprep.subr.mxu0 %v55
    %1759 = vmatpush1.msra.mxu0 %v54
    %1760 = vmatprep.subr.mxu0 %v58
    %1761 = vmatpush1.msra.mxu0 %v57
    %1762 = vmatprep.subr.mxu0 %v61
    %1763 = vmatpush1.msra.mxu0 %v60
    %1764 = vmatprep.subr.mxu0 %v64
    %1765 = vmatpush1.msra.mxu0 %v63
    %1766 = vmatprep.subr.mxu0 %v67
    %1767 = vmatpush1.msra.mxu0 %v66
    %1768 = vmatprep.subr.mxu0 %v70
    %1769 = vmatpush1.msra.mxu0 %v69
    %1770 = vmatprep.subr.mxu0 0.0
    %1771 = vmatpush1.msra.mxu0 0.0
    %1772 = vmatprep.subr.mxu0 0.0
    %1773 = vmatpush1.msra.mxu0 0.0
    %1774 = vmatprep.subr.mxu0 0.0
    %1775 = vmatpush1.msra.mxu0 0.0
    %1776 = vmatprep.subr.mxu0 0.0
    %1777 = vmatpush1.msra.mxu0 0.0
    %1778 = vmatprep.subr.mxu0 0.0
    %1779 = vmatpush1.msra.mxu0 0.0
    %1780 = vmatprep.subr.mxu0 0.0
    %1781 = vmatpush1.msra.mxu0 0.0
    %1782 = vmatprep.subr.mxu0 0.0
    %1783 = vmatpush1.msra.mxu0 0.0
    %1784 = vmatprep.subr.mxu0 0.0
    %1785 = vmatpush1.msra.mxu0 0.0
    %1786 = vmatprep.subr.mxu0 0.0
    %1787 = vmatpush1.msra.mxu0 0.0
    %1788 = vmatprep.subr.mxu0 0.0
    %1789 = vmatpush1.msra.mxu0 0.0
    %1790 = vmatprep.subr.mxu0 0.0
    %1791 = vmatpush1.msra.mxu0 0.0
    %1792 = vmatprep.subr.mxu0 0.0
    %1793 = vmatpush1.msra.mxu0 0.0
    %1794 = vmatprep.subr.mxu0 0.0
    %1795 = vmatpush1.msra.mxu0 0.0
    %1796 = vmatprep.subr.mxu0 0.0
    %1797 = vmatpush1.msra.mxu0 0.0
    %1798 = vmatprep.subr.mxu0 0.0
    %1799 = vmatpush1.msra.mxu0 0.0
    %1800 = vmatprep.subr.mxu0 0.0
    %1801 = vmatpush1.msra.mxu0 0.0
    %1802 = vmatprep.subr.mxu0 0.0
    %1803 = vmatpush1.msra.mxu0 0.0
    %1804 = vmatprep.subr.mxu0 0.0
    %1805 = vmatpush1.msra.mxu0 0.0
    %1806 = vmatprep.subr.mxu0 0.0
    %1807 = vmatpush1.msra.mxu0 0.0
    %1808 = vmatprep.subr.mxu0 0.0
    %1809 = vmatpush1.msra.mxu0 0.0
    %1810 = vmatprep.mubr.f32.mxu0 0.0
    %1811 = vmatmul.mubr.f32.gmra.mrb[0].mxu0 %v1744
    %v1812 = vpop.f32.mrb[0].mxu0
    %v1813 = vadd.f32 0.0, %v1812
    %v1814 = vpop.f32.mrb[0].mxu0
    %v1815 = vadd.f32 0.0, %v1814
    %1816 = vdwg.mxu0
    %1817 = vmatprep.subr.mxu0 0.0
    %1818 = vmatpush1.msra.mxu0 %v38
    %1819 = vmatprep.subr.mxu0 0.0
    %1820 = vmatpush1.msra.mxu0 %v41
    %1821 = vmatprep.subr.mxu0 0.0
    %1822 = vmatpush1.msra.mxu0 %v44
    %1823 = vmatprep.subr.mxu0 0.0
    %1824 = vmatpush1.msra.mxu0 %v47
    %1825 = vmatprep.subr.mxu0 0.0
    %1826 = vmatpush1.msra.mxu0 %v50
    %1827 = vmatprep.subr.mxu0 0.0
    %1828 = vmatpush1.msra.mxu0 %v53
    %1829 = vmatprep.subr.mxu0 0.0
    %1830 = vmatpush1.msra.mxu0 %v56
    %1831 = vmatprep.subr.mxu0 0.0
    %1832 = vmatpush1.msra.mxu0 %v59
    %1833 = vmatprep.subr.mxu0 0.0
    %1834 = vmatpush1.msra.mxu0 %v62
    %1835 = vmatprep.subr.mxu0 0.0
    %1836 = vmatpush1.msra.mxu0 %v65
    %1837 = vmatprep.subr.mxu0 0.0
    %1838 = vmatpush1.msra.mxu0 %v68
    %1839 = vmatprep.subr.mxu0 0.0
    %1840 = vmatpush1.msra.mxu0 %v71
    %1841 = vmatprep.subr.mxu0 0.0
    %1842 = vmatpush1.msra.mxu0 0.0
    %1843 = vmatprep.subr.mxu0 0.0
    %1844 = vmatpush1.msra.mxu0 0.0
    %1845 = vmatprep.subr.mxu0 0.0
    %1846 = vmatpush1.msra.mxu0 0.0
    %1847 = vmatprep.subr.mxu0 0.0
    %1848 = vmatpush1.msra.mxu0 0.0
    %1849 = vmatprep.subr.mxu0 0.0
    %1850 = vmatpush1.msra.mxu0 0.0
    %1851 = vmatprep.subr.mxu0 0.0
    %1852 = vmatpush1.msra.mxu0 0.0
    %1853 = vmatprep.subr.mxu0 0.0
    %1854 = vmatpush1.msra.mxu0 0.0
    %1855 = vmatprep.subr.mxu0 0.0
    %1856 = vmatpush1.msra.mxu0 0.0
    %1857 = vmatprep.subr.mxu0 0.0
    %1858 = vmatpush1.msra.mxu0 0.0
    %1859 = vmatprep.subr.mxu0 0.0
    %1860 = vmatpush1.msra.mxu0 0.0
    %1861 = vmatprep.subr.mxu0 0.0
    %1862 = vmatpush1.msra.mxu0 0.0
    %1863 = vmatprep.subr.mxu0 0.0
    %1864 = vmatpush1.msra.mxu0 0.0
    %1865 = vmatprep.subr.mxu0 0.0
    %1866 = vmatpush1.msra.mxu0 0.0
    %1867 = vmatprep.subr.mxu0 0.0
    %1868 = vmatpush1.msra.mxu0 0.0
    %1869 = vmatprep.subr.mxu0 0.0
    %1870 = vmatpush1.msra.mxu0 0.0
    %1871 = vmatprep.subr.mxu0 0.0
    %1872 = vmatpush1.msra.mxu0 0.0
    %1873 = vmatprep.subr.mxu0 0.0
    %1874 = vmatpush1.msra.mxu0 0.0
    %1875 = vmatprep.subr.mxu0 0.0
    %1876 = vmatpush1.msra.mxu0 0.0
    %1877 = vmatprep.subr.mxu0 0.0
    %1878 = vmatpush1.msra.mxu0 0.0
    %1879 = vmatprep.subr.mxu0 0.0
    %1880 = vmatpush1.msra.mxu0 0.0
    %1881 = vmatprep.mubr.f32.mxu0 0.0
    %1882 = vmatmul.mubr.f32.gmra.mrb[0].mxu0 %v1744
    %v1883 = vpop.f32.mrb[0].mxu0
    %v1884 = vadd.f32 0.0, %v1883
    %v1885 = vpop.f32.mrb[0].mxu0
    %1886 = vdwg.mxu0
    %v1890 = vrot.slane %v1813, 2
    %v1891 = vrot.slane %v1815, 2
    %v1892 = vrot.slane %v1884, 2
    %v1896 = vadd.f32 %v174, %v1890
    %v1897 = vadd.f32 %v176, %v1891
    %v1898 = vadd.f32 %v256, %v1892
    %v1899 = vxor.u32 %v1896, 2147483648
    %v1900 = vxor.u32 %v1897, 2147483648
    %v1901 = vxor.u32 %v1898, 2147483648
    %v1902 = vmul.f32 %v1899, 1.442695
    %v1903 = vpow.pop %v1902
    %v1904 = vmul.f32 %v1900, 1.442695
    %v1905 = vpow.pop %v1904
    %v1906 = vmul.f32 %v1901, 1.442695
    %v1907 = vpow.pop %v1906
    %v1908 = vadd.f32 %v1903, 1.0
    %v1909 = vadd.f32 %v1905, 1.0
    %v1910 = vadd.f32 %v1907, 1.0
    %v1911 = vrcp.pop %v1908
    %v1912 = vmul.f32 1.0, %v1911
    %v1913 = vrcp.pop %v1909
    %v1914 = vmul.f32 1.0, %v1913
    %v1915 = vrcp.pop %v1910
    %v1916 = vmul.f32 1.0, %v1915
    %v1917 = vtanh.pop %v1898
    %v1920 = vrot.slane %v1720, 6
    %v1921 = vrot.slane %v1721, 6
    %v1924 = vmul.f32 %v1912, %v1920
    %v1925 = vmul.f32 %v1914, %v1921
    %1927 = vrot.lane.b32.xlu0 %v1917, 96
    %v1928 = vpop.permute.xlu0 %1927
    %v1930 = vmul.f32 %v1912, %v1928
    %1932 = vrot.lane.b32.xlu0 %v1930, 96
    %v1933 = vpop.permute.xlu0 %1932
    %v1935 = vadd.f32 %v1924, %v1933
    %v1936 = vadd.f32 %v1925, %v1933
    %v1937 = vtanh.pop %v1935
    %v1938 = vtanh.pop %v1936
    %1941 = vrot.lane.b32.xlu0 %v1937, 96
    %v1942 = vpop.permute.xlu0 %1941
    %1943 = vrot.lane.b32.xlu0 %v1938, 96
    %v1944 = vpop.permute.xlu0 %1943
    %v1945 = vsel %vm264, %v1942, %v1944
    %v1948 = vmul.f32 %v1914, %v1945
    %v1949 = vmul.f32 %v1916, %v1944
    %v1952 = vrot.slane %v1948, 6
    %v1953 = vrot.slane %v1949, 6
    %1954 = vrot.lane.b32.xlu0 %v1952, 64
    %v1955 = vpop.permute.xlu0 %1954
    %1956 = vrot.lane.b32.xlu0 %v1953, 64
    %v1957 = vpop.permute.xlu0 %1956
    %v1958 = vsel %vm463, %v1955, %v1957
    %v1959 = vsel %vm264, %v1958, 0
    %1961 = vmatprep.subr.mxu0 %v37
    %1962 = vmatpush1.msra.mxu0 %v36
    %1963 = vmatprep.subr.mxu0 %v40
    %1964 = vmatpush1.msra.mxu0 %v39
    %1965 = vmatprep.subr.mxu0 %v43
    %1966 = vmatpush1.msra.mxu0 %v42
    %1967 = vmatprep.subr.mxu0 %v46
    %1968 = vmatpush1.msra.mxu0 %v45
    %1969 = vmatprep.subr.mxu0 %v49
    %1970 = vmatpush1.msra.mxu0 %v48
    %1971 = vmatprep.subr.mxu0 %v52
    %1972 = vmatpush1.msra.mxu0 %v51
    %1973 = vmatprep.subr.mxu0 %v55
    %1974 = vmatpush1.msra.mxu0 %v54
    %1975 = vmatprep.subr.mxu0 %v58
    %1976 = vmatpush1.msra.mxu0 %v57
    %1977 = vmatprep.subr.mxu0 %v61
    %1978 = vmatpush1.msra.mxu0 %v60
    %1979 = vmatprep.subr.mxu0 %v64
    %1980 = vmatpush1.msra.mxu0 %v63
    %1981 = vmatprep.subr.mxu0 %v67
    %1982 = vmatpush1.msra.mxu0 %v66
    %1983 = vmatprep.subr.mxu0 %v70
    %1984 = vmatpush1.msra.mxu0 %v69
    %1985 = vmatprep.subr.mxu0 0.0
    %1986 = vmatpush1.msra.mxu0 0.0
    %1987 = vmatprep.subr.mxu0 0.0
    %1988 = vmatpush1.msra.mxu0 0.0
    %1989 = vmatprep.subr.mxu0 0.0
    %1990 = vmatpush1.msra.mxu0 0.0
    %1991 = vmatprep.subr.mxu0 0.0
    %1992 = vmatpush1.msra.mxu0 0.0
    %1993 = vmatprep.subr.mxu0 0.0
    %1994 = vmatpush1.msra.mxu0 0.0
    %1995 = vmatprep.subr.mxu0 0.0
    %1996 = vmatpush1.msra.mxu0 0.0
    %1997 = vmatprep.subr.mxu0 0.0
    %1998 = vmatpush1.msra.mxu0 0.0
    %1999 = vmatprep.subr.mxu0 0.0
    %2000 = vmatpush1.msra.mxu0 0.0
    %2001 = vmatprep.subr.mxu0 0.0
    %2002 = vmatpush1.msra.mxu0 0.0
    %2003 = vmatprep.subr.mxu0 0.0
    %2004 = vmatpush1.msra.mxu0 0.0
    %2005 = vmatprep.subr.mxu0 0.0
    %2006 = vmatpush1.msra.mxu0 0.0
    %2007 = vmatprep.subr.mxu0 0.0
    %2008 = vmatpush1.msra.mxu0 0.0
    %2009 = vmatprep.subr.mxu0 0.0
    %2010 = vmatpush1.msra.mxu0 0.0
    %2011 = vmatprep.subr.mxu0 0.0
    %2012 = vmatpush1.msra.mxu0 0.0
    %2013 = vmatprep.subr.mxu0 0.0
    %2014 = vmatpush1.msra.mxu0 0.0
    %2015 = vmatprep.subr.mxu0 0.0
    %2016 = vmatpush1.msra.mxu0 0.0
    %2017 = vmatprep.subr.mxu0 0.0
    %2018 = vmatpush1.msra.mxu0 0.0
    %2019 = vmatprep.subr.mxu0 0.0
    %2020 = vmatpush1.msra.mxu0 0.0
    %2021 = vmatprep.subr.mxu0 0.0
    %2022 = vmatpush1.msra.mxu0 0.0
    %2023 = vmatprep.subr.mxu0 0.0
    %2024 = vmatpush1.msra.mxu0 0.0
    %2025 = vmatprep.mubr.f32.mxu0 0.0
    %2026 = vmatmul.mubr.f32.gmra.mrb[0].mxu0 %v1959
    %v2027 = vpop.f32.mrb[0].mxu0
    %v2028 = vadd.f32 0.0, %v2027
    %v2029 = vpop.f32.mrb[0].mxu0
    %v2030 = vadd.f32 0.0, %v2029
    %2031 = vdwg.mxu0
    %2032 = vmatprep.subr.mxu0 0.0
    %2033 = vmatpush1.msra.mxu0 %v38
    %2034 = vmatprep.subr.mxu0 0.0
    %2035 = vmatpush1.msra.mxu0 %v41
    %2036 = vmatprep.subr.mxu0 0.0
    %2037 = vmatpush1.msra.mxu0 %v44
    %2038 = vmatprep.subr.mxu0 0.0
    %2039 = vmatpush1.msra.mxu0 %v47
    %2040 = vmatprep.subr.mxu0 0.0
    %2041 = vmatpush1.msra.mxu0 %v50
    %2042 = vmatprep.subr.mxu0 0.0
    %2043 = vmatpush1.msra.mxu0 %v53
    %2044 = vmatprep.subr.mxu0 0.0
    %2045 = vmatpush1.msra.mxu0 %v56
    %2046 = vmatprep.subr.mxu0 0.0
    %2047 = vmatpush1.msra.mxu0 %v59
    %2048 = vmatprep.subr.mxu0 0.0
    %2049 = vmatpush1.msra.mxu0 %v62
    %2050 = vmatprep.subr.mxu0 0.0
    %2051 = vmatpush1.msra.mxu0 %v65
    %2052 = vmatprep.subr.mxu0 0.0
    %2053 = vmatpush1.msra.mxu0 %v68
    %2054 = vmatprep.subr.mxu0 0.0
    %2055 = vmatpush1.msra.mxu0 %v71
    %2056 = vmatprep.subr.mxu0 0.0
    %2057 = vmatpush1.msra.mxu0 0.0
    %2058 = vmatprep.subr.mxu0 0.0
    %2059 = vmatpush1.msra.mxu0 0.0
    %2060 = vmatprep.subr.mxu0 0.0
    %2061 = vmatpush1.msra.mxu0 0.0
    %2062 = vmatprep.subr.mxu0 0.0
    %2063 = vmatpush1.msra.mxu0 0.0
    %2064 = vmatprep.subr.mxu0 0.0
    %2065 = vmatpush1.msra.mxu0 0.0
    %2066 = vmatprep.subr.mxu0 0.0
    %2067 = vmatpush1.msra.mxu0 0.0
    %2068 = vmatprep.subr.mxu0 0.0
    %2069 = vmatpush1.msra.mxu0 0.0
    %2070 = vmatprep.subr.mxu0 0.0
    %2071 = vmatpush1.msra.mxu0 0.0
    %2072 = vmatprep.subr.mxu0 0.0
    %2073 = vmatpush1.msra.mxu0 0.0
    %2074 = vmatprep.subr.mxu0 0.0
    %2075 = vmatpush1.msra.mxu0 0.0
    %2076 = vmatprep.subr.mxu0 0.0
    %2077 = vmatpush1.msra.mxu0 0.0
    %2078 = vmatprep.subr.mxu0 0.0
    %2079 = vmatpush1.msra.mxu0 0.0
    %2080 = vmatprep.subr.mxu0 0.0
    %2081 = vmatpush1.msra.mxu0 0.0
    %2082 = vmatprep.subr.mxu0 0.0
    %2083 = vmatpush1.msra.mxu0 0.0
    %2084 = vmatprep.subr.mxu0 0.0
    %2085 = vmatpush1.msra.mxu0 0.0
    %2086 = vmatprep.subr.mxu0 0.0
    %2087 = vmatpush1.msra.mxu0 0.0
    %2088 = vmatprep.subr.mxu0 0.0
    %2089 = vmatpush1.msra.mxu0 0.0
    %2090 = vmatprep.subr.mxu0 0.0
    %2091 = vmatpush1.msra.mxu0 0.0
    %2092 = vmatprep.subr.mxu0 0.0
    %2093 = vmatpush1.msra.mxu0 0.0
    %2094 = vmatprep.subr.mxu0 0.0
    %2095 = vmatpush1.msra.mxu0 0.0
    %2096 = vmatprep.mubr.f32.mxu0 0.0
    %2097 = vmatmul.mubr.f32.gmra.mrb[0].mxu0 %v1959
    %v2098 = vpop.f32.mrb[0].mxu0
    %v2099 = vadd.f32 0.0, %v2098
    %v2100 = vpop.f32.mrb[0].mxu0
    %2101 = vdwg.mxu0
    %v2102 = vadd.f32 %v180, %v2028
    %v2103 = vadd.f32 %v182, %v2030
    %v2104 = vadd.f32 %v261, %v2099
    %v2105 = vxor.u32 %v2102, 2147483648
    %v2106 = vxor.u32 %v2103, 2147483648
    %v2107 = vxor.u32 %v2104, 2147483648
    %v2108 = vmul.f32 %v2105, 1.442695
    %v2109 = vpow.pop %v2108
    %v2110 = vmul.f32 %v2106, 1.442695
    %v2111 = vpow.pop %v2110
    %v2112 = vmul.f32 %v2107, 1.442695
    %v2113 = vpow.pop %v2112
    %v2114 = vadd.f32 %v2109, 1.0
    %v2115 = vadd.f32 %v2111, 1.0
    %v2116 = vadd.f32 %v2113, 1.0
    %v2117 = vrcp.pop %v2114
    %v2118 = vmul.f32 1.0, %v2117
    %v2119 = vrcp.pop %v2115
    %v2120 = vmul.f32 1.0, %v2119
    %v2121 = vrcp.pop %v2116
    %v2122 = vmul.f32 1.0, %v2121
    %v2123 = vtanh.pop %v2104
    %v2126 = vrot.slane %v1935, 6
    %v2127 = vrot.slane %v1936, 6
    %v2130 = vmul.f32 %v2118, %v2126
    %v2131 = vmul.f32 %v2120, %v2127
    %2133 = vrot.lane.b32.xlu0 %v2123, 96
    %v2134 = vpop.permute.xlu0 %2133
    %v2136 = vmul.f32 %v2118, %v2134
    %2138 = vrot.lane.b32.xlu0 %v2136, 96
    %v2139 = vpop.permute.xlu0 %2138
    %v2141 = vadd.f32 %v2130, %v2139
    %v2142 = vadd.f32 %v2131, %v2139
    %v2143 = vtanh.pop %v2141
    %v2144 = vtanh.pop %v2142
    %2147 = vrot.lane.b32.xlu0 %v2143, 96
    %v2148 = vpop.permute.xlu0 %2147
    %2149 = vrot.lane.b32.xlu0 %v2144, 96
    %v2150 = vpop.permute.xlu0 %2149
    %v2151 = vsel %vm264, %v2148, %v2150
    %v2154 = vmul.f32 %v2120, %v2151
    %v2155 = vmul.f32 %v2122, %v2150
    %2158 = vrot.lane.b32.xlu0 %v2154, 64
    %v2159 = vpop.permute.xlu0 %2158
    %2160 = vrot.lane.b32.xlu0 %v2155, 64
    %v2161 = vpop.permute.xlu0 %2160
    %v2162 = vsel %vm463, %v2159, %v2161
    %v2163 = vsel %vm264, %v2162, 0
    %2165 = vmatprep.subr.mxu0 %v37
    %2166 = vmatpush1.msra.mxu0 %v36
    %2167 = vmatprep.subr.mxu0 %v40
    %2168 = vmatpush1.msra.mxu0 %v39
    %2169 = vmatprep.subr.mxu0 %v43
    %2170 = vmatpush1.msra.mxu0 %v42
    %2171 = vmatprep.subr.mxu0 %v46
    %2172 = vmatpush1.msra.mxu0 %v45
    %2173 = vmatprep.subr.mxu0 %v49
    %2174 = vmatpush1.msra.mxu0 %v48
    %2175 = vmatprep.subr.mxu0 %v52
    %2176 = vmatpush1.msra.mxu0 %v51
    %2177 = vmatprep.subr.mxu0 %v55
    %2178 = vmatpush1.msra.mxu0 %v54
    %2179 = vmatprep.subr.mxu0 %v58
    %2180 = vmatpush1.msra.mxu0 %v57
    %2181 = vmatprep.subr.mxu0 %v61
    %2182 = vmatpush1.msra.mxu0 %v60
    %2183 = vmatprep.subr.mxu0 %v64
    %2184 = vmatpush1.msra.mxu0 %v63
    %2185 = vmatprep.subr.mxu0 %v67
    %2186 = vmatpush1.msra.mxu0 %v66
    %2187 = vmatprep.subr.mxu0 %v70
    %2188 = vmatpush1.msra.mxu0 %v69
    %2189 = vmatprep.subr.mxu0 0.0
    %2190 = vmatpush1.msra.mxu0 0.0
    %2191 = vmatprep.subr.mxu0 0.0
    %2192 = vmatpush1.msra.mxu0 0.0
    %2193 = vmatprep.subr.mxu0 0.0
    %2194 = vmatpush1.msra.mxu0 0.0
    %2195 = vmatprep.subr.mxu0 0.0
    %2196 = vmatpush1.msra.mxu0 0.0
    %2197 = vmatprep.subr.mxu0 0.0
    %2198 = vmatpush1.msra.mxu0 0.0
    %2199 = vmatprep.subr.mxu0 0.0
    %2200 = vmatpush1.msra.mxu0 0.0
    %2201 = vmatprep.subr.mxu0 0.0
    %2202 = vmatpush1.msra.mxu0 0.0
    %2203 = vmatprep.subr.mxu0 0.0
    %2204 = vmatpush1.msra.mxu0 0.0
    %2205 = vmatprep.subr.mxu0 0.0
    %2206 = vmatpush1.msra.mxu0 0.0
    %2207 = vmatprep.subr.mxu0 0.0
    %2208 = vmatpush1.msra.mxu0 0.0
    %2209 = vmatprep.subr.mxu0 0.0
    %2210 = vmatpush1.msra.mxu0 0.0
    %2211 = vmatprep.subr.mxu0 0.0
    %2212 = vmatpush1.msra.mxu0 0.0
    %2213 = vmatprep.subr.mxu0 0.0
    %2214 = vmatpush1.msra.mxu0 0.0
    %2215 = vmatprep.subr.mxu0 0.0
    %2216 = vmatpush1.msra.mxu0 0.0
    %2217 = vmatprep.subr.mxu0 0.0
    %2218 = vmatpush1.msra.mxu0 0.0
    %2219 = vmatprep.subr.mxu0 0.0
    %2220 = vmatpush1.msra.mxu0 0.0
    %2221 = vmatprep.subr.mxu0 0.0
    %2222 = vmatpush1.msra.mxu0 0.0
    %2223 = vmatprep.subr.mxu0 0.0
    %2224 = vmatpush1.msra.mxu0 0.0
    %2225 = vmatprep.subr.mxu0 0.0
    %2226 = vmatpush1.msra.mxu0 0.0
    %2227 = vmatprep.subr.mxu0 0.0
    %2228 = vmatpush1.msra.mxu0 0.0
    %2229 = vmatprep.mubr.f32.mxu0 0.0
    %2230 = vmatmul.mubr.f32.gmra.mrb[0].mxu0 %v2163
    %v2231 = vpop.f32.mrb[0].mxu0
    %v2232 = vadd.f32 0.0, %v2231
    %v2233 = vpop.f32.mrb[0].mxu0
    %v2234 = vadd.f32 0.0, %v2233
    %2235 = vdwg.mxu0
    %2236 = vmatprep.subr.mxu0 0.0
    %2237 = vmatpush1.msra.mxu0 %v38
    %2238 = vmatprep.subr.mxu0 0.0
    %2239 = vmatpush1.msra.mxu0 %v41
    %2240 = vmatprep.subr.mxu0 0.0
    %2241 = vmatpush1.msra.mxu0 %v44
    %2242 = vmatprep.subr.mxu0 0.0
    %2243 = vmatpush1.msra.mxu0 %v47
    %2244 = vmatprep.subr.mxu0 0.0
    %2245 = vmatpush1.msra.mxu0 %v50
    %2246 = vmatprep.subr.mxu0 0.0
    %2247 = vmatpush1.msra.mxu0 %v53
    %2248 = vmatprep.subr.mxu0 0.0
    %2249 = vmatpush1.msra.mxu0 %v56
    %2250 = vmatprep.subr.mxu0 0.0
    %2251 = vmatpush1.msra.mxu0 %v59
    %2252 = vmatprep.subr.mxu0 0.0
    %2253 = vmatpush1.msra.mxu0 %v62
    %2254 = vmatprep.subr.mxu0 0.0
    %2255 = vmatpush1.msra.mxu0 %v65
    %2256 = vmatprep.subr.mxu0 0.0
    %2257 = vmatpush1.msra.mxu0 %v68
    %2258 = vmatprep.subr.mxu0 0.0
    %2259 = vmatpush1.msra.mxu0 %v71
    %2260 = vmatprep.subr.mxu0 0.0
    %2261 = vmatpush1.msra.mxu0 0.0
    %2262 = vmatprep.subr.mxu0 0.0
    %2263 = vmatpush1.msra.mxu0 0.0
    %2264 = vmatprep.subr.mxu0 0.0
    %2265 = vmatpush1.msra.mxu0 0.0
    %2266 = vmatprep.subr.mxu0 0.0
    %2267 = vmatpush1.msra.mxu0 0.0
    %2268 = vmatprep.subr.mxu0 0.0
    %2269 = vmatpush1.msra.mxu0 0.0
    %2270 = vmatprep.subr.mxu0 0.0
    %2271 = vmatpush1.msra.mxu0 0.0
    %2272 = vmatprep.subr.mxu0 0.0
    %2273 = vmatpush1.msra.mxu0 0.0
    %2274 = vmatprep.subr.mxu0 0.0
    %2275 = vmatpush1.msra.mxu0 0.0
    %2276 = vmatprep.subr.mxu0 0.0
    %2277 = vmatpush1.msra.mxu0 0.0
    %2278 = vmatprep.subr.mxu0 0.0
    %2279 = vmatpush1.msra.mxu0 0.0
    %2280 = vmatprep.subr.mxu0 0.0
    %2281 = vmatpush1.msra.mxu0 0.0
    %2282 = vmatprep.subr.mxu0 0.0
    %2283 = vmatpush1.msra.mxu0 0.0
    %2284 = vmatprep.subr.mxu0 0.0
    %2285 = vmatpush1.msra.mxu0 0.0
    %2286 = vmatprep.subr.mxu0 0.0
    %2287 = vmatpush1.msra.mxu0 0.0
    %2288 = vmatprep.subr.mxu0 0.0
    %2289 = vmatpush1.msra.mxu0 0.0
    %2290 = vmatprep.subr.mxu0 0.0
    %2291 = vmatpush1.msra.mxu0 0.0
    %2292 = vmatprep.subr.mxu0 0.0
    %2293 = vmatpush1.msra.mxu0 0.0
    %2294 = vmatprep.subr.mxu0 0.0
    %2295 = vmatpush1.msra.mxu0 0.0
    %2296 = vmatprep.subr.mxu0 0.0
    %2297 = vmatpush1.msra.mxu0 0.0
    %2298 = vmatprep.subr.mxu0 0.0
    %2299 = vmatpush1.msra.mxu0 0.0
    %2300 = vmatprep.mubr.f32.mxu0 0.0
    %2301 = vmatmul.mubr.f32.gmra.mrb[0].mxu0 %v2163
    %v2302 = vpop.f32.mrb[0].mxu0
    %v2303 = vadd.f32 0.0, %v2302
    %v2304 = vpop.f32.mrb[0].mxu0
    %2305 = vdwg.mxu0
    %v2309 = vrot.slane %v2232, 6
    %v2310 = vrot.slane %v2234, 6
    %v2311 = vrot.slane %v2303, 6
    %v2315 = vadd.f32 %v180, %v2309
    %v2316 = vadd.f32 %v182, %v2310
    %v2317 = vadd.f32 %v261, %v2311
    %v2318 = vxor.u32 %v2315, 2147483648
    %v2319 = vxor.u32 %v2316, 2147483648
    %v2320 = vxor.u32 %v2317, 2147483648
    %v2321 = vmul.f32 %v2318, 1.442695
    %v2322 = vpow.pop %v2321
    %v2323 = vmul.f32 %v2319, 1.442695
    %v2324 = vpow.pop %v2323
    %v2325 = vmul.f32 %v2320, 1.442695
    %v2326 = vpow.pop %v2325
    %v2327 = vadd.f32 %v2322, 1.0
    %v2328 = vadd.f32 %v2324, 1.0
    %v2329 = vadd.f32 %v2326, 1.0
    %v2330 = vrcp.pop %v2327
    %v2331 = vmul.f32 1.0, %v2330
    %v2332 = vrcp.pop %v2328
    %v2333 = vmul.f32 1.0, %v2332
    %v2334 = vrcp.pop %v2329
    %v2335 = vmul.f32 1.0, %v2334
    %v2336 = vtanh.pop %v2317
    %v2339 = vrot.slane %v2141, 6
    %v2340 = vrot.slane %v2142, 6
    %v2343 = vmul.f32 %v2331, %v2339
    %v2344 = vmul.f32 %v2333, %v2340
    %2346 = vrot.lane.b32.xlu0 %v2336, 96
    %v2347 = vpop.permute.xlu0 %2346
    %v2349 = vmul.f32 %v2331, %v2347
    %2351 = vrot.lane.b32.xlu0 %v2349, 96
    %v2352 = vpop.permute.xlu0 %2351
    %v2354 = vadd.f32 %v2343, %v2352
    %v2355 = vadd.f32 %v2344, %v2352
    %v2356 = vtanh.pop %v2354
    %v2357 = vtanh.pop %v2355
    %2360 = vrot.lane.b32.xlu0 %v2356, 96
    %v2361 = vpop.permute.xlu0 %2360
    %2362 = vrot.lane.b32.xlu0 %v2357, 96
    %v2363 = vpop.permute.xlu0 %2362
    %v2364 = vsel %vm264, %v2361, %v2363
    %v2367 = vmul.f32 %v2333, %v2364
    %v2368 = vmul.f32 %v2335, %v2363
    %v2371 = vrot.slane %v2367, 2
    %v2372 = vrot.slane %v2368, 2
    %2373 = vrot.lane.b32.xlu0 %v2371, 64
    %v2374 = vpop.permute.xlu0 %2373
    %2375 = vrot.lane.b32.xlu0 %v2372, 64
    %v2376 = vpop.permute.xlu0 %2375
    %v2377 = vsel %vm463, %v2374, %v2376
    %v2378 = vsel %vm264, %v2377, 0
    %2380 = vmatprep.subr.mxu0 %v37
    %2381 = vmatpush1.msra.mxu0 %v36
    %2382 = vmatprep.subr.mxu0 %v40
    %2383 = vmatpush1.msra.mxu0 %v39
    %2384 = vmatprep.subr.mxu0 %v43
    %2385 = vmatpush1.msra.mxu0 %v42
    %2386 = vmatprep.subr.mxu0 %v46
    %2387 = vmatpush1.msra.mxu0 %v45
    %2388 = vmatprep.subr.mxu0 %v49
    %2389 = vmatpush1.msra.mxu0 %v48
    %2390 = vmatprep.subr.mxu0 %v52
    %2391 = vmatpush1.msra.mxu0 %v51
    %2392 = vmatprep.subr.mxu0 %v55
    %2393 = vmatpush1.msra.mxu0 %v54
    %2394 = vmatprep.subr.mxu0 %v58
    %2395 = vmatpush1.msra.mxu0 %v57
    %2396 = vmatprep.subr.mxu0 %v61
    %2397 = vmatpush1.msra.mxu0 %v60
    %2398 = vmatprep.subr.mxu0 %v64
    %2399 = vmatpush1.msra.mxu0 %v63
    %2400 = vmatprep.subr.mxu0 %v67
    %2401 = vmatpush1.msra.mxu0 %v66
    %2402 = vmatprep.subr.mxu0 %v70
    %2403 = vmatpush1.msra.mxu0 %v69
    %2404 = vmatprep.subr.mxu0 0.0
    %2405 = vmatpush1.msra.mxu0 0.0
    %2406 = vmatprep.subr.mxu0 0.0
    %2407 = vmatpush1.msra.mxu0 0.0
    %2408 = vmatprep.subr.mxu0 0.0
    %2409 = vmatpush1.msra.mxu0 0.0
    %2410 = vmatprep.subr.mxu0 0.0
    %2411 = vmatpush1.msra.mxu0 0.0
    %2412 = vmatprep.subr.mxu0 0.0
    %2413 = vmatpush1.msra.mxu0 0.0
    %2414 = vmatprep.subr.mxu0 0.0
    %2415 = vmatpush1.msra.mxu0 0.0
    %2416 = vmatprep.subr.mxu0 0.0
    %2417 = vmatpush1.msra.mxu0 0.0
    %2418 = vmatprep.subr.mxu0 0.0
    %2419 = vmatpush1.msra.mxu0 0.0
    %2420 = vmatprep.subr.mxu0 0.0
    %2421 = vmatpush1.msra.mxu0 0.0
    %2422 = vmatprep.subr.mxu0 0.0
    %2423 = vmatpush1.msra.mxu0 0.0
    %2424 = vmatprep.subr.mxu0 0.0
    %2425 = vmatpush1.msra.mxu0 0.0
    %2426 = vmatprep.subr.mxu0 0.0
    %2427 = vmatpush1.msra.mxu0 0.0
    %2428 = vmatprep.subr.mxu0 0.0
    %2429 = vmatpush1.msra.mxu0 0.0
    %2430 = vmatprep.subr.mxu0 0.0
    %2431 = vmatpush1.msra.mxu0 0.0
    %2432 = vmatprep.subr.mxu0 0.0
    %2433 = vmatpush1.msra.mxu0 0.0
    %2434 = vmatprep.subr.mxu0 0.0
    %2435 = vmatpush1.msra.mxu0 0.0
    %2436 = vmatprep.subr.mxu0 0.0
    %2437 = vmatpush1.msra.mxu0 0.0
    %2438 = vmatprep.subr.mxu0 0.0
    %2439 = vmatpush1.msra.mxu0 0.0
    %2440 = vmatprep.subr.mxu0 0.0
    %2441 = vmatpush1.msra.mxu0 0.0
    %2442 = vmatprep.subr.mxu0 0.0
    %2443 = vmatpush1.msra.mxu0 0.0
    %2444 = vmatprep.mubr.f32.mxu0 0.0
    %2445 = vmatmul.mubr.f32.gmra.mrb[0].mxu0 %v2378
    %v2446 = vpop.f32.mrb[0].mxu0
    %v2447 = vadd.f32 0.0, %v2446
    %v2448 = vpop.f32.mrb[0].mxu0
    %v2449 = vadd.f32 0.0, %v2448
    %2450 = vdwg.mxu0
    %2451 = vmatprep.subr.mxu0 0.0
    %2452 = vmatpush1.msra.mxu0 %v38
    %2453 = vmatprep.subr.mxu0 0.0
    %2454 = vmatpush1.msra.mxu0 %v41
    %2455 = vmatprep.subr.mxu0 0.0
    %2456 = vmatpush1.msra.mxu0 %v44
    %2457 = vmatprep.subr.mxu0 0.0
    %2458 = vmatpush1.msra.mxu0 %v47
    %2459 = vmatprep.subr.mxu0 0.0
    %2460 = vmatpush1.msra.mxu0 %v50
    %2461 = vmatprep.subr.mxu0 0.0
    %2462 = vmatpush1.msra.mxu0 %v53
    %2463 = vmatprep.subr.mxu0 0.0
    %2464 = vmatpush1.msra.mxu0 %v56
    %2465 = vmatprep.subr.mxu0 0.0
    %2466 = vmatpush1.msra.mxu0 %v59
    %2467 = vmatprep.subr.mxu0 0.0
    %2468 = vmatpush1.msra.mxu0 %v62
    %2469 = vmatprep.subr.mxu0 0.0
    %2470 = vmatpush1.msra.mxu0 %v65
    %2471 = vmatprep.subr.mxu0 0.0
    %2472 = vmatpush1.msra.mxu0 %v68
    %2473 = vmatprep.subr.mxu0 0.0
    %2474 = vmatpush1.msra.mxu0 %v71
    %2475 = vmatprep.subr.mxu0 0.0
    %2476 = vmatpush1.msra.mxu0 0.0
    %2477 = vmatprep.subr.mxu0 0.0
    %2478 = vmatpush1.msra.mxu0 0.0
    %2479 = vmatprep.subr.mxu0 0.0
    %2480 = vmatpush1.msra.mxu0 0.0
    %2481 = vmatprep.subr.mxu0 0.0
    %2482 = vmatpush1.msra.mxu0 0.0
    %2483 = vmatprep.subr.mxu0 0.0
    %2484 = vmatpush1.msra.mxu0 0.0
    %2485 = vmatprep.subr.mxu0 0.0
    %2486 = vmatpush1.msra.mxu0 0.0
    %2487 = vmatprep.subr.mxu0 0.0
    %2488 = vmatpush1.msra.mxu0 0.0
    %2489 = vmatprep.subr.mxu0 0.0
    %2490 = vmatpush1.msra.mxu0 0.0
    %2491 = vmatprep.subr.mxu0 0.0
    %2492 = vmatpush1.msra.mxu0 0.0
    %2493 = vmatprep.subr.mxu0 0.0
    %2494 = vmatpush1.msra.mxu0 0.0
    %2495 = vmatprep.subr.mxu0 0.0
    %2496 = vmatpush1.msra.mxu0 0.0
    %2497 = vmatprep.subr.mxu0 0.0
    %2498 = vmatpush1.msra.mxu0 0.0
    %2499 = vmatprep.subr.mxu0 0.0
    %2500 = vmatpush1.msra.mxu0 0.0
    %2501 = vmatprep.subr.mxu0 0.0
    %2502 = vmatpush1.msra.mxu0 0.0
    %2503 = vmatprep.subr.mxu0 0.0
    %2504 = vmatpush1.msra.mxu0 0.0
    %2505 = vmatprep.subr.mxu0 0.0
    %2506 = vmatpush1.msra.mxu0 0.0
    %2507 = vmatprep.subr.mxu0 0.0
    %2508 = vmatpush1.msra.mxu0 0.0
    %2509 = vmatprep.subr.mxu0 0.0
    %2510 = vmatpush1.msra.mxu0 0.0
    %2511 = vmatprep.subr.mxu0 0.0
    %2512 = vmatpush1.msra.mxu0 0.0
    %2513 = vmatprep.subr.mxu0 0.0
    %2514 = vmatpush1.msra.mxu0 0.0
    %2515 = vmatprep.mubr.f32.mxu0 0.0
    %2516 = vmatmul.mubr.f32.gmra.mrb[0].mxu0 %v2378
    %v2517 = vpop.f32.mrb[0].mxu0
    %v2518 = vadd.f32 0.0, %v2517
    %v2519 = vpop.f32.mrb[0].mxu0
    %2520 = vdwg.mxu0
    %v2524 = vrot.slane %v2447, 4
    %v2525 = vrot.slane %v2449, 4
    %v2526 = vrot.slane %v2518, 4
    %v2530 = vadd.f32 %v180, %v2524
    %v2531 = vadd.f32 %v182, %v2525
    %v2532 = vadd.f32 %v261, %v2526
    %v2533 = vxor.u32 %v2530, 2147483648
    %v2534 = vxor.u32 %v2531, 2147483648
    %v2535 = vxor.u32 %v2532, 2147483648
    %v2536 = vmul.f32 %v2533, 1.442695
    %v2537 = vpow.pop %v2536
    %v2538 = vmul.f32 %v2534, 1.442695
    %v2539 = vpow.pop %v2538
    %v2540 = vmul.f32 %v2535, 1.442695
    %v2541 = vpow.pop %v2540
    %v2542 = vadd.f32 %v2537, 1.0
    %v2543 = vadd.f32 %v2539, 1.0
    %v2544 = vadd.f32 %v2541, 1.0
    %v2545 = vrcp.pop %v2542
    %v2546 = vmul.f32 1.0, %v2545
    %v2547 = vrcp.pop %v2543
    %v2548 = vmul.f32 1.0, %v2547
    %v2549 = vrcp.pop %v2544
    %v2550 = vmul.f32 1.0, %v2549
    %v2551 = vtanh.pop %v2532
    %v2554 = vrot.slane %v2354, 6
    %v2555 = vrot.slane %v2355, 6
    %v2558 = vmul.f32 %v2546, %v2554
    %v2559 = vmul.f32 %v2548, %v2555
    %2561 = vrot.lane.b32.xlu0 %v2551, 96
    %v2562 = vpop.permute.xlu0 %2561
    %v2564 = vmul.f32 %v2546, %v2562
    %2566 = vrot.lane.b32.xlu0 %v2564, 96
    %v2567 = vpop.permute.xlu0 %2566
    %v2569 = vadd.f32 %v2558, %v2567
    %v2570 = vadd.f32 %v2559, %v2567
    %v2571 = vtanh.pop %v2569
    %v2572 = vtanh.pop %v2570
    %2575 = vrot.lane.b32.xlu0 %v2571, 96
    %v2576 = vpop.permute.xlu0 %2575
    %2577 = vrot.lane.b32.xlu0 %v2572, 96
    %v2578 = vpop.permute.xlu0 %2577
    %v2579 = vsel %vm264, %v2576, %v2578
    %v2582 = vmul.f32 %v2548, %v2579
    %v2583 = vmul.f32 %v2550, %v2578
    %v2586 = vrot.slane %v2582, 4
    %v2587 = vrot.slane %v2583, 4
    %2588 = vrot.lane.b32.xlu0 %v2586, 64
    %v2589 = vpop.permute.xlu0 %2588
    %2590 = vrot.lane.b32.xlu0 %v2587, 64
    %v2591 = vpop.permute.xlu0 %2590
    %v2592 = vsel %vm463, %v2589, %v2591
    %v2593 = vsel %vm264, %v2592, 0
    %2595 = vmatprep.subr.mxu0 %v37
    %2596 = vmatpush1.msra.mxu0 %v36
    %2597 = vmatprep.subr.mxu0 %v40
    %2598 = vmatpush1.msra.mxu0 %v39
    %2599 = vmatprep.subr.mxu0 %v43
    %2600 = vmatpush1.msra.mxu0 %v42
    %2601 = vmatprep.subr.mxu0 %v46
    %2602 = vmatpush1.msra.mxu0 %v45
    %2603 = vmatprep.subr.mxu0 %v49
    %2604 = vmatpush1.msra.mxu0 %v48
    %2605 = vmatprep.subr.mxu0 %v52
    %2606 = vmatpush1.msra.mxu0 %v51
    %2607 = vmatprep.subr.mxu0 %v55
    %2608 = vmatpush1.msra.mxu0 %v54
    %2609 = vmatprep.subr.mxu0 %v58
    %2610 = vmatpush1.msra.mxu0 %v57
    %2611 = vmatprep.subr.mxu0 %v61
    %2612 = vmatpush1.msra.mxu0 %v60
    %2613 = vmatprep.subr.mxu0 %v64
    %2614 = vmatpush1.msra.mxu0 %v63
    %2615 = vmatprep.subr.mxu0 %v67
    %2616 = vmatpush1.msra.mxu0 %v66
    %2617 = vmatprep.subr.mxu0 %v70
    %2618 = vmatpush1.msra.mxu0 %v69
    %2619 = vmatprep.subr.mxu0 0.0
    %2620 = vmatpush1.msra.mxu0 0.0
    %2621 = vmatprep.subr.mxu0 0.0
    %2622 = vmatpush1.msra.mxu0 0.0
    %2623 = vmatprep.subr.mxu0 0.0
    %2624 = vmatpush1.msra.mxu0 0.0
    %2625 = vmatprep.subr.mxu0 0.0
    %2626 = vmatpush1.msra.mxu0 0.0
    %2627 = vmatprep.subr.mxu0 0.0
    %2628 = vmatpush1.msra.mxu0 0.0
    %2629 = vmatprep.subr.mxu0 0.0
    %2630 = vmatpush1.msra.mxu0 0.0
    %2631 = vmatprep.subr.mxu0 0.0
    %2632 = vmatpush1.msra.mxu0 0.0
    %2633 = vmatprep.subr.mxu0 0.0
    %2634 = vmatpush1.msra.mxu0 0.0
    %2635 = vmatprep.subr.mxu0 0.0
    %2636 = vmatpush1.msra.mxu0 0.0
    %2637 = vmatprep.subr.mxu0 0.0
    %2638 = vmatpush1.msra.mxu0 0.0
    %2639 = vmatprep.subr.mxu0 0.0
    %2640 = vmatpush1.msra.mxu0 0.0
    %2641 = vmatprep.subr.mxu0 0.0
    %2642 = vmatpush1.msra.mxu0 0.0
    %2643 = vmatprep.subr.mxu0 0.0
    %2644 = vmatpush1.msra.mxu0 0.0
    %2645 = vmatprep.subr.mxu0 0.0
    %2646 = vmatpush1.msra.mxu0 0.0
    %2647 = vmatprep.subr.mxu0 0.0
    %2648 = vmatpush1.msra.mxu0 0.0
    %2649 = vmatprep.subr.mxu0 0.0
    %2650 = vmatpush1.msra.mxu0 0.0
    %2651 = vmatprep.subr.mxu0 0.0
    %2652 = vmatpush1.msra.mxu0 0.0
    %2653 = vmatprep.subr.mxu0 0.0
    %2654 = vmatpush1.msra.mxu0 0.0
    %2655 = vmatprep.subr.mxu0 0.0
    %2656 = vmatpush1.msra.mxu0 0.0
    %2657 = vmatprep.subr.mxu0 0.0
    %2658 = vmatpush1.msra.mxu0 0.0
    %2659 = vmatprep.mubr.f32.mxu0 0.0
    %2660 = vmatmul.mubr.f32.gmra.mrb[0].mxu0 %v2593
    %v2661 = vpop.f32.mrb[0].mxu0
    %v2662 = vadd.f32 0.0, %v2661
    %v2663 = vpop.f32.mrb[0].mxu0
    %v2664 = vadd.f32 0.0, %v2663
    %2665 = vdwg.mxu0
    %2666 = vmatprep.subr.mxu0 0.0
    %2667 = vmatpush1.msra.mxu0 %v38
    %2668 = vmatprep.subr.mxu0 0.0
    %2669 = vmatpush1.msra.mxu0 %v41
    %2670 = vmatprep.subr.mxu0 0.0
    %2671 = vmatpush1.msra.mxu0 %v44
    %2672 = vmatprep.subr.mxu0 0.0
    %2673 = vmatpush1.msra.mxu0 %v47
    %2674 = vmatprep.subr.mxu0 0.0
    %2675 = vmatpush1.msra.mxu0 %v50
    %2676 = vmatprep.subr.mxu0 0.0
    %2677 = vmatpush1.msra.mxu0 %v53
    %2678 = vmatprep.subr.mxu0 0.0
    %2679 = vmatpush1.msra.mxu0 %v56
    %2680 = vmatprep.subr.mxu0 0.0
    %2681 = vmatpush1.msra.mxu0 %v59
    %2682 = vmatprep.subr.mxu0 0.0
    %2683 = vmatpush1.msra.mxu0 %v62
    %2684 = vmatprep.subr.mxu0 0.0
    %2685 = vmatpush1.msra.mxu0 %v65
    %2686 = vmatprep.subr.mxu0 0.0
    %2687 = vmatpush1.msra.mxu0 %v68
    %2688 = vmatprep.subr.mxu0 0.0
    %2689 = vmatpush1.msra.mxu0 %v71
    %2690 = vmatprep.subr.mxu0 0.0
    %2691 = vmatpush1.msra.mxu0 0.0
    %2692 = vmatprep.subr.mxu0 0.0
    %2693 = vmatpush1.msra.mxu0 0.0
    %2694 = vmatprep.subr.mxu0 0.0
    %2695 = vmatpush1.msra.mxu0 0.0
    %2696 = vmatprep.subr.mxu0 0.0
    %2697 = vmatpush1.msra.mxu0 0.0
    %2698 = vmatprep.subr.mxu0 0.0
    %2699 = vmatpush1.msra.mxu0 0.0
    %2700 = vmatprep.subr.mxu0 0.0
    %2701 = vmatpush1.msra.mxu0 0.0
    %2702 = vmatprep.subr.mxu0 0.0
    %2703 = vmatpush1.msra.mxu0 0.0
    %2704 = vmatprep.subr.mxu0 0.0
    %2705 = vmatpush1.msra.mxu0 0.0
    %2706 = vmatprep.subr.mxu0 0.0
    %2707 = vmatpush1.msra.mxu0 0.0
    %2708 = vmatprep.subr.mxu0 0.0
    %2709 = vmatpush1.msra.mxu0 0.0
    %2710 = vmatprep.subr.mxu0 0.0
    %2711 = vmatpush1.msra.mxu0 0.0
    %2712 = vmatprep.subr.mxu0 0.0
    %2713 = vmatpush1.msra.mxu0 0.0
    %2714 = vmatprep.subr.mxu0 0.0
    %2715 = vmatpush1.msra.mxu0 0.0
    %2716 = vmatprep.subr.mxu0 0.0
    %2717 = vmatpush1.msra.mxu0 0.0
    %2718 = vmatprep.subr.mxu0 0.0
    %2719 = vmatpush1.msra.mxu0 0.0
    %2720 = vmatprep.subr.mxu0 0.0
    %2721 = vmatpush1.msra.mxu0 0.0
    %2722 = vmatprep.subr.mxu0 0.0
    %2723 = vmatpush1.msra.mxu0 0.0
    %2724 = vmatprep.subr.mxu0 0.0
    %2725 = vmatpush1.msra.mxu0 0.0
    %2726 = vmatprep.subr.mxu0 0.0
    %2727 = vmatpush1.msra.mxu0 0.0
    %2728 = vmatprep.subr.mxu0 0.0
    %2729 = vmatpush1.msra.mxu0 0.0
    %2730 = vmatprep.mubr.f32.mxu0 0.0
    %2731 = vmatmul.mubr.f32.gmra.mrb[0].mxu0 %v2593
    %v2732 = vpop.f32.mrb[0].mxu0
    %v2733 = vadd.f32 0.0, %v2732
    %v2734 = vpop.f32.mrb[0].mxu0
    %2735 = vdwg.mxu0
    %v2739 = vrot.slane %v2662, 2
    %v2740 = vrot.slane %v2664, 2
    %v2741 = vrot.slane %v2733, 2
    %v2745 = vadd.f32 %v180, %v2739
    %v2746 = vadd.f32 %v182, %v2740
    %v2747 = vadd.f32 %v261, %v2741
    %v2748 = vxor.u32 %v2745, 2147483648
    %v2749 = vxor.u32 %v2746, 2147483648
    %v2750 = vxor.u32 %v2747, 2147483648
    %v2751 = vmul.f32 %v2748, 1.442695
    %v2752 = vpow.pop %v2751
    %v2753 = vmul.f32 %v2749, 1.442695
    %v2754 = vpow.pop %v2753
    %v2755 = vmul.f32 %v2750, 1.442695
    %v2756 = vpow.pop %v2755
    %v2757 = vadd.f32 %v2752, 1.0
    %v2758 = vadd.f32 %v2754, 1.0
    %v2759 = vadd.f32 %v2756, 1.0
    %v2760 = vrcp.pop %v2757
    %v2761 = vmul.f32 1.0, %v2760
    %v2762 = vrcp.pop %v2758
    %v2763 = vmul.f32 1.0, %v2762
    %v2764 = vrcp.pop %v2759
    %v2765 = vmul.f32 1.0, %v2764
    %v2766 = vtanh.pop %v2747
    %v2769 = vrot.slane %v2569, 6
    %v2770 = vrot.slane %v2570, 6
    %v2773 = vmul.f32 %v2761, %v2769
    %v2774 = vmul.f32 %v2763, %v2770
    %2776 = vrot.lane.b32.xlu0 %v2766, 96
    %v2777 = vpop.permute.xlu0 %2776
    %v2779 = vmul.f32 %v2761, %v2777
    %2781 = vrot.lane.b32.xlu0 %v2779, 96
    %v2782 = vpop.permute.xlu0 %2781
    %v2784 = vadd.f32 %v2773, %v2782
    %v2785 = vadd.f32 %v2774, %v2782
    %v2786 = vtanh.pop %v2784
    %v2787 = vtanh.pop %v2785
    %2790 = vrot.lane.b32.xlu0 %v2786, 96
    %v2791 = vpop.permute.xlu0 %2790
    %2792 = vrot.lane.b32.xlu0 %v2787, 96
    %v2793 = vpop.permute.xlu0 %2792
    %v2794 = vsel %vm264, %v2791, %v2793
    %v2797 = vmul.f32 %v2763, %v2794
    %v2798 = vmul.f32 %v2765, %v2793
    %v2799 = vmax.f32 %v2797, 0.0
    %v2800 = vmax.f32 %v2798, 0.0
    %v2801 = vld [vmem:[#allocation2] sm:$0xff]
    %v2802 = vld [vmem:[#allocation2 + $0x8] sm:$0xff]
    %v2803 = vld [vmem:[#allocation2 + $0x10] sm:$0xff]
    %v2804 = vld [vmem:[#allocation2 + $0x18] sm:$0xff]
    %v2805 = vld [vmem:[#allocation2 + $0x20] sm:$0xff]
    %v2806 = vld [vmem:[#allocation2 + $0x28] sm:$0xff]
    %v2807 = vld [vmem:[#allocation2 + $0x30] sm:$0xff]
    %v2808 = vld [vmem:[#allocation2 + $0x38] sm:$0xff]
    %v2809 = vld [vmem:[#allocation2 + $0x40] sm:$0xff]
    %v2810 = vld [vmem:[#allocation2 + $0x48] sm:$0xff]
    %v2811 = vld [vmem:[#allocation2 + $0x50] sm:$0xff]
    %v2812 = vld [vmem:[#allocation2 + $0x58] sm:$0xff]
    %v2813 = vld [vmem:[#allocation2 + $0x60] sm:$0x1]
    %v2814 = vlaneseq
    %v2815 = vshrl.u32 %v2814, 7
    %v2816 = vsub.s32 0, %v2815
    %v2817 = vrot.slane %v2813, %v2816
    %v2820 = vrot.slane %v2799, 6
    %v2821 = vrot.slane %v2800, 6
    %2822 = vrot.lane.b32.xlu0 %v2820, 64
    %v2823 = vpop.permute.xlu0 %2822
    %2824 = vrot.lane.b32.xlu0 %v2821, 64
    %v2825 = vpop.permute.xlu0 %2824
    %v2826 = vsel %vm463, %v2823, %v2825
    %v2827 = vsel %vm264, %v2826, 0
    %2829 = vmatprep.subr.mxu0 0.0
    %2830 = vmatpush1.msra.mxu0 %v2801
    %2831 = vmatprep.subr.mxu0 0.0
    %2832 = vmatpush1.msra.mxu0 %v2802
    %2833 = vmatprep.subr.mxu0 0.0
    %2834 = vmatpush1.msra.mxu0 %v2803
    %2835 = vmatprep.subr.mxu0 0.0
    %2836 = vmatpush1.msra.mxu0 %v2804
    %2837 = vmatprep.subr.mxu0 0.0
    %2838 = vmatpush1.msra.mxu0 %v2805
    %2839 = vmatprep.subr.mxu0 0.0
    %2840 = vmatpush1.msra.mxu0 %v2806
    %2841 = vmatprep.subr.mxu0 0.0
    %2842 = vmatpush1.msra.mxu0 %v2807
    %2843 = vmatprep.subr.mxu0 0.0
    %2844 = vmatpush1.msra.mxu0 %v2808
    %2845 = vmatprep.subr.mxu0 0.0
    %2846 = vmatpush1.msra.mxu0 %v2809
    %2847 = vmatprep.subr.mxu0 0.0
    %2848 = vmatpush1.msra.mxu0 %v2810
    %2849 = vmatprep.subr.mxu0 0.0
    %2850 = vmatpush1.msra.mxu0 %v2811
    %2851 = vmatprep.subr.mxu0 0.0
    %2852 = vmatpush1.msra.mxu0 %v2812
    %2853 = vmatprep.subr.mxu0 0.0
    %2854 = vmatpush1.msra.mxu0 0.0
    %2855 = vmatprep.subr.mxu0 0.0
    %2856 = vmatpush1.msra.mxu0 0.0
    %2857 = vmatprep.subr.mxu0 0.0
    %2858 = vmatpush1.msra.mxu0 0.0
    %2859 = vmatprep.subr.mxu0 0.0
    %2860 = vmatpush1.msra.mxu0 0.0
    %2861 = vmatprep.subr.mxu0 0.0
    %2862 = vmatpush1.msra.mxu0 0.0
    %2863 = vmatprep.subr.mxu0 0.0
    %2864 = vmatpush1.msra.mxu0 0.0
    %2865 = vmatprep.subr.mxu0 0.0
    %2866 = vmatpush1.msra.mxu0 0.0
    %2867 = vmatprep.subr.mxu0 0.0
    %2868 = vmatpush1.msra.mxu0 0.0
    %2869 = vmatprep.subr.mxu0 0.0
    %2870 = vmatpush1.msra.mxu0 0.0
    %2871 = vmatprep.subr.mxu0 0.0
    %2872 = vmatpush1.msra.mxu0 0.0
    %2873 = vmatprep.subr.mxu0 0.0
    %2874 = vmatpush1.msra.mxu0 0.0
    %2875 = vmatprep.subr.mxu0 0.0
    %2876 = vmatpush1.msra.mxu0 0.0
    %2877 = vmatprep.subr.mxu0 0.0
    %2878 = vmatpush1.msra.mxu0 0.0
    %2879 = vmatprep.subr.mxu0 0.0
    %2880 = vmatpush1.msra.mxu0 0.0
    %2881 = vmatprep.subr.mxu0 0.0
    %2882 = vmatpush1.msra.mxu0 0.0
    %2883 = vmatprep.subr.mxu0 0.0
    %2884 = vmatpush1.msra.mxu0 0.0
    %2885 = vmatprep.subr.mxu0 0.0
    %2886 = vmatpush1.msra.mxu0 0.0
    %2887 = vmatprep.subr.mxu0 0.0
    %2888 = vmatpush1.msra.mxu0 0.0
    %2889 = vmatprep.subr.mxu0 0.0
    %2890 = vmatpush1.msra.mxu0 0.0
    %2891 = vmatprep.subr.mxu0 0.0
    %2892 = vmatpush1.msra.mxu0 0.0
    %2893 = vmatprep.mubr.f32.mxu0 0.0
    %2894 = vmatmul.mubr.f32.gmra.mrb[0].mxu0 %v2827
    %v2895 = vpop.f32.mrb[0].mxu0
    %v2896 = vadd.f32 %v2817, %v2895
    %v2897 = vpop.f32.mrb[0].mxu0
    %2898 = vdwg.mxu0
    %v2899 = vmax.f32 %v2896, 0.0
    %v2900 = vld [vmem:[#allocation2 + $0x68] sm:$0xff]
    %v2901 = vld [vmem:[#allocation2 + $0x70] sm:$0xff]
    %v2902 = vld [vmem:[#allocation2 + $0x78] sm:$0x1]
    %v2903 = vld [vmem:[#allocation2 + $0x80] sm:$0xff]
    %v2904 = vld [vmem:[#allocation2 + $0x88] sm:$0xff]
    %v2905 = vld [vmem:[#allocation2 + $0x90] sm:$0xff]
    %v2906 = vld [vmem:[#allocation2 + $0x98] sm:$0xff]
    %v2907 = vlaneseq
    %v2908 = vshrl.u32 %v2907, 7
    %v2909 = vsub.s32 0, %v2908
    %v2910 = vrot.slane %v2902, %v2909
    %2912 = vrot.lane.b32.xlu0 %v2899, 64
    %v2913 = vpop.permute.xlu0 %2912
    %v2914 = vsel %vm91, %v2913, 0
    %2916 = vmatprep.subr.mxu0 0.0
    %2917 = vmatpush1.msra.mxu0 %v2900
    %2918 = vmatprep.subr.mxu0 0.0
    %2919 = vmatpush1.msra.mxu0 %v2901
    %2920 = vmatprep.subr.mxu0 0.0
    %2921 = vmatpush1.msra.mxu0 0.0
    %2922 = vmatprep.subr.mxu0 0.0
    %2923 = vmatpush1.msra.mxu0 0.0
    %2924 = vmatprep.subr.mxu0 0.0
    %2925 = vmatpush1.msra.mxu0 0.0
    %2926 = vmatprep.subr.mxu0 0.0
    %2927 = vmatpush1.msra.mxu0 0.0
    %2928 = vmatprep.subr.mxu0 0.0
    %2929 = vmatpush1.msra.mxu0 0.0
    %2930 = vmatprep.subr.mxu0 0.0
    %2931 = vmatpush1.msra.mxu0 0.0
    %2932 = vmatprep.subr.mxu0 0.0
    %2933 = vmatpush1.msra.mxu0 0.0
    %2934 = vmatprep.subr.mxu0 0.0
    %2935 = vmatpush1.msra.mxu0 0.0
    %2936 = vmatprep.subr.mxu0 0.0
    %2937 = vmatpush1.msra.mxu0 0.0
    %2938 = vmatprep.subr.mxu0 0.0
    %2939 = vmatpush1.msra.mxu0 0.0
    %2940 = vmatprep.subr.mxu0 0.0
    %2941 = vmatpush1.msra.mxu0 0.0
    %2942 = vmatprep.subr.mxu0 0.0
    %2943 = vmatpush1.msra.mxu0 0.0
    %2944 = vmatprep.subr.mxu0 0.0
    %2945 = vmatpush1.msra.mxu0 0.0
    %2946 = vmatprep.subr.mxu0 0.0
    %2947 = vmatpush1.msra.mxu0 0.0
    %2948 = vmatprep.subr.mxu0 0.0
    %2949 = vmatpush1.msra.mxu0 0.0
    %2950 = vmatprep.subr.mxu0 0.0
    %2951 = vmatpush1.msra.mxu0 0.0
    %2952 = vmatprep.subr.mxu0 0.0
    %2953 = vmatpush1.msra.mxu0 0.0
    %2954 = vmatprep.subr.mxu0 0.0
    %2955 = vmatpush1.msra.mxu0 0.0
    %2956 = vmatprep.subr.mxu0 0.0
    %2957 = vmatpush1.msra.mxu0 0.0
    %2958 = vmatprep.subr.mxu0 0.0
    %2959 = vmatpush1.msra.mxu0 0.0
    %2960 = vmatprep.subr.mxu0 0.0
    %2961 = vmatpush1.msra.mxu0 0.0
    %2962 = vmatprep.subr.mxu0 0.0
    %2963 = vmatpush1.msra.mxu0 0.0
    %2964 = vmatprep.subr.mxu0 0.0
    %2965 = vmatpush1.msra.mxu0 0.0
    %2966 = vmatprep.subr.mxu0 0.0
    %2967 = vmatpush1.msra.mxu0 0.0
    %2968 = vmatprep.subr.mxu0 0.0
    %2969 = vmatpush1.msra.mxu0 0.0
    %2970 = vmatprep.subr.mxu0 0.0
    %2971 = vmatpush1.msra.mxu0 0.0
    %2972 = vmatprep.subr.mxu0 0.0
    %2973 = vmatpush1.msra.mxu0 0.0
    %2974 = vmatprep.subr.mxu0 0.0
    %2975 = vmatpush1.msra.mxu0 0.0
    %2976 = vmatprep.subr.mxu0 0.0
    %2977 = vmatpush1.msra.mxu0 0.0
    %2978 = vmatprep.subr.mxu0 0.0
    %2979 = vmatpush1.msra.mxu0 0.0
    %2980 = vmatprep.mubr.f32.mxu0 0.0
    %2981 = vmatmul.mubr.f32.gmra.mrb[0].mxu0 %v2914
    %v2982 = vpop.f32.mrb[0].mxu0
    %v2983 = vadd.f32 %v2910, %v2982
    %v2984 = vpop.f32.mrb[0].mxu0
    %2985 = vdwg.mxu0
    %vm2986 = vcmask 261120
    %v2987 = vsel %vm2986, 0.0, 0
    %2989 = vmatprep.subr.mxu0 0.0
    %2990 = vmatpush1.msra.mxu0 %v2903
    %2991 = vmatprep.subr.mxu0 0.0
    %2992 = vmatpush1.msra.mxu0 %v2904
    %2993 = vmatprep.subr.mxu0 0.0
    %2994 = vmatpush1.msra.mxu0 %v2905
    %2995 = vmatprep.subr.mxu0 0.0
    %2996 = vmatpush1.msra.mxu0 %v2906
    %2997 = vmatprep.subr.mxu0 0.0
    %2998 = vmatpush1.msra.mxu0 0.0
    %2999 = vmatprep.subr.mxu0 0.0
    %3000 = vmatpush1.msra.mxu0 0.0
    %3001 = vmatprep.subr.mxu0 0.0
    %3002 = vmatpush1.msra.mxu0 0.0
    %3003 = vmatprep.subr.mxu0 0.0
    %3004 = vmatpush1.msra.mxu0 0.0
    %3005 = vmatprep.subr.mxu0 0.0
    %3006 = vmatpush1.msra.mxu0 0.0
    %3007 = vmatprep.subr.mxu0 0.0
    %3008 = vmatpush1.msra.mxu0 0.0
    %3009 = vmatprep.subr.mxu0 0.0
    %3010 = vmatpush1.msra.mxu0 0.0
    %3011 = vmatprep.subr.mxu0 0.0
    %3012 = vmatpush1.msra.mxu0 0.0
    %3013 = vmatprep.subr.mxu0 0.0
    %3014 = vmatpush1.msra.mxu0 0.0
    %3015 = vmatprep.subr.mxu0 0.0
    %3016 = vmatpush1.msra.mxu0 0.0
    %3017 = vmatprep.subr.mxu0 0.0
    %3018 = vmatpush1.msra.mxu0 0.0
    %3019 = vmatprep.subr.mxu0 0.0
    %3020 = vmatpush1.msra.mxu0 0.0
    %3021 = vmatprep.subr.mxu0 0.0
    %3022 = vmatpush1.msra.mxu0 0.0
    %3023 = vmatprep.subr.mxu0 0.0
    %3024 = vmatpush1.msra.mxu0 0.0
    %3025 = vmatprep.subr.mxu0 0.0
    %3026 = vmatpush1.msra.mxu0 0.0
    %3027 = vmatprep.subr.mxu0 0.0
    %3028 = vmatpush1.msra.mxu0 0.0
    %3029 = vmatprep.subr.mxu0 0.0
    %3030 = vmatpush1.msra.mxu0 0.0
    %3031 = vmatprep.subr.mxu0 0.0
    %3032 = vmatpush1.msra.mxu0 0.0
    %3033 = vmatprep.subr.mxu0 0.0
    %3034 = vmatpush1.msra.mxu0 0.0
    %3035 = vmatprep.subr.mxu0 0.0
    %3036 = vmatpush1.msra.mxu0 0.0
    %3037 = vmatprep.subr.mxu0 0.0
    %3038 = vmatpush1.msra.mxu0 0.0
    %3039 = vmatprep.subr.mxu0 0.0
    %3040 = vmatpush1.msra.mxu0 0.0
    %3041 = vmatprep.subr.mxu0 0.0
    %3042 = vmatpush1.msra.mxu0 0.0
    %3043 = vmatprep.subr.mxu0 0.0
    %3044 = vmatpush1.msra.mxu0 0.0
    %3045 = vmatprep.subr.mxu0 0.0
    %3046 = vmatpush1.msra.mxu0 0.0
    %3047 = vmatprep.subr.mxu0 0.0
    %3048 = vmatpush1.msra.mxu0 0.0
    %3049 = vmatprep.subr.mxu0 0.0
    %3050 = vmatpush1.msra.mxu0 0.0
    %3051 = vmatprep.subr.mxu0 0.0
    %3052 = vmatpush1.msra.mxu0 0.0
    %3053 = vmatprep.mubr.f32.mxu0 0.0
    %3054 = vmatmul.mubr.f32.gmra.mrb[0].mxu0 %v2987
    %v3055 = vpop.f32.mrb[0].mxu0
    %v3056 = vadd.f32 0.0, %v3055
    %v3057 = vpop.f32.mrb[0].mxu0
    %3058 = vdwg.mxu0
    %v3059 = vadd.f32 %v2983, %v3056
    %v3060 = vxor.u32 %v3059, 2147483648
    %v3061 = vmul.f32 %v3060, 1.442695
    %v3062 = vpow.pop %v3061
    %v3063 = vadd.f32 %v3062, 1.0
    %v3064 = vrcp.pop %v3063
    %v3065 = vmul.f32 1.0, %v3064
    %v3066 = vtanh.pop %v3059
    %v3067 = vmul.f32 %v3065, 0.0
    %3069 = vrot.lane.b32.xlu0 %v3066, 32
    %v3070 = vpop.permute.xlu0 %3069
    %v3072 = vmul.f32 %v3065, %v3070
    %3074 = vrot.lane.b32.xlu0 %v3072, 32
    %v3075 = vpop.permute.xlu0 %3074
    %v3077 = vadd.f32 %v3067, %v3075
    %v3078 = vtanh.pop %v3077
    %3080 = vrot.lane.b32.xlu0 %v3078, 32
    %v3081 = vpop.permute.xlu0 %3080
    %v3083 = vmul.f32 %v3065, %v3081
    %3085 = vrot.lane.b32.xlu0 %v3083, 64
    %v3086 = vpop.permute.xlu0 %3085
    %v3087 = vsel %vm2986, %v3086, 0
    %3089 = vmatprep.subr.mxu0 0.0
    %3090 = vmatpush1.msra.mxu0 %v2903
    %3091 = vmatprep.subr.mxu0 0.0
    %3092 = vmatpush1.msra.mxu0 %v2904
    %3093 = vmatprep.subr.mxu0 0.0
    %3094 = vmatpush1.msra.mxu0 %v2905
    %3095 = vmatprep.subr.mxu0 0.0
    %3096 = vmatpush1.msra.mxu0 %v2906
    %3097 = vmatprep.subr.mxu0 0.0
    %3098 = vmatpush1.msra.mxu0 0.0
    %3099 = vmatprep.subr.mxu0 0.0
    %3100 = vmatpush1.msra.mxu0 0.0
    %3101 = vmatprep.subr.mxu0 0.0
    %3102 = vmatpush1.msra.mxu0 0.0
    %3103 = vmatprep.subr.mxu0 0.0
    %3104 = vmatpush1.msra.mxu0 0.0
    %3105 = vmatprep.subr.mxu0 0.0
    %3106 = vmatpush1.msra.mxu0 0.0
    %3107 = vmatprep.subr.mxu0 0.0
    %3108 = vmatpush1.msra.mxu0 0.0
    %3109 = vmatprep.subr.mxu0 0.0
    %3110 = vmatpush1.msra.mxu0 0.0
    %3111 = vmatprep.subr.mxu0 0.0
    %3112 = vmatpush1.msra.mxu0 0.0
    %3113 = vmatprep.subr.mxu0 0.0
    %3114 = vmatpush1.msra.mxu0 0.0
    %3115 = vmatprep.subr.mxu0 0.0
    %3116 = vmatpush1.msra.mxu0 0.0
    %3117 = vmatprep.subr.mxu0 0.0
    %3118 = vmatpush1.msra.mxu0 0.0
    %3119 = vmatprep.subr.mxu0 0.0
    %3120 = vmatpush1.msra.mxu0 0.0
    %3121 = vmatprep.subr.mxu0 0.0
    %3122 = vmatpush1.msra.mxu0 0.0
    %3123 = vmatprep.subr.mxu0 0.0
    %3124 = vmatpush1.msra.mxu0 0.0
    %3125 = vmatprep.subr.mxu0 0.0
    %3126 = vmatpush1.msra.mxu0 0.0
    %3127 = vmatprep.subr.mxu0 0.0
    %3128 = vmatpush1.msra.mxu0 0.0
    %3129 = vmatprep.subr.mxu0 0.0
    %3130 = vmatpush1.msra.mxu0 0.0
    %3131 = vmatprep.subr.mxu0 0.0
    %3132 = vmatpush1.msra.mxu0 0.0
    %3133 = vmatprep.subr.mxu0 0.0
    %3134 = vmatpush1.msra.mxu0 0.0
    %3135 = vmatprep.subr.mxu0 0.0
    %3136 = vmatpush1.msra.mxu0 0.0
    %3137 = vmatprep.subr.mxu0 0.0
    %3138 = vmatpush1.msra.mxu0 0.0
    %3139 = vmatprep.subr.mxu0 0.0
    %3140 = vmatpush1.msra.mxu0 0.0
    %3141 = vmatprep.subr.mxu0 0.0
    %3142 = vmatpush1.msra.mxu0 0.0
    %3143 = vmatprep.subr.mxu0 0.0
    %3144 = vmatpush1.msra.mxu0 0.0
    %3145 = vmatprep.subr.mxu0 0.0
    %3146 = vmatpush1.msra.mxu0 0.0
    %3147 = vmatprep.subr.mxu0 0.0
    %3148 = vmatpush1.msra.mxu0 0.0
    %3149 = vmatprep.subr.mxu0 0.0
    %3150 = vmatpush1.msra.mxu0 0.0
    %3151 = vmatprep.subr.mxu0 0.0
    %3152 = vmatpush1.msra.mxu0 0.0
    %3153 = vmatprep.mubr.f32.mxu0 0.0
    %3154 = vmatmul.mubr.f32.gmra.mrb[0].mxu0 %v3087
    %v3155 = vpop.f32.mrb[0].mxu0
    %v3156 = vadd.f32 0.0, %v3155
    %v3157 = vpop.f32.mrb[0].mxu0
    %3158 = vdwg.mxu0
    %v3159 = vadd.f32 %v2983, %v3156
    %v3160 = vxor.u32 %v3159, 2147483648
    %v3161 = vmul.f32 %v3160, 1.442695
    %v3162 = vpow.pop %v3161
    %v3163 = vadd.f32 %v3162, 1.0
    %v3164 = vrcp.pop %v3163
    %v3165 = vmul.f32 1.0, %v3164
    %v3166 = vtanh.pop %v3159
    %v3167 = vmul.f32 %v3165, %v3077
    %3169 = vrot.lane.b32.xlu0 %v3166, 32
    %v3170 = vpop.permute.xlu0 %3169
    %v3172 = vmul.f32 %v3165, %v3170
    %3174 = vrot.lane.b32.xlu0 %v3172, 32
    %v3175 = vpop.permute.xlu0 %3174
    %v3177 = vadd.f32 %v3167, %v3175
    %v3178 = vtanh.pop %v3177
    %3180 = vrot.lane.b32.xlu0 %v3178, 32
    %v3181 = vpop.permute.xlu0 %3180
    %v3183 = vmul.f32 %v3165, %v3181
    %3185 = vrot.lane.b32.xlu0 %v3183, 64
    %v3186 = vpop.permute.xlu0 %3185
    %v3187 = vsel %vm2986, %v3186, 0
    %3189 = vmatprep.subr.mxu0 0.0
    %3190 = vmatpush1.msra.mxu0 %v2903
    %3191 = vmatprep.subr.mxu0 0.0
    %3192 = vmatpush1.msra.mxu0 %v2904
    %3193 = vmatprep.subr.mxu0 0.0
    %3194 = vmatpush1.msra.mxu0 %v2905
    %3195 = vmatprep.subr.mxu0 0.0
    %3196 = vmatpush1.msra.mxu0 %v2906
    %3197 = vmatprep.subr.mxu0 0.0
    %3198 = vmatpush1.msra.mxu0 0.0
    %3199 = vmatprep.subr.mxu0 0.0
    %3200 = vmatpush1.msra.mxu0 0.0
    %3201 = vmatprep.subr.mxu0 0.0
    %3202 = vmatpush1.msra.mxu0 0.0
    %3203 = vmatprep.subr.mxu0 0.0
    %3204 = vmatpush1.msra.mxu0 0.0
    %3205 = vmatprep.subr.mxu0 0.0
    %3206 = vmatpush1.msra.mxu0 0.0
    %3207 = vmatprep.subr.mxu0 0.0
    %3208 = vmatpush1.msra.mxu0 0.0
    %3209 = vmatprep.subr.mxu0 0.0
    %3210 = vmatpush1.msra.mxu0 0.0
    %3211 = vmatprep.subr.mxu0 0.0
    %3212 = vmatpush1.msra.mxu0 0.0
    %3213 = vmatprep.subr.mxu0 0.0
    %3214 = vmatpush1.msra.mxu0 0.0
    %3215 = vmatprep.subr.mxu0 0.0
    %3216 = vmatpush1.msra.mxu0 0.0
    %3217 = vmatprep.subr.mxu0 0.0
    %3218 = vmatpush1.msra.mxu0 0.0
    %3219 = vmatprep.subr.mxu0 0.0
    %3220 = vmatpush1.msra.mxu0 0.0
    %3221 = vmatprep.subr.mxu0 0.0
    %3222 = vmatpush1.msra.mxu0 0.0
    %3223 = vmatprep.subr.mxu0 0.0
    %3224 = vmatpush1.msra.mxu0 0.0
    %3225 = vmatprep.subr.mxu0 0.0
    %3226 = vmatpush1.msra.mxu0 0.0
    %3227 = vmatprep.subr.mxu0 0.0
    %3228 = vmatpush1.msra.mxu0 0.0
    %3229 = vmatprep.subr.mxu0 0.0
    %3230 = vmatpush1.msra.mxu0 0.0
    %3231 = vmatprep.subr.mxu0 0.0
    %3232 = vmatpush1.msra.mxu0 0.0
    %3233 = vmatprep.subr.mxu0 0.0
    %3234 = vmatpush1.msra.mxu0 0.0
    %3235 = vmatprep.subr.mxu0 0.0
    %3236 = vmatpush1.msra.mxu0 0.0
    %3237 = vmatprep.subr.mxu0 0.0
    %3238 = vmatpush1.msra.mxu0 0.0
    %3239 = vmatprep.subr.mxu0 0.0
    %3240 = vmatpush1.msra.mxu0 0.0
    %3241 = vmatprep.subr.mxu0 0.0
    %3242 = vmatpush1.msra.mxu0 0.0
    %3243 = vmatprep.subr.mxu0 0.0
    %3244 = vmatpush1.msra.mxu0 0.0
    %3245 = vmatprep.subr.mxu0 0.0
    %3246 = vmatpush1.msra.mxu0 0.0
    %3247 = vmatprep.subr.mxu0 0.0
    %3248 = vmatpush1.msra.mxu0 0.0
    %3249 = vmatprep.subr.mxu0 0.0
    %3250 = vmatpush1.msra.mxu0 0.0
    %3251 = vmatprep.subr.mxu0 0.0
    %3252 = vmatpush1.msra.mxu0 0.0
    %3253 = vmatprep.mubr.f32.mxu0 0.0
    %3254 = vmatmul.mubr.f32.gmra.mrb[0].mxu0 %v3187
    %v3255 = vpop.f32.mrb[0].mxu0
    %v3256 = vadd.f32 0.0, %v3255
    %v3257 = vpop.f32.mrb[0].mxu0
    %3258 = vdwg.mxu0
    %v3259 = vadd.f32 %v2983, %v3256
    %v3260 = vxor.u32 %v3259, 2147483648
    %v3261 = vmul.f32 %v3260, 1.442695
    %v3262 = vpow.pop %v3261
    %v3263 = vadd.f32 %v3262, 1.0
    %v3264 = vrcp.pop %v3263
    %v3265 = vmul.f32 1.0, %v3264
    %v3266 = vtanh.pop %v3259
    %v3267 = vmul.f32 %v3265, %v3177
    %3269 = vrot.lane.b32.xlu0 %v3266, 32
    %v3270 = vpop.permute.xlu0 %3269
    %v3272 = vmul.f32 %v3265, %v3270
    %3274 = vrot.lane.b32.xlu0 %v3272, 32
    %v3275 = vpop.permute.xlu0 %3274
    %v3277 = vadd.f32 %v3267, %v3275
    %v3278 = vtanh.pop %v3277
    %3280 = vrot.lane.b32.xlu0 %v3278, 32
    %v3281 = vpop.permute.xlu0 %3280
    %v3283 = vmul.f32 %v3265, %v3281
    %3285 = vrot.lane.b32.xlu0 %v3283, 64
    %v3286 = vpop.permute.xlu0 %3285
    %v3287 = vsel %vm2986, %v3286, 0
    %3289 = vmatprep.subr.mxu0 0.0
    %3290 = vmatpush1.msra.mxu0 %v2903
    %3291 = vmatprep.subr.mxu0 0.0
    %3292 = vmatpush1.msra.mxu0 %v2904
    %3293 = vmatprep.subr.mxu0 0.0
    %3294 = vmatpush1.msra.mxu0 %v2905
    %3295 = vmatprep.subr.mxu0 0.0
    %3296 = vmatpush1.msra.mxu0 %v2906
    %3297 = vmatprep.subr.mxu0 0.0
    %3298 = vmatpush1.msra.mxu0 0.0
    %3299 = vmatprep.subr.mxu0 0.0
    %3300 = vmatpush1.msra.mxu0 0.0
    %3301 = vmatprep.subr.mxu0 0.0
    %3302 = vmatpush1.msra.mxu0 0.0
    %3303 = vmatprep.subr.mxu0 0.0
    %3304 = vmatpush1.msra.mxu0 0.0
    %3305 = vmatprep.subr.mxu0 0.0
    %3306 = vmatpush1.msra.mxu0 0.0
    %3307 = vmatprep.subr.mxu0 0.0
    %3308 = vmatpush1.msra.mxu0 0.0
    %3309 = vmatprep.subr.mxu0 0.0
    %3310 = vmatpush1.msra.mxu0 0.0
    %3311 = vmatprep.subr.mxu0 0.0
    %3312 = vmatpush1.msra.mxu0 0.0
    %3313 = vmatprep.subr.mxu0 0.0
    %3314 = vmatpush1.msra.mxu0 0.0
    %3315 = vmatprep.subr.mxu0 0.0
    %3316 = vmatpush1.msra.mxu0 0.0
    %3317 = vmatprep.subr.mxu0 0.0
    %3318 = vmatpush1.msra.mxu0 0.0
    %3319 = vmatprep.subr.mxu0 0.0
    %3320 = vmatpush1.msra.mxu0 0.0
    %3321 = vmatprep.subr.mxu0 0.0
    %3322 = vmatpush1.msra.mxu0 0.0
    %3323 = vmatprep.subr.mxu0 0.0
    %3324 = vmatpush1.msra.mxu0 0.0
    %3325 = vmatprep.subr.mxu0 0.0
    %3326 = vmatpush1.msra.mxu0 0.0
    %3327 = vmatprep.subr.mxu0 0.0
    %3328 = vmatpush1.msra.mxu0 0.0
    %3329 = vmatprep.subr.mxu0 0.0
    %3330 = vmatpush1.msra.mxu0 0.0
    %3331 = vmatprep.subr.mxu0 0.0
    %3332 = vmatpush1.msra.mxu0 0.0
    %3333 = vmatprep.subr.mxu0 0.0
    %3334 = vmatpush1.msra.mxu0 0.0
    %3335 = vmatprep.subr.mxu0 0.0
    %3336 = vmatpush1.msra.mxu0 0.0
    %3337 = vmatprep.subr.mxu0 0.0
    %3338 = vmatpush1.msra.mxu0 0.0
    %3339 = vmatprep.subr.mxu0 0.0
    %3340 = vmatpush1.msra.mxu0 0.0
    %3341 = vmatprep.subr.mxu0 0.0
    %3342 = vmatpush1.msra.mxu0 0.0
    %3343 = vmatprep.subr.mxu0 0.0
    %3344 = vmatpush1.msra.mxu0 0.0
    %3345 = vmatprep.subr.mxu0 0.0
    %3346 = vmatpush1.msra.mxu0 0.0
    %3347 = vmatprep.subr.mxu0 0.0
    %3348 = vmatpush1.msra.mxu0 0.0
    %3349 = vmatprep.subr.mxu0 0.0
    %3350 = vmatpush1.msra.mxu0 0.0
    %3351 = vmatprep.subr.mxu0 0.0
    %3352 = vmatpush1.msra.mxu0 0.0
    %3353 = vmatprep.mubr.f32.mxu0 0.0
    %3354 = vmatmul.mubr.f32.gmra.mrb[0].mxu0 %v3287
    %v3355 = vpop.f32.mrb[0].mxu0
    %v3356 = vadd.f32 0.0, %v3355
    %v3357 = vpop.f32.mrb[0].mxu0
    %3358 = vdwg.mxu0
    %v3359 = vadd.f32 %v2983, %v3356
    %v3360 = vxor.u32 %v3359, 2147483648
    %v3361 = vmul.f32 %v3360, 1.442695
    %v3362 = vpow.pop %v3361
    %v3363 = vadd.f32 %v3362, 1.0
    %v3364 = vrcp.pop %v3363
    %v3365 = vmul.f32 1.0, %v3364
    %v3366 = vtanh.pop %v3359
    %v3367 = vmul.f32 %v3365, %v3277
    %3369 = vrot.lane.b32.xlu0 %v3366, 32
    %v3370 = vpop.permute.xlu0 %3369
    %v3372 = vmul.f32 %v3365, %v3370
    %3374 = vrot.lane.b32.xlu0 %v3372, 32
    %v3375 = vpop.permute.xlu0 %3374
    %v3377 = vadd.f32 %v3367, %v3375
    %v3378 = vtanh.pop %v3377
    %3380 = vrot.lane.b32.xlu0 %v3378, 32
    %v3381 = vpop.permute.xlu0 %3380
    %v3383 = vmul.f32 %v3365, %v3381
    %3385 = vrot.lane.b32.xlu0 %v3383, 64
    %v3386 = vpop.permute.xlu0 %3385
    %v3387 = vsel %vm2986, %v3386, 0
    %3389 = vmatprep.subr.mxu0 0.0
    %3390 = vmatpush1.msra.mxu0 %v2903
    %3391 = vmatprep.subr.mxu0 0.0
    %3392 = vmatpush1.msra.mxu0 %v2904
    %3393 = vmatprep.subr.mxu0 0.0
    %3394 = vmatpush1.msra.mxu0 %v2905
    %3395 = vmatprep.subr.mxu0 0.0
    %3396 = vmatpush1.msra.mxu0 %v2906
    %3397 = vmatprep.subr.mxu0 0.0
    %3398 = vmatpush1.msra.mxu0 0.0
    %3399 = vmatprep.subr.mxu0 0.0
    %3400 = vmatpush1.msra.mxu0 0.0
    %3401 = vmatprep.subr.mxu0 0.0
    %3402 = vmatpush1.msra.mxu0 0.0
    %3403 = vmatprep.subr.mxu0 0.0
    %3404 = vmatpush1.msra.mxu0 0.0
    %3405 = vmatprep.subr.mxu0 0.0
    %3406 = vmatpush1.msra.mxu0 0.0
    %3407 = vmatprep.subr.mxu0 0.0
    %3408 = vmatpush1.msra.mxu0 0.0
    %3409 = vmatprep.subr.mxu0 0.0
    %3410 = vmatpush1.msra.mxu0 0.0
    %3411 = vmatprep.subr.mxu0 0.0
    %3412 = vmatpush1.msra.mxu0 0.0
    %3413 = vmatprep.subr.mxu0 0.0
    %3414 = vmatpush1.msra.mxu0 0.0
    %3415 = vmatprep.subr.mxu0 0.0
    %3416 = vmatpush1.msra.mxu0 0.0
    %3417 = vmatprep.subr.mxu0 0.0
    %3418 = vmatpush1.msra.mxu0 0.0
    %3419 = vmatprep.subr.mxu0 0.0
    %3420 = vmatpush1.msra.mxu0 0.0
    %3421 = vmatprep.subr.mxu0 0.0
    %3422 = vmatpush1.msra.mxu0 0.0
    %3423 = vmatprep.subr.mxu0 0.0
    %3424 = vmatpush1.msra.mxu0 0.0
    %3425 = vmatprep.subr.mxu0 0.0
    %3426 = vmatpush1.msra.mxu0 0.0
    %3427 = vmatprep.subr.mxu0 0.0
    %3428 = vmatpush1.msra.mxu0 0.0
    %3429 = vmatprep.subr.mxu0 0.0
    %3430 = vmatpush1.msra.mxu0 0.0
    %3431 = vmatprep.subr.mxu0 0.0
    %3432 = vmatpush1.msra.mxu0 0.0
    %3433 = vmatprep.subr.mxu0 0.0
    %3434 = vmatpush1.msra.mxu0 0.0
    %3435 = vmatprep.subr.mxu0 0.0
    %3436 = vmatpush1.msra.mxu0 0.0
    %3437 = vmatprep.subr.mxu0 0.0
    %3438 = vmatpush1.msra.mxu0 0.0
    %3439 = vmatprep.subr.mxu0 0.0
    %3440 = vmatpush1.msra.mxu0 0.0
    %3441 = vmatprep.subr.mxu0 0.0
    %3442 = vmatpush1.msra.mxu0 0.0
    %3443 = vmatprep.subr.mxu0 0.0
    %3444 = vmatpush1.msra.mxu0 0.0
    %3445 = vmatprep.subr.mxu0 0.0
    %3446 = vmatpush1.msra.mxu0 0.0
    %3447 = vmatprep.subr.mxu0 0.0
    %3448 = vmatpush1.msra.mxu0 0.0
    %3449 = vmatprep.subr.mxu0 0.0
    %3450 = vmatpush1.msra.mxu0 0.0
    %3451 = vmatprep.subr.mxu0 0.0
    %3452 = vmatpush1.msra.mxu0 0.0
    %3453 = vmatprep.mubr.f32.mxu0 0.0
    %3454 = vmatmul.mubr.f32.gmra.mrb[0].mxu0 %v3387
    %v3455 = vpop.f32.mrb[0].mxu0
    %v3456 = vadd.f32 0.0, %v3455
    %v3457 = vpop.f32.mrb[0].mxu0
    %3458 = vdwg.mxu0
    %v3459 = vadd.f32 %v2983, %v3456
    %v3460 = vxor.u32 %v3459, 2147483648
    %v3461 = vmul.f32 %v3460, 1.442695
    %v3462 = vpow.pop %v3461
    %v3463 = vadd.f32 %v3462, 1.0
    %v3464 = vrcp.pop %v3463
    %v3465 = vmul.f32 1.0, %v3464
    %v3466 = vtanh.pop %v3459
    %v3467 = vmul.f32 %v3465, %v3377
    %3469 = vrot.lane.b32.xlu0 %v3466, 32
    %v3470 = vpop.permute.xlu0 %3469
    %v3472 = vmul.f32 %v3465, %v3470
    %3474 = vrot.lane.b32.xlu0 %v3472, 32
    %v3475 = vpop.permute.xlu0 %3474
    %v3477 = vadd.f32 %v3467, %v3475
    %v3478 = vtanh.pop %v3477
    %3480 = vrot.lane.b32.xlu0 %v3478, 32
    %v3481 = vpop.permute.xlu0 %3480
    %v3483 = vmul.f32 %v3465, %v3481
    %3485 = vrot.lane.b32.xlu0 %v3483, 64
    %v3486 = vpop.permute.xlu0 %3485
    %v3487 = vsel %vm2986, %v3486, 0
    %3489 = vmatprep.subr.mxu0 0.0
    %3490 = vmatpush1.msra.mxu0 %v2903
    %3491 = vmatprep.subr.mxu0 0.0
    %3492 = vmatpush1.msra.mxu0 %v2904
    %3493 = vmatprep.subr.mxu0 0.0
    %3494 = vmatpush1.msra.mxu0 %v2905
    %3495 = vmatprep.subr.mxu0 0.0
    %3496 = vmatpush1.msra.mxu0 %v2906
    %3497 = vmatprep.subr.mxu0 0.0
    %3498 = vmatpush1.msra.mxu0 0.0
    %3499 = vmatprep.subr.mxu0 0.0
    %3500 = vmatpush1.msra.mxu0 0.0
    %3501 = vmatprep.subr.mxu0 0.0
    %3502 = vmatpush1.msra.mxu0 0.0
    %3503 = vmatprep.subr.mxu0 0.0
    %3504 = vmatpush1.msra.mxu0 0.0
    %3505 = vmatprep.subr.mxu0 0.0
    %3506 = vmatpush1.msra.mxu0 0.0
    %3507 = vmatprep.subr.mxu0 0.0
    %3508 = vmatpush1.msra.mxu0 0.0
    %3509 = vmatprep.subr.mxu0 0.0
    %3510 = vmatpush1.msra.mxu0 0.0
    %3511 = vmatprep.subr.mxu0 0.0
    %3512 = vmatpush1.msra.mxu0 0.0
    %3513 = vmatprep.subr.mxu0 0.0
    %3514 = vmatpush1.msra.mxu0 0.0
    %3515 = vmatprep.subr.mxu0 0.0
    %3516 = vmatpush1.msra.mxu0 0.0
    %3517 = vmatprep.subr.mxu0 0.0
    %3518 = vmatpush1.msra.mxu0 0.0
    %3519 = vmatprep.subr.mxu0 0.0
    %3520 = vmatpush1.msra.mxu0 0.0
    %3521 = vmatprep.subr.mxu0 0.0
    %3522 = vmatpush1.msra.mxu0 0.0
    %3523 = vmatprep.subr.mxu0 0.0
    %3524 = vmatpush1.msra.mxu0 0.0
    %3525 = vmatprep.subr.mxu0 0.0
    %3526 = vmatpush1.msra.mxu0 0.0
    %3527 = vmatprep.subr.mxu0 0.0
    %3528 = vmatpush1.msra.mxu0 0.0
    %3529 = vmatprep.subr.mxu0 0.0
    %3530 = vmatpush1.msra.mxu0 0.0
    %3531 = vmatprep.subr.mxu0 0.0
    %3532 = vmatpush1.msra.mxu0 0.0
    %3533 = vmatprep.subr.mxu0 0.0
    %3534 = vmatpush1.msra.mxu0 0.0
    %3535 = vmatprep.subr.mxu0 0.0
    %3536 = vmatpush1.msra.mxu0 0.0
    %3537 = vmatprep.subr.mxu0 0.0
    %3538 = vmatpush1.msra.mxu0 0.0
    %3539 = vmatprep.subr.mxu0 0.0
    %3540 = vmatpush1.msra.mxu0 0.0
    %3541 = vmatprep.subr.mxu0 0.0
    %3542 = vmatpush1.msra.mxu0 0.0
    %3543 = vmatprep.subr.mxu0 0.0
    %3544 = vmatpush1.msra.mxu0 0.0
    %3545 = vmatprep.subr.mxu0 0.0
    %3546 = vmatpush1.msra.mxu0 0.0
    %3547 = vmatprep.subr.mxu0 0.0
    %3548 = vmatpush1.msra.mxu0 0.0
    %3549 = vmatprep.subr.mxu0 0.0
    %3550 = vmatpush1.msra.mxu0 0.0
    %3551 = vmatprep.subr.mxu0 0.0
    %3552 = vmatpush1.msra.mxu0 0.0
    %3553 = vmatprep.mubr.f32.mxu0 0.0
    %3554 = vmatmul.mubr.f32.gmra.mrb[0].mxu0 %v3487
    %v3555 = vpop.f32.mrb[0].mxu0
    %v3556 = vadd.f32 0.0, %v3555
    %v3557 = vpop.f32.mrb[0].mxu0
    %3558 = vdwg.mxu0
    %v3559 = vadd.f32 %v2983, %v3556
    %v3560 = vxor.u32 %v3559, 2147483648
    %v3561 = vmul.f32 %v3560, 1.442695
    %v3562 = vpow.pop %v3561
    %v3563 = vadd.f32 %v3562, 1.0
    %v3564 = vrcp.pop %v3563
    %v3565 = vmul.f32 1.0, %v3564
    %v3566 = vtanh.pop %v3559
    %v3567 = vmul.f32 %v3565, %v3477
    %3569 = vrot.lane.b32.xlu0 %v3566, 32
    %v3570 = vpop.permute.xlu0 %3569
    %v3572 = vmul.f32 %v3565, %v3570
    %3574 = vrot.lane.b32.xlu0 %v3572, 32
    %v3575 = vpop.permute.xlu0 %3574
    %v3577 = vadd.f32 %v3567, %v3575
    %v3578 = vtanh.pop %v3577
    %3580 = vrot.lane.b32.xlu0 %v3578, 32
    %v3581 = vpop.permute.xlu0 %3580
    %v3583 = vmul.f32 %v3565, %v3581
    %3585 = vrot.lane.b32.xlu0 %v3583, 64
    %v3586 = vpop.permute.xlu0 %3585
    %v3587 = vsel %vm2986, %v3586, 0
    %3589 = vmatprep.subr.mxu0 0.0
    %3590 = vmatpush1.msra.mxu0 %v2903
    %3591 = vmatprep.subr.mxu0 0.0
    %3592 = vmatpush1.msra.mxu0 %v2904
    %3593 = vmatprep.subr.mxu0 0.0
    %3594 = vmatpush1.msra.mxu0 %v2905
    %3595 = vmatprep.subr.mxu0 0.0
    %3596 = vmatpush1.msra.mxu0 %v2906
    %3597 = vmatprep.subr.mxu0 0.0
    %3598 = vmatpush1.msra.mxu0 0.0
    %3599 = vmatprep.subr.mxu0 0.0
    %3600 = vmatpush1.msra.mxu0 0.0
    %3601 = vmatprep.subr.mxu0 0.0
    %3602 = vmatpush1.msra.mxu0 0.0
    %3603 = vmatprep.subr.mxu0 0.0
    %3604 = vmatpush1.msra.mxu0 0.0
    %3605 = vmatprep.subr.mxu0 0.0
    %3606 = vmatpush1.msra.mxu0 0.0
    %3607 = vmatprep.subr.mxu0 0.0
    %3608 = vmatpush1.msra.mxu0 0.0
    %3609 = vmatprep.subr.mxu0 0.0
    %3610 = vmatpush1.msra.mxu0 0.0
    %3611 = vmatprep.subr.mxu0 0.0
    %3612 = vmatpush1.msra.mxu0 0.0
    %3613 = vmatprep.subr.mxu0 0.0
    %3614 = vmatpush1.msra.mxu0 0.0
    %3615 = vmatprep.subr.mxu0 0.0
    %3616 = vmatpush1.msra.mxu0 0.0
    %3617 = vmatprep.subr.mxu0 0.0
    %3618 = vmatpush1.msra.mxu0 0.0
    %3619 = vmatprep.subr.mxu0 0.0
    %3620 = vmatpush1.msra.mxu0 0.0
    %3621 = vmatprep.subr.mxu0 0.0
    %3622 = vmatpush1.msra.mxu0 0.0
    %3623 = vmatprep.subr.mxu0 0.0
    %3624 = vmatpush1.msra.mxu0 0.0
    %3625 = vmatprep.subr.mxu0 0.0
    %3626 = vmatpush1.msra.mxu0 0.0
    %3627 = vmatprep.subr.mxu0 0.0
    %3628 = vmatpush1.msra.mxu0 0.0
    %3629 = vmatprep.subr.mxu0 0.0
    %3630 = vmatpush1.msra.mxu0 0.0
    %3631 = vmatprep.subr.mxu0 0.0
    %3632 = vmatpush1.msra.mxu0 0.0
    %3633 = vmatprep.subr.mxu0 0.0
    %3634 = vmatpush1.msra.mxu0 0.0
    %3635 = vmatprep.subr.mxu0 0.0
    %3636 = vmatpush1.msra.mxu0 0.0
    %3637 = vmatprep.subr.mxu0 0.0
    %3638 = vmatpush1.msra.mxu0 0.0
    %3639 = vmatprep.subr.mxu0 0.0
    %3640 = vmatpush1.msra.mxu0 0.0
    %3641 = vmatprep.subr.mxu0 0.0
    %3642 = vmatpush1.msra.mxu0 0.0
    %3643 = vmatprep.subr.mxu0 0.0
    %3644 = vmatpush1.msra.mxu0 0.0
    %3645 = vmatprep.subr.mxu0 0.0
    %3646 = vmatpush1.msra.mxu0 0.0
    %3647 = vmatprep.subr.mxu0 0.0
    %3648 = vmatpush1.msra.mxu0 0.0
    %3649 = vmatprep.subr.mxu0 0.0
    %3650 = vmatpush1.msra.mxu0 0.0
    %3651 = vmatprep.subr.mxu0 0.0
    %3652 = vmatpush1.msra.mxu0 0.0
    %3653 = vmatprep.mubr.f32.mxu0 0.0
    %3654 = vmatmul.mubr.f32.gmra.mrb[0].mxu0 %v3587
    %v3655 = vpop.f32.mrb[0].mxu0
    %v3656 = vadd.f32 0.0, %v3655
    %v3657 = vpop.f32.mrb[0].mxu0
    %3658 = vdwg.mxu0
    %v3659 = vadd.f32 %v2983, %v3656
    %v3660 = vxor.u32 %v3659, 2147483648
    %v3661 = vmul.f32 %v3660, 1.442695
    %v3662 = vpow.pop %v3661
    %v3663 = vadd.f32 %v3662, 1.0
    %v3664 = vrcp.pop %v3663
    %v3665 = vmul.f32 1.0, %v3664
    %v3666 = vtanh.pop %v3659
    %v3667 = vmul.f32 %v3665, %v3577
    %3669 = vrot.lane.b32.xlu0 %v3666, 32
    %v3670 = vpop.permute.xlu0 %3669
    %v3672 = vmul.f32 %v3665, %v3670
    %3674 = vrot.lane.b32.xlu0 %v3672, 32
    %v3675 = vpop.permute.xlu0 %3674
    %v3677 = vadd.f32 %v3667, %v3675
    %v3678 = vtanh.pop %v3677
    %3680 = vrot.lane.b32.xlu0 %v3678, 32
    %v3681 = vpop.permute.xlu0 %3680
    %v3683 = vmul.f32 %v3665, %v3681
    %3685 = vrot.lane.b32.xlu0 %v3683, 64
    %v3686 = vpop.permute.xlu0 %3685
    %v3687 = vsel %vm2986, %v3686, 0
    %3689 = vmatprep.subr.mxu0 0.0
    %3690 = vmatpush1.msra.mxu0 %v2903
    %3691 = vmatprep.subr.mxu0 0.0
    %3692 = vmatpush1.msra.mxu0 %v2904
    %3693 = vmatprep.subr.mxu0 0.0
    %3694 = vmatpush1.msra.mxu0 %v2905
    %3695 = vmatprep.subr.mxu0 0.0
    %3696 = vmatpush1.msra.mxu0 %v2906
    %3697 = vmatprep.subr.mxu0 0.0
    %3698 = vmatpush1.msra.mxu0 0.0
    %3699 = vmatprep.subr.mxu0 0.0
    %3700 = vmatpush1.msra.mxu0 0.0
    %3701 = vmatprep.subr.mxu0 0.0
    %3702 = vmatpush1.msra.mxu0 0.0
    %3703 = vmatprep.subr.mxu0 0.0
    %3704 = vmatpush1.msra.mxu0 0.0
    %3705 = vmatprep.subr.mxu0 0.0
    %3706 = vmatpush1.msra.mxu0 0.0
    %3707 = vmatprep.subr.mxu0 0.0
    %3708 = vmatpush1.msra.mxu0 0.0
    %3709 = vmatprep.subr.mxu0 0.0
    %3710 = vmatpush1.msra.mxu0 0.0
    %3711 = vmatprep.subr.mxu0 0.0
    %3712 = vmatpush1.msra.mxu0 0.0
    %3713 = vmatprep.subr.mxu0 0.0
    %3714 = vmatpush1.msra.mxu0 0.0
    %3715 = vmatprep.subr.mxu0 0.0
    %3716 = vmatpush1.msra.mxu0 0.0
    %3717 = vmatprep.subr.mxu0 0.0
    %3718 = vmatpush1.msra.mxu0 0.0
    %3719 = vmatprep.subr.mxu0 0.0
    %3720 = vmatpush1.msra.mxu0 0.0
    %3721 = vmatprep.subr.mxu0 0.0
    %3722 = vmatpush1.msra.mxu0 0.0
    %3723 = vmatprep.subr.mxu0 0.0
    %3724 = vmatpush1.msra.mxu0 0.0
    %3725 = vmatprep.subr.mxu0 0.0
    %3726 = vmatpush1.msra.mxu0 0.0
    %3727 = vmatprep.subr.mxu0 0.0
    %3728 = vmatpush1.msra.mxu0 0.0
    %3729 = vmatprep.subr.mxu0 0.0
    %3730 = vmatpush1.msra.mxu0 0.0
    %3731 = vmatprep.subr.mxu0 0.0
    %3732 = vmatpush1.msra.mxu0 0.0
    %3733 = vmatprep.subr.mxu0 0.0
    %3734 = vmatpush1.msra.mxu0 0.0
    %3735 = vmatprep.subr.mxu0 0.0
    %3736 = vmatpush1.msra.mxu0 0.0
    %3737 = vmatprep.subr.mxu0 0.0
    %3738 = vmatpush1.msra.mxu0 0.0
    %3739 = vmatprep.subr.mxu0 0.0
    %3740 = vmatpush1.msra.mxu0 0.0
    %3741 = vmatprep.subr.mxu0 0.0
    %3742 = vmatpush1.msra.mxu0 0.0
    %3743 = vmatprep.subr.mxu0 0.0
    %3744 = vmatpush1.msra.mxu0 0.0
    %3745 = vmatprep.subr.mxu0 0.0
    %3746 = vmatpush1.msra.mxu0 0.0
    %3747 = vmatprep.subr.mxu0 0.0
    %3748 = vmatpush1.msra.mxu0 0.0
    %3749 = vmatprep.subr.mxu0 0.0
    %3750 = vmatpush1.msra.mxu0 0.0
    %3751 = vmatprep.subr.mxu0 0.0
    %3752 = vmatpush1.msra.mxu0 0.0
    %3753 = vmatprep.mubr.f32.mxu0 0.0
    %3754 = vmatmul.mubr.f32.gmra.mrb[0].mxu0 %v3687
    %v3755 = vpop.f32.mrb[0].mxu0
    %v3756 = vadd.f32 0.0, %v3755
    %v3757 = vpop.f32.mrb[0].mxu0
    %3758 = vdwg.mxu0
    %v3759 = vadd.f32 %v2983, %v3756
    %v3760 = vxor.u32 %v3759, 2147483648
    %v3761 = vmul.f32 %v3760, 1.442695
    %v3762 = vpow.pop %v3761
    %v3763 = vadd.f32 %v3762, 1.0
    %v3764 = vrcp.pop %v3763
    %v3765 = vmul.f32 1.0, %v3764
    %v3766 = vtanh.pop %v3759
    %v3767 = vmul.f32 %v3765, %v3677
    %3769 = vrot.lane.b32.xlu0 %v3766, 32
    %v3770 = vpop.permute.xlu0 %3769
    %v3772 = vmul.f32 %v3765, %v3770
    %3774 = vrot.lane.b32.xlu0 %v3772, 32
    %v3775 = vpop.permute.xlu0 %3774
    %v3777 = vadd.f32 %v3767, %v3775
    %v3778 = vtanh.pop %v3777
    %3780 = vrot.lane.b32.xlu0 %v3778, 32
    %v3781 = vpop.permute.xlu0 %3780
    %v3783 = vmul.f32 %v3765, %v3781
    %3785 = vrot.lane.b32.xlu0 %v3183, 96
    %v3786 = vpop.permute.xlu0 %3785
    %3788 = vrot.lane.b32.xlu0 %v3383, 32
    %v3789 = vpop.permute.xlu0 %3788
    %3792 = vrot.lane.b32.xlu0 %v3583, 96
    %v3793 = vpop.permute.xlu0 %3792
    %3796 = vrot.lane.b32.xlu0 %v3783, 32
    %v3797 = vpop.permute.xlu0 %3796
    %v3799 = vsel %vm2986, %v3086, %v3786
    %v3800 = vsel %vm463, %v3799, %v3283
    %v3801 = vsel %vm264, %v3800, %v3789
    %v3802 = vsel %vm2986, %v3486, %v3793
    %v3803 = vsel %vm463, %v3802, %v3683
    %v3804 = vsel %vm264, %v3803, %v3797
    %v3805 = vmax.f32 %v3801, 0.0
    %v3806 = vmax.f32 %v3804, 0.0
    %3809 = vrot.lane.b32.xlu0 %v3805, 64
    %v3810 = vpop.permute.xlu0 %3809
    %3811 = vrot.lane.b32.xlu0 %v3806, 64
    %v3812 = vpop.permute.xlu0 %3811
    %v3813 = vsel %vm463, %v3810, %v3812
    %v3816 = vsel %vm463, %v2899, %v3810
    %v3817 = vld [vmem:[#allocation2 + $0xa0] sm:$0xff]
    %v3818 = vld [vmem:[#allocation2 + $0xa8] sm:$0xff]
    %v3819 = vld [vmem:[#allocation2 + $0xb0] sm:$0xff]
    %v3820 = vld [vmem:[#allocation2 + $0xb8] sm:$0xff]
    %v3821 = vld [vmem:[#allocation2 + $0xc0] sm:$0xff]
    %v3822 = vld [vmem:[#allocation2 + $0xc8] sm:$0xff]
    %v3823 = vld [vmem:[#allocation2 + $0xd0] sm:$0xff]
    %v3824 = vld [vmem:[#allocation2 + $0xd8] sm:$0xff]
    %v3825 = vld [vmem:[#allocation2 + $0xe0] sm:$0xff]
    %v3826 = vld [vmem:[#allocation2 + $0xe8] sm:$0xff]
    %v3827 = vld [vmem:[#allocation2 + $0xf0] sm:$0xff]
    %v3828 = vld [vmem:[#allocation2 + $0xf8] sm:$0xff]
    %v3829 = vld [vmem:[#allocation2 + $0x100] sm:$0xff]
    %v3830 = vld [vmem:[#allocation2 + $0x108] sm:$0xff]
    %v3831 = vld [vmem:[#allocation2 + $0x110] sm:$0xff]
    %v3832 = vld [vmem:[#allocation2 + $0x118] sm:$0xff]
    %v3833 = vld [vmem:[#allocation2 + $0x120] sm:$0xff]
    %v3834 = vld [vmem:[#allocation2 + $0x128] sm:$0xff]
    %v3835 = vld [vmem:[#allocation2 + $0x130] sm:$0xff]
    %v3836 = vld [vmem:[#allocation2 + $0x138] sm:$0xff]
    %v3837 = vld [vmem:[#allocation2 + $0x140] sm:$0xff]
    %v3838 = vld [vmem:[#allocation2 + $0x148] sm:$0xff]
    %v3839 = vld [vmem:[#allocation2 + $0x150] sm:$0xff]
    %v3840 = vld [vmem:[#allocation2 + $0x158] sm:$0xff]
    %v3841 = vld [vmem:[#allocation2 + $0x160] sm:$0xff]
    %v3842 = vld [vmem:[#allocation2 + $0x168] sm:$0xff]
    %v3843 = vld [vmem:[#allocation2 + $0x170] sm:$0xff]
    %v3844 = vld [vmem:[#allocation2 + $0x178] sm:$0xff]
    %v3845 = vld [vmem:[#allocation2 + $0x180] sm:$0xff]
    %v3846 = vld [vmem:[#allocation2 + $0x188] sm:$0xff]
    %v3847 = vld [vmem:[#allocation2 + $0x190] sm:$0xff]
    %v3848 = vld [vmem:[#allocation2 + $0x198] sm:$0xff]
    %v3849 = vld [vmem:[#allocation2 + $0x1a0] sm:$0xff]
    %v3850 = vld [vmem:[#allocation2 + $0x1a8] sm:$0xff]
    %v3851 = vld [vmem:[#allocation2 + $0x1b0] sm:$0xff]
    %v3852 = vld [vmem:[#allocation2 + $0x1b8] sm:$0xff]
    %v3853 = vld [vmem:[#allocation2 + $0x1c0] sm:$0xff]
    %v3854 = vld [vmem:[#allocation2 + $0x1c8] sm:$0xff]
    %v3855 = vld [vmem:[#allocation2 + $0x1d0] sm:$0xff]
    %v3856 = vld [vmem:[#allocation2 + $0x1d8] sm:$0xff]
    %v3857 = vld [vmem:[#allocation2 + $0x1e0] sm:$0x1]
    %v3858 = vlaneseq
    %v3859 = vshrl.u32 %v3858, 7
    %v3860 = vsub.s32 0, %v3859
    %v3861 = vrot.slane %v3857, %v3860
    %v3862 = vsel %vm463, %v3812, 0
    %3864 = vmatprep.subr.mxu0 0.0
    %3865 = vmatpush1.msra.mxu0 %v3817
    %3866 = vmatprep.subr.mxu0 0.0
    %3867 = vmatpush1.msra.mxu0 %v3818
    %3868 = vmatprep.subr.mxu0 0.0
    %3869 = vmatpush1.msra.mxu0 %v3819
    %3870 = vmatprep.subr.mxu0 0.0
    %3871 = vmatpush1.msra.mxu0 %v3820
    %3872 = vmatprep.subr.mxu0 0.0
    %3873 = vmatpush1.msra.mxu0 %v3821
    %3874 = vmatprep.subr.mxu0 0.0
    %3875 = vmatpush1.msra.mxu0 %v3822
    %3876 = vmatprep.subr.mxu0 0.0
    %3877 = vmatpush1.msra.mxu0 %v3823
    %3878 = vmatprep.subr.mxu0 0.0
    %3879 = vmatpush1.msra.mxu0 %v3824
    %3880 = vmatprep.subr.mxu0 0.0
    %3881 = vmatpush1.msra.mxu0 %v3825
    %3882 = vmatprep.subr.mxu0 0.0
    %3883 = vmatpush1.msra.mxu0 %v3826
    %3884 = vmatprep.subr.mxu0 0.0
    %3885 = vmatpush1.msra.mxu0 %v3827
    %3886 = vmatprep.subr.mxu0 0.0
    %3887 = vmatpush1.msra.mxu0 %v3828
    %3888 = vmatprep.subr.mxu0 0.0
    %3889 = vmatpush1.msra.mxu0 %v3829
    %3890 = vmatprep.subr.mxu0 0.0
    %3891 = vmatpush1.msra.mxu0 %v3830
    %3892 = vmatprep.subr.mxu0 0.0
    %3893 = vmatpush1.msra.mxu0 %v3831
    %3894 = vmatprep.subr.mxu0 0.0
    %3895 = vmatpush1.msra.mxu0 %v3832
    %3896 = vmatprep.subr.mxu0 0.0
    %3897 = vmatpush1.msra.mxu0 %v3833
    %3898 = vmatprep.subr.mxu0 0.0
    %3899 = vmatpush1.msra.mxu0 %v3834
    %3900 = vmatprep.subr.mxu0 0.0
    %3901 = vmatpush1.msra.mxu0 %v3835
    %3902 = vmatprep.subr.mxu0 0.0
    %3903 = vmatpush1.msra.mxu0 %v3836
    %3904 = vmatprep.subr.mxu0 0.0
    %3905 = vmatpush1.msra.mxu0 %v3837
    %3906 = vmatprep.subr.mxu0 0.0
    %3907 = vmatpush1.msra.mxu0 %v3838
    %3908 = vmatprep.subr.mxu0 0.0
    %3909 = vmatpush1.msra.mxu0 %v3839
    %3910 = vmatprep.subr.mxu0 0.0
    %3911 = vmatpush1.msra.mxu0 %v3840
    %3912 = vmatprep.subr.mxu0 0.0
    %3913 = vmatpush1.msra.mxu0 %v3841
    %3914 = vmatprep.subr.mxu0 0.0
    %3915 = vmatpush1.msra.mxu0 %v3842
    %3916 = vmatprep.subr.mxu0 0.0
    %3917 = vmatpush1.msra.mxu0 %v3843
    %3918 = vmatprep.subr.mxu0 0.0
    %3919 = vmatpush1.msra.mxu0 %v3844
    %3920 = vmatprep.subr.mxu0 0.0
    %3921 = vmatpush1.msra.mxu0 %v3845
    %3922 = vmatprep.subr.mxu0 0.0
    %3923 = vmatpush1.msra.mxu0 %v3846
    %3924 = vmatprep.subr.mxu0 0.0
    %3925 = vmatpush1.msra.mxu0 %v3847
    %3926 = vmatprep.subr.mxu0 0.0
    %3927 = vmatpush1.msra.mxu0 %v3848
    %3928 = vmatprep.mubr.f32.mxu0 %v3813
    %3929 = vmatmul.mubr.f32.gmra.mrb[0].mxu0 %v3816
    %v3930 = vpop.f32.mrb[0].mxu0
    %v3931 = vadd.f32 %v3861, %v3930
    %v3932 = vpop.f32.mrb[0].mxu0
    %3933 = vdwg.mxu0
    %3934 = vmatprep.subr.mxu0 0.0
    %3935 = vmatpush1.msra.mxu0 %v3849
    %3936 = vmatprep.subr.mxu0 0.0
    %3937 = vmatpush1.msra.mxu0 %v3850
    %3938 = vmatprep.subr.mxu0 0.0
    %3939 = vmatpush1.msra.mxu0 %v3851
    %3940 = vmatprep.subr.mxu0 0.0
    %3941 = vmatpush1.msra.mxu0 %v3852
    %3942 = vmatprep.subr.mxu0 0.0
    %3943 = vmatpush1.msra.mxu0 %v3853
    %3944 = vmatprep.subr.mxu0 0.0
    %3945 = vmatpush1.msra.mxu0 %v3854
    %3946 = vmatprep.subr.mxu0 0.0
    %3947 = vmatpush1.msra.mxu0 %v3855
    %3948 = vmatprep.subr.mxu0 0.0
    %3949 = vmatpush1.msra.mxu0 %v3856
    %3950 = vmatprep.subr.mxu0 0.0
    %3951 = vmatpush1.msra.mxu0 0.0
    %3952 = vmatprep.subr.mxu0 0.0
    %3953 = vmatpush1.msra.mxu0 0.0
    %3954 = vmatprep.subr.mxu0 0.0
    %3955 = vmatpush1.msra.mxu0 0.0
    %3956 = vmatprep.subr.mxu0 0.0
    %3957 = vmatpush1.msra.mxu0 0.0
    %3958 = vmatprep.subr.mxu0 0.0
    %3959 = vmatpush1.msra.mxu0 0.0
    %3960 = vmatprep.subr.mxu0 0.0
    %3961 = vmatpush1.msra.mxu0 0.0
    %3962 = vmatprep.subr.mxu0 0.0
    %3963 = vmatpush1.msra.mxu0 0.0
    %3964 = vmatprep.subr.mxu0 0.0
    %3965 = vmatpush1.msra.mxu0 0.0
    %3966 = vmatprep.subr.mxu0 0.0
    %3967 = vmatpush1.msra.mxu0 0.0
    %3968 = vmatprep.subr.mxu0 0.0
    %3969 = vmatpush1.msra.mxu0 0.0
    %3970 = vmatprep.subr.mxu0 0.0
    %3971 = vmatpush1.msra.mxu0 0.0
    %3972 = vmatprep.subr.mxu0 0.0
    %3973 = vmatpush1.msra.mxu0 0.0
    %3974 = vmatprep.subr.mxu0 0.0
    %3975 = vmatpush1.msra.mxu0 0.0
    %3976 = vmatprep.subr.mxu0 0.0
    %3977 = vmatpush1.msra.mxu0 0.0
    %3978 = vmatprep.subr.mxu0 0.0
    %3979 = vmatpush1.msra.mxu0 0.0
    %3980 = vmatprep.subr.mxu0 0.0
    %3981 = vmatpush1.msra.mxu0 0.0
    %3982 = vmatprep.subr.mxu0 0.0
    %3983 = vmatpush1.msra.mxu0 0.0
    %3984 = vmatprep.subr.mxu0 0.0
    %3985 = vmatpush1.msra.mxu0 0.0
    %3986 = vmatprep.subr.mxu0 0.0
    %3987 = vmatpush1.msra.mxu0 0.0
    %3988 = vmatprep.subr.mxu0 0.0
    %3989 = vmatpush1.msra.mxu0 0.0
    %3990 = vmatprep.subr.mxu0 0.0
    %3991 = vmatpush1.msra.mxu0 0.0
    %3992 = vmatprep.subr.mxu0 0.0
    %3993 = vmatpush1.msra.mxu0 0.0
    %3994 = vmatprep.subr.mxu0 0.0
    %3995 = vmatpush1.msra.mxu0 0.0
    %3996 = vmatprep.subr.mxu0 0.0
    %3997 = vmatpush1.msra.mxu0 0.0
    %3998 = vmatprep.mubr.f32.mxu0 0.0
    %3999 = vmatmul.mubr.f32.gmra.mrb[0].mxu0 %v3862
    %v4000 = vpop.f32.mrb[0].mxu0
    %v4001 = vadd.f32 %v3931, %v4000
    %v4002 = vpop.f32.mrb[0].mxu0
    %4003 = vdwg.mxu0
    %vm4004 = vcmask 25600
    %v4005 = vsel %vm4004, %v4001, -inf
    %4006 = vmax.xlane.f32.xlu0 %v4005
    %v4007 = vpop.xlane.xlu0 %4006
    %v4008 = vsub.f32 %v4001, %v4007
    %v4009 = vmul.f32 %v4008, 1.442695
    %v4010 = vpow.pop %v4009
    %v4011 = vsel %vm4004, %v4010, 0.0
    %4012 = vadd.xlane.f32.xlu0 %v4011
    %v4013 = vpop.xlane.xlu0 %4012
    %v4014 = vrcp.pop %v4013
    %v4015 = vmul.f32 %v4010, %v4014
    %v4016 = vxor.u32 %v4001, 2147483648
    %v4017 = vmul.f32 %v4016, 1.442695
    %v4018 = vpow.pop %v4017
    %v4019 = vadd.f32 %v4018, 1.0
    %v4020 = vrcp.pop %v4019
    %v4021 = vmul.f32 1.0, %v4020
    %v4022 = vmul.f32 %v4021, 60.0
    %v4023 = vtanh.pop %v4001
    %v4024 = vmul.f32 %v4023, 12.0
    %vm4025 = vcmask 31744
    %v4026 = vsel %vm4025, %v4015, %v4022
    %vm4027 = vcmask 39936
    %v4028 = vsel %vm4027, %v4026, %v4024
    %vm4029 = vcmask 99328
    %4030 = vst.msk [vmem:[%s3] sm:$0x3] %vm4029, %v4028
    // Predicated region
    $region18: #{new_mixnet_forward.1} parent=1 // pred_check
      _
    $region19: #{new_mixnet_forward.1} parent=1 // pred_check_branch
      %4032 = sbr.rel (0) target = $region21
    $region20: #{new_mixnet_forward.1} parent=1 // pred_region
      _
    $region21: #{new_mixnet_forward.1} parent=1 // pred_fallthru
      _
    // Predicated region
    $region22: #{new_mixnet_forward.1} parent=1 // pred_check
      _
    $region23: #{new_mixnet_forward.1} parent=1 // pred_check_branch
      %4034 = sbr.rel (0) target = $region25
    $region24: #{new_mixnet_forward.1} parent=1 // pred_region
      _
    $region25: #{new_mixnet_forward.1} parent=1 // pred_fallthru
      _
    %4035 = vsyncpa [#allocation3], 1

</llo_original>
